<compile_context>
chip_gen: v6e
topology: v6e:2x2x1
jax: 0.10.0
libtpu: 0.0.40
codegen_flags: <defaults>
</compile_context>

<pallas_src>
import numpy as np

import jax
import jax.numpy as jnp
from jax.experimental import pallas as pl
from jax.experimental.pallas import tpu as pltpu


# ---------------------------------------------------------------------------
# Small constant matrices (built once in the wrapper, plain numpy).
# ---------------------------------------------------------------------------
def _adaptive_avg_pool_matrix(out_size, in_size):
    """(out_size, in_size): PyTorch AdaptiveAvgPool2d averaging weights."""
    A = np.zeros((out_size, in_size), dtype=np.float32)
    for i in range(out_size):
        start = (i * in_size) // out_size
        end = -((-(i + 1) * in_size) // out_size)  # ceil((i+1)*in/out)
        A[i, start:end] = 1.0 / float(end - start)
    return A


def _bilinear_upsample_matrix(out_size, in_size):
    """(out_size, in_size): bilinear interpolation weights, align_corners=True."""
    U = np.zeros((out_size, in_size), dtype=np.float32)
    if in_size == 1:
        U[:, 0] = 1.0
        return U
    for h in range(out_size):
        s = 0.0 if out_size == 1 else h * (in_size - 1) / (out_size - 1)
        i0 = min(int(np.floor(s)), in_size - 1)
        i1 = min(i0 + 1, in_size - 1)
        f = s - i0
        U[h, i0] += 1.0 - f
        U[h, i1] += f
    return U


def _build_pyramid_matrices(H, W, pool_sizes):
    """Returns pt (T, H*W, KP) and ut (T, KP, H*W); KP = max(k*k), zero padded."""
    kp = max(k * k for k in pool_sizes)
    hw = H * W
    pts, uts = [], []
    for k in pool_sizes:
        Ah = _adaptive_avg_pool_matrix(k, H)
        Aw = _adaptive_avg_pool_matrix(k, W)
        P = np.kron(Ah, Aw)                                   # (k*k, H*W)
        P_pad = np.zeros((kp, hw), dtype=np.float32)
        P_pad[:k * k] = P
        Uh = _bilinear_upsample_matrix(H, k)
        Uw = _bilinear_upsample_matrix(W, k)
        U = np.kron(Uh, Uw)                                   # (H*W, k*k)
        U_pad = np.zeros((hw, kp), dtype=np.float32)
        U_pad[:, :k * k] = U
        pts.append(P_pad.T)                                   # (H*W, KP)
        uts.append(U_pad.T)                                   # (KP, H*W)
    return jnp.asarray(np.stack(pts)), jnp.asarray(np.stack(uts))


# ---------------------------------------------------------------------------
# Fused Pallas kernel: whole PyramidPooling forward for all batch elements.
# ---------------------------------------------------------------------------
def _pyramid_pooling_kernel(x_ref, pt_ref, ut_ref, wc_ref, bc_ref,
                            wx_ref, wf_ref, bo_ref, o_ref):
    """
    x_ref : (Cin, N*H*W)    input, channels on sublanes, flat spatial on lanes
    pt_ref: (T, H*W, KP)    pooling matrices (transposed, zero padded)
    ut_ref: (T, KP, H*W)    upsampling matrices (transposed, zero padded)
    wc_ref: (T, Cint, Cin)  branch 1x1-conv weights
    bc_ref: (T, Cint, 1)    branch 1x1-conv biases
    wx_ref: (Cout, Cin)     out-conv slice acting on x
    wf_ref: (T, Cout, Cint) out-conv slices acting on feat_k
    bo_ref: (Cout, 1)       out-conv bias
    o_ref : (Cout, N*H*W)   output (lane-dense last dim)
    """
    T, HW, _ = pt_ref.shape
    M = x_ref.shape[1]
    N = M // HW
    f32 = jnp.float32

    for n in range(N):                                        # static unroll (small N)
        xn = x_ref[:, n * HW:(n + 1) * HW]                    # (Cin, HW)
        # out-conv contribution of the identity (concat) branch + bias
        acc = jnp.dot(wx_ref[...], xn, preferred_element_type=f32) + bo_ref[...]
        for t in range(T):                                    # static unroll (4 branches)
            # adaptive average pool as one MXU matmul
            pooled = jnp.dot(xn, pt_ref[t], preferred_element_type=f32)       # (Cin, KP)
            # branch 1x1 conv + bias + ReLU
            y = jnp.dot(wc_ref[t], pooled, preferred_element_type=f32) + bc_ref[t]
            y = jnp.maximum(y, 0.0)                                           # (Cint, KP)
            # bilinear upsample (align_corners=True) as one MXU matmul
            feat = jnp.dot(y, ut_ref[t], preferred_element_type=f32)          # (Cint, HW)
            # out-conv slice for this branch, accumulated in f32
            acc = acc + jnp.dot(wf_ref[t], feat, preferred_element_type=f32)  # (Cout, HW)
        o_ref[:, n * HW:(n + 1) * HW] = jnp.maximum(acc, 0.0).astype(o_ref.dtype)


def _full_spec(shape):
    zeros = (0,) * len(shape)
    return pl.BlockSpec(shape, lambda i, _z=zeros: _z)


def _pyramid_forward(x_nchw, pt, ut, wc, bc, wx, wf, bo):
    N, Cin, H, W = x_nchw.shape
    T, HW, KP = pt.shape
    Cint = wc.shape[1]
    Cout = wx.shape[0]
    M = N * H * W

    # NCHW -> (Cin, N*H*W): channels on sublanes, flat (batch, spatial) on lanes.
    x2 = jnp.transpose(x_nchw, (1, 0, 2, 3)).reshape(Cin, M)

    flops = 2 * N * Cout * Cin * HW + 2 * N * T * (
        Cin * HW * KP + Cint * Cin * KP + Cint * KP * HW + Cout * Cint * HW)
    bytes_accessed = 4 * (x2.size + pt.size + ut.size + wc.size + bc.size
                          + wx.size + wf.size + bo.size + Cout * M)

    out2 = pl.pallas_call(
        _pyramid_pooling_kernel,
        out_shape=jax.ShapeDtypeStruct((Cout, M), x_nchw.dtype),
        grid_spec=pltpu.PrefetchScalarGridSpec(
            num_scalar_prefetch=0,
            grid=(1,),                      # single step: whole batch fused, no pipeline overhead
            in_specs=[_full_spec(a.shape) for a in (x2, pt, ut, wc, bc, wx, wf, bo)],
            out_specs=_full_spec((Cout, M)),
        ),
        compiler_params=pltpu.CompilerParams(
            dimension_semantics=("arbitrary",),
            vmem_limit_bytes=32 * 1024 * 1024),
        cost_estimate=pl.CostEstimate(flops=flops, transcendentals=0,
                                      bytes_accessed=bytes_accessed),
    )(x2, pt, ut, wc, bc, wx, wf, bo)

    return jnp.transpose(out2.reshape(Cout, N, H, W), (1, 0, 2, 3))


_pyramid_forward_jit = jax.jit(_pyramid_forward)


def pyramid_pooling_forward(x_nchw, branch_w, branch_b, out_w, out_b,
                            pool_sizes=(1, 2, 3, 6)):
    """PyramidPooling.forward.

    x_nchw  : (N, Cin, H, W)
    branch_w: 4 x (Cint, Cin)   1x1 conv weights of conv1..conv4 (Cint = Cin//4)
    branch_b: 4 x (Cint,)
    out_w   : (Cout, 2*Cin)     1x1 conv weight of self.out (concat order [x, f1, f2, f3, f4])
    out_b   : (Cout,)
    returns : (N, Cout, H, W)
    """
    N, Cin, H, W = x_nchw.shape
    T = len(pool_sizes)
    Cint = branch_w[0].shape[0]
    Cout = out_w.shape[0]

    pt, ut = _build_pyramid_matrices(H, W, pool_sizes)
    wc = jnp.stack(branch_w)                                  # (T, Cint, Cin)
    bc = jnp.stack(branch_b).reshape(T, Cint, 1)
    wx = out_w[:, :Cin]                                       # (Cout, Cin)
    wf = jnp.stack([out_w[:, Cin + t * Cint: Cin + (t + 1) * Cint]
                    for t in range(T)])                       # (T, Cout, Cint)
    bo = out_b.reshape(Cout, 1)
    return _pyramid_forward_jit(x_nchw, pt, ut, wc, bc, wx, wf, bo)


# ---------------------------------------------------------------------------
# Pure-JAX reference (per-branch, NCHW, no kron/fusion) for validation.
# ---------------------------------------------------------------------------
def _reference_forward(x, branch_w, branch_b, out_w, out_b, pool_sizes=(1, 2, 3, 6)):
    N, C, H, W = x.shape
    hp = jax.lax.Precision.HIGHEST
    feats = [x]
    for k, wk, bk in zip(pool_sizes, branch_w, branch_b):
        Ah = jnp.asarray(_adaptive_avg_pool_matrix(k, H))
        Aw = jnp.asarray(_adaptive_avg_pool_matrix(k, W))
        pooled = jnp.einsum('ih,nchw,jw->ncij', Ah, x, Aw, precision=hp)
        y = jnp.einsum('oc,ncij->noij', wk, pooled, precision=hp) + bk[None, :, None, None]
        y = jnp.maximum(y, 0.0)
        Uh = jnp.asarray(_bilinear_upsample_matrix(H, k))
        Uw = jnp.asarray(_bilinear_upsample_matrix(W, k))
        feats.append(jnp.einsum('hi,noij,wj->nohw', Uh, y, Uw, precision=hp))
    cat = jnp.concatenate(feats, axis=1)
    out = jnp.einsum('oc,nchw->nohw', out_w, cat, precision=hp) + out_b[None, :, None, None]
    return jnp.maximum(out, 0.0)


if __name__ == "__main__":
    # Small shapes consistent with the module: in_channels divisible by 4.
    N, Cin, Cout, H, W = 2, 16, 32, 16, 16
    Cint = Cin // 4

    key = jax.random.PRNGKey(0)
    ks = jax.random.split(key, 11)
    x = jax.random.normal(ks[0], (N, Cin, H, W), dtype=jnp.float32)
    branch_w = [0.1 * jax.random.normal(ks[1 + t], (Cint, Cin), dtype=jnp.float32)
                for t in range(4)]
    branch_b = [0.1 * jax.random.normal(ks[5 + t], (Cint,), dtype=jnp.float32)
                for t in range(4)]
    out_w = 0.1 * jax.random.normal(ks[9], (Cout, 2 * Cin), dtype=jnp.float32)
    out_b = 0.1 * jax.random.normal(ks[10], (Cout,), dtype=jnp.float32)

    out = pyramid_pooling_forward(x, branch_w, branch_b, out_w, out_b)
    out = jax.block_until_ready(out)

    ref = _reference_forward(x, branch_w, branch_b, out_w, out_b)
    assert out.shape == (N, Cout, H, W)
    assert jnp.allclose(out, ref, atol=2e-3, rtol=2e-3), "mismatch vs reference"

    print("KERNEL_OK")
</pallas_src>

<mosaic_0001>
module attributes {stable_mosaic.version = 11 : i64} {
  func.func @_pyramid_pooling_kernel(%arg0: i32, %arg1: memref<16x512xf32, #tpu.memory_space<vmem>>, %arg2: memref<4x256x36xf32, #tpu.memory_space<vmem>>, %arg3: memref<4x36x256xf32, #tpu.memory_space<vmem>>, %arg4: memref<4x4x16xf32, #tpu.memory_space<vmem>>, %arg5: memref<4x4x1xf32, #tpu.memory_space<vmem>>, %arg6: memref<32x16xf32, #tpu.memory_space<vmem>>, %arg7: memref<4x32x4xf32, #tpu.memory_space<vmem>>, %arg8: memref<32x1xf32, #tpu.memory_space<vmem>>, %arg9: memref<32x512xf32, #tpu.memory_space<vmem>>) attributes {dimension_semantics = [#tpu.dimension_semantics<arbitrary>], iteration_bounds = array<i64: 1>, scalar_prefetch = 0 : i64, scratch_operands = 0 : i64, tpu.core_type = #tpu.core_type<tc>, window_params = [{pipeline_mode = #tpu.pipeline_mode<synchronous>, transform_indices = @transform_0, window_bounds = array<i64: 16, 512>}, {pipeline_mode = #tpu.pipeline_mode<synchronous>, transform_indices = @transform_1, window_bounds = array<i64: 4, 256, 36>}, {pipeline_mode = #tpu.pipeline_mode<synchronous>, transform_indices = @transform_2, window_bounds = array<i64: 4, 36, 256>}, {pipeline_mode = #tpu.pipeline_mode<synchronous>, transform_indices = @transform_3, window_bounds = array<i64: 4, 4, 16>}, {pipeline_mode = #tpu.pipeline_mode<synchronous>, transform_indices = @transform_4, window_bounds = array<i64: 4, 4, 1>}, {pipeline_mode = #tpu.pipeline_mode<synchronous>, transform_indices = @transform_5, window_bounds = array<i64: 32, 16>}, {pipeline_mode = #tpu.pipeline_mode<synchronous>, transform_indices = @transform_6, window_bounds = array<i64: 4, 32, 4>}, {pipeline_mode = #tpu.pipeline_mode<synchronous>, transform_indices = @transform_7, window_bounds = array<i64: 32, 1>}, {pipeline_mode = #tpu.pipeline_mode<synchronous>, transform_indices = @transform_8, window_bounds = array<i64: 32, 512>}]} {
    %c0 = arith.constant 0 : index
    %c0_0 = arith.constant 0 : index
    %0 = vector.load %arg1[%c0, %c0_0] : memref<16x512xf32, #tpu.memory_space<vmem>>, vector<16x256xf32>
    %c0_1 = arith.constant 0 : index
    %c0_2 = arith.constant 0 : index
    %1 = vector.load %arg6[%c0_1, %c0_2] : memref<32x16xf32, #tpu.memory_space<vmem>>, vector<32x16xf32>
    %cst = arith.constant dense<0.000000e+00> : vector<32x256xf32>
    %2 = tpu.matmul %1, %0, %cst {dimension_numbers = #tpu.dot_dimension_numbers<[1], [0], [0], [1], [0, 0, 1, 1], [], []>} : vector<32x16xf32>, vector<16x256xf32>, vector<32x256xf32> -> vector<32x256xf32>
    %c0_3 = arith.constant 0 : index
    %c0_4 = arith.constant 0 : index
    %3 = vector.load %arg8[%c0_3, %c0_4] : memref<32x1xf32, #tpu.memory_space<vmem>>, vector<32x1xf32>
    %4 = vector.broadcast %3 : vector<32x1xf32> to vector<32x256xf32>
    %5 = arith.addf %2, %4 : vector<32x256xf32>
    %c0_5 = arith.constant 0 : index
    %c0_6 = arith.constant 0 : index
    %c0_7 = arith.constant 0 : index
    %6 = vector.load %arg2[%c0_5, %c0_6, %c0_7] : memref<4x256x36xf32, #tpu.memory_space<vmem>>, vector<1x256x36xf32>
    %7 = vector.shape_cast %6 : vector<1x256x36xf32> to vector<256x36xf32>
    %cst_8 = arith.constant dense<0.000000e+00> : vector<16x36xf32>
    %8 = tpu.matmul %0, %7, %cst_8 {dimension_numbers = #tpu.dot_dimension_numbers<[1], [0], [0], [1], [0, 0, 1, 1], [], []>} : vector<16x256xf32>, vector<256x36xf32>, vector<16x36xf32> -> vector<16x36xf32>
    %c0_9 = arith.constant 0 : index
    %c0_10 = arith.constant 0 : index
    %c0_11 = arith.constant 0 : index
    %9 = vector.load %arg4[%c0_9, %c0_10, %c0_11] : memref<4x4x16xf32, #tpu.memory_space<vmem>>, vector<1x4x16xf32>
    %10 = vector.shape_cast %9 : vector<1x4x16xf32> to vector<4x16xf32>
    %cst_12 = arith.constant dense<0.000000e+00> : vector<4x36xf32>
    %11 = tpu.matmul %10, %8, %cst_12 {dimension_numbers = #tpu.dot_dimension_numbers<[1], [0], [0], [1], [0, 0, 1, 1], [], []>} : vector<4x16xf32>, vector<16x36xf32>, vector<4x36xf32> -> vector<4x36xf32>
    %c0_13 = arith.constant 0 : index
    %c0_14 = arith.constant 0 : index
    %c0_15 = arith.constant 0 : index
    %12 = vector.load %arg5[%c0_13, %c0_14, %c0_15] : memref<4x4x1xf32, #tpu.memory_space<vmem>>, vector<1x4x1xf32>
    %13 = vector.shape_cast %12 : vector<1x4x1xf32> to vector<4x1xf32>
    %14 = vector.broadcast %13 : vector<4x1xf32> to vector<4x36xf32>
    %15 = arith.addf %11, %14 : vector<4x36xf32>
    %cst_16 = arith.constant 0.000000e+00 : f32
    %16 = vector.broadcast %cst_16 : f32 to vector<4x36xf32>
    %17 = arith.maximumf %15, %16 : vector<4x36xf32>
    %c0_17 = arith.constant 0 : index
    %c0_18 = arith.constant 0 : index
    %c0_19 = arith.constant 0 : index
    %18 = vector.load %arg3[%c0_17, %c0_18, %c0_19] : memref<4x36x256xf32, #tpu.memory_space<vmem>>, vector<1x36x256xf32>
    %19 = vector.shape_cast %18 : vector<1x36x256xf32> to vector<36x256xf32>
    %cst_20 = arith.constant dense<0.000000e+00> : vector<4x256xf32>
    %20 = tpu.matmul %17, %19, %cst_20 {dimension_numbers = #tpu.dot_dimension_numbers<[1], [0], [0], [1], [0, 0, 1, 1], [], []>} : vector<4x36xf32>, vector<36x256xf32>, vector<4x256xf32> -> vector<4x256xf32>
    %c0_21 = arith.constant 0 : index
    %c0_22 = arith.constant 0 : index
    %c0_23 = arith.constant 0 : index
    %21 = vector.load %arg7[%c0_21, %c0_22, %c0_23] : memref<4x32x4xf32, #tpu.memory_space<vmem>>, vector<1x32x4xf32>
    %22 = vector.shape_cast %21 : vector<1x32x4xf32> to vector<32x4xf32>
    %cst_24 = arith.constant dense<0.000000e+00> : vector<32x256xf32>
    %23 = tpu.matmul %22, %20, %cst_24 {dimension_numbers = #tpu.dot_dimension_numbers<[1], [0], [0], [1], [0, 0, 1, 1], [], []>} : vector<32x4xf32>, vector<4x256xf32>, vector<32x256xf32> -> vector<32x256xf32>
    %24 = arith.addf %5, %23 : vector<32x256xf32>
    %c1 = arith.constant 1 : index
    %c0_25 = arith.constant 0 : index
    %c0_26 = arith.constant 0 : index
    %25 = vector.load %arg2[%c1, %c0_25, %c0_26] : memref<4x256x36xf32, #tpu.memory_space<vmem>>, vector<1x256x36xf32>
    %26 = vector.shape_cast %25 : vector<1x256x36xf32> to vector<256x36xf32>
    %cst_27 = arith.constant dense<0.000000e+00> : vector<16x36xf32>
    %27 = tpu.matmul %0, %26, %cst_27 {dimension_numbers = #tpu.dot_dimension_numbers<[1], [0], [0], [1], [0, 0, 1, 1], [], []>} : vector<16x256xf32>, vector<256x36xf32>, vector<16x36xf32> -> vector<16x36xf32>
    %c1_28 = arith.constant 1 : index
    %c0_29 = arith.constant 0 : index
    %c0_30 = arith.constant 0 : index
    %28 = vector.load %arg4[%c1_28, %c0_29, %c0_30] : memref<4x4x16xf32, #tpu.memory_space<vmem>>, vector<1x4x16xf32>
    %29 = vector.shape_cast %28 : vector<1x4x16xf32> to vector<4x16xf32>
    %cst_31 = arith.constant dense<0.000000e+00> : vector<4x36xf32>
    %30 = tpu.matmul %29, %27, %cst_31 {dimension_numbers = #tpu.dot_dimension_numbers<[1], [0], [0], [1], [0, 0, 1, 1], [], []>} : vector<4x16xf32>, vector<16x36xf32>, vector<4x36xf32> -> vector<4x36xf32>
    %c1_32 = arith.constant 1 : index
    %c0_33 = arith.constant 0 : index
    %c0_34 = arith.constant 0 : index
    %31 = vector.load %arg5[%c1_32, %c0_33, %c0_34] : memref<4x4x1xf32, #tpu.memory_space<vmem>>, vector<1x4x1xf32>
    %32 = vector.shape_cast %31 : vector<1x4x1xf32> to vector<4x1xf32>
    %33 = vector.broadcast %32 : vector<4x1xf32> to vector<4x36xf32>
    %34 = arith.addf %30, %33 : vector<4x36xf32>
    %cst_35 = arith.constant 0.000000e+00 : f32
    %35 = vector.broadcast %cst_35 : f32 to vector<4x36xf32>
    %36 = arith.maximumf %34, %35 : vector<4x36xf32>
    %c1_36 = arith.constant 1 : index
    %c0_37 = arith.constant 0 : index
    %c0_38 = arith.constant 0 : index
    %37 = vector.load %arg3[%c1_36, %c0_37, %c0_38] : memref<4x36x256xf32, #tpu.memory_space<vmem>>, vector<1x36x256xf32>
    %38 = vector.shape_cast %37 : vector<1x36x256xf32> to vector<36x256xf32>
    %cst_39 = arith.constant dense<0.000000e+00> : vector<4x256xf32>
    %39 = tpu.matmul %36, %38, %cst_39 {dimension_numbers = #tpu.dot_dimension_numbers<[1], [0], [0], [1], [0, 0, 1, 1], [], []>} : vector<4x36xf32>, vector<36x256xf32>, vector<4x256xf32> -> vector<4x256xf32>
    %c1_40 = arith.constant 1 : index
    %c0_41 = arith.constant 0 : index
    %c0_42 = arith.constant 0 : index
    %40 = vector.load %arg7[%c1_40, %c0_41, %c0_42] : memref<4x32x4xf32, #tpu.memory_space<vmem>>, vector<1x32x4xf32>
    %41 = vector.shape_cast %40 : vector<1x32x4xf32> to vector<32x4xf32>
    %cst_43 = arith.constant dense<0.000000e+00> : vector<32x256xf32>
    %42 = tpu.matmul %41, %39, %cst_43 {dimension_numbers = #tpu.dot_dimension_numbers<[1], [0], [0], [1], [0, 0, 1, 1], [], []>} : vector<32x4xf32>, vector<4x256xf32>, vector<32x256xf32> -> vector<32x256xf32>
    %43 = arith.addf %24, %42 : vector<32x256xf32>
    %c2 = arith.constant 2 : index
    %c0_44 = arith.constant 0 : index
    %c0_45 = arith.constant 0 : index
    %44 = vector.load %arg2[%c2, %c0_44, %c0_45] : memref<4x256x36xf32, #tpu.memory_space<vmem>>, vector<1x256x36xf32>
    %45 = vector.shape_cast %44 : vector<1x256x36xf32> to vector<256x36xf32>
    %cst_46 = arith.constant dense<0.000000e+00> : vector<16x36xf32>
    %46 = tpu.matmul %0, %45, %cst_46 {dimension_numbers = #tpu.dot_dimension_numbers<[1], [0], [0], [1], [0, 0, 1, 1], [], []>} : vector<16x256xf32>, vector<256x36xf32>, vector<16x36xf32> -> vector<16x36xf32>
    %c2_47 = arith.constant 2 : index
    %c0_48 = arith.constant 0 : index
    %c0_49 = arith.constant 0 : index
    %47 = vector.load %arg4[%c2_47, %c0_48, %c0_49] : memref<4x4x16xf32, #tpu.memory_space<vmem>>, vector<1x4x16xf32>
    %48 = vector.shape_cast %47 : vector<1x4x16xf32> to vector<4x16xf32>
    %cst_50 = arith.constant dense<0.000000e+00> : vector<4x36xf32>
    %49 = tpu.matmul %48, %46, %cst_50 {dimension_numbers = #tpu.dot_dimension_numbers<[1], [0], [0], [1], [0, 0, 1, 1], [], []>} : vector<4x16xf32>, vector<16x36xf32>, vector<4x36xf32> -> vector<4x36xf32>
    %c2_51 = arith.constant 2 : index
    %c0_52 = arith.constant 0 : index
    %c0_53 = arith.constant 0 : index
    %50 = vector.load %arg5[%c2_51, %c0_52, %c0_53] : memref<4x4x1xf32, #tpu.memory_space<vmem>>, vector<1x4x1xf32>
    %51 = vector.shape_cast %50 : vector<1x4x1xf32> to vector<4x1xf32>
    %52 = vector.broadcast %51 : vector<4x1xf32> to vector<4x36xf32>
    %53 = arith.addf %49, %52 : vector<4x36xf32>
    %cst_54 = arith.constant 0.000000e+00 : f32
    %54 = vector.broadcast %cst_54 : f32 to vector<4x36xf32>
    %55 = arith.maximumf %53, %54 : vector<4x36xf32>
    %c2_55 = arith.constant 2 : index
    %c0_56 = arith.constant 0 : index
    %c0_57 = arith.constant 0 : index
    %56 = vector.load %arg3[%c2_55, %c0_56, %c0_57] : memref<4x36x256xf32, #tpu.memory_space<vmem>>, vector<1x36x256xf32>
    %57 = vector.shape_cast %56 : vector<1x36x256xf32> to vector<36x256xf32>
    %cst_58 = arith.constant dense<0.000000e+00> : vector<4x256xf32>
    %58 = tpu.matmul %55, %57, %cst_58 {dimension_numbers = #tpu.dot_dimension_numbers<[1], [0], [0], [1], [0, 0, 1, 1], [], []>} : vector<4x36xf32>, vector<36x256xf32>, vector<4x256xf32> -> vector<4x256xf32>
    %c2_59 = arith.constant 2 : index
    %c0_60 = arith.constant 0 : index
    %c0_61 = arith.constant 0 : index
    %59 = vector.load %arg7[%c2_59, %c0_60, %c0_61] : memref<4x32x4xf32, #tpu.memory_space<vmem>>, vector<1x32x4xf32>
    %60 = vector.shape_cast %59 : vector<1x32x4xf32> to vector<32x4xf32>
    %cst_62 = arith.constant dense<0.000000e+00> : vector<32x256xf32>
    %61 = tpu.matmul %60, %58, %cst_62 {dimension_numbers = #tpu.dot_dimension_numbers<[1], [0], [0], [1], [0, 0, 1, 1], [], []>} : vector<32x4xf32>, vector<4x256xf32>, vector<32x256xf32> -> vector<32x256xf32>
    %62 = arith.addf %43, %61 : vector<32x256xf32>
    %c3 = arith.constant 3 : index
    %c0_63 = arith.constant 0 : index
    %c0_64 = arith.constant 0 : index
    %63 = vector.load %arg2[%c3, %c0_63, %c0_64] : memref<4x256x36xf32, #tpu.memory_space<vmem>>, vector<1x256x36xf32>
    %64 = vector.shape_cast %63 : vector<1x256x36xf32> to vector<256x36xf32>
    %cst_65 = arith.constant dense<0.000000e+00> : vector<16x36xf32>
    %65 = tpu.matmul %0, %64, %cst_65 {dimension_numbers = #tpu.dot_dimension_numbers<[1], [0], [0], [1], [0, 0, 1, 1], [], []>} : vector<16x256xf32>, vector<256x36xf32>, vector<16x36xf32> -> vector<16x36xf32>
    %c3_66 = arith.constant 3 : index
    %c0_67 = arith.constant 0 : index
    %c0_68 = arith.constant 0 : index
    %66 = vector.load %arg4[%c3_66, %c0_67, %c0_68] : memref<4x4x16xf32, #tpu.memory_space<vmem>>, vector<1x4x16xf32>
    %67 = vector.shape_cast %66 : vector<1x4x16xf32> to vector<4x16xf32>
    %cst_69 = arith.constant dense<0.000000e+00> : vector<4x36xf32>
    %68 = tpu.matmul %67, %65, %cst_69 {dimension_numbers = #tpu.dot_dimension_numbers<[1], [0], [0], [1], [0, 0, 1, 1], [], []>} : vector<4x16xf32>, vector<16x36xf32>, vector<4x36xf32> -> vector<4x36xf32>
    %c3_70 = arith.constant 3 : index
    %c0_71 = arith.constant 0 : index
    %c0_72 = arith.constant 0 : index
    %69 = vector.load %arg5[%c3_70, %c0_71, %c0_72] : memref<4x4x1xf32, #tpu.memory_space<vmem>>, vector<1x4x1xf32>
    %70 = vector.shape_cast %69 : vector<1x4x1xf32> to vector<4x1xf32>
    %71 = vector.broadcast %70 : vector<4x1xf32> to vector<4x36xf32>
    %72 = arith.addf %68, %71 : vector<4x36xf32>
    %cst_73 = arith.constant 0.000000e+00 : f32
    %73 = vector.broadcast %cst_73 : f32 to vector<4x36xf32>
    %74 = arith.maximumf %72, %73 : vector<4x36xf32>
    %c3_74 = arith.constant 3 : index
    %c0_75 = arith.constant 0 : index
    %c0_76 = arith.constant 0 : index
    %75 = vector.load %arg3[%c3_74, %c0_75, %c0_76] : memref<4x36x256xf32, #tpu.memory_space<vmem>>, vector<1x36x256xf32>
    %76 = vector.shape_cast %75 : vector<1x36x256xf32> to vector<36x256xf32>
    %cst_77 = arith.constant dense<0.000000e+00> : vector<4x256xf32>
    %77 = tpu.matmul %74, %76, %cst_77 {dimension_numbers = #tpu.dot_dimension_numbers<[1], [0], [0], [1], [0, 0, 1, 1], [], []>} : vector<4x36xf32>, vector<36x256xf32>, vector<4x256xf32> -> vector<4x256xf32>
    %c3_78 = arith.constant 3 : index
    %c0_79 = arith.constant 0 : index
    %c0_80 = arith.constant 0 : index
    %78 = vector.load %arg7[%c3_78, %c0_79, %c0_80] : memref<4x32x4xf32, #tpu.memory_space<vmem>>, vector<1x32x4xf32>
    %79 = vector.shape_cast %78 : vector<1x32x4xf32> to vector<32x4xf32>
    %cst_81 = arith.constant dense<0.000000e+00> : vector<32x256xf32>
    %80 = tpu.matmul %79, %77, %cst_81 {dimension_numbers = #tpu.dot_dimension_numbers<[1], [0], [0], [1], [0, 0, 1, 1], [], []>} : vector<32x4xf32>, vector<4x256xf32>, vector<32x256xf32> -> vector<32x256xf32>
    %81 = arith.addf %62, %80 : vector<32x256xf32>
    %cst_82 = arith.constant 0.000000e+00 : f32
    %82 = vector.broadcast %cst_82 : f32 to vector<32x256xf32>
    %83 = arith.maximumf %81, %82 : vector<32x256xf32>
    %c0_83 = arith.constant 0 : index
    %c0_84 = arith.constant 0 : index
    %84 = vector.load %arg9[%c0_83, %c0_84] : memref<32x512xf32, #tpu.memory_space<vmem>>, vector<32x256xf32>
    tpu.vector_store %arg9[%c0_83, %c0_84], %83 {strides = array<i32>} : memref<32x512xf32, #tpu.memory_space<vmem>>, vector<32x256xf32>,
    %c0_85 = arith.constant 0 : index
    %c256 = arith.constant 256 : index
    %85 = vector.load %arg1[%c0_85, %c256] : memref<16x512xf32, #tpu.memory_space<vmem>>, vector<16x256xf32>
    %c0_86 = arith.constant 0 : index
    %c0_87 = arith.constant 0 : index
    %86 = vector.load %arg6[%c0_86, %c0_87] : memref<32x16xf32, #tpu.memory_space<vmem>>, vector<32x16xf32>
    %cst_88 = arith.constant dense<0.000000e+00> : vector<32x256xf32>
    %87 = tpu.matmul %86, %85, %cst_88 {dimension_numbers = #tpu.dot_dimension_numbers<[1], [0], [0], [1], [0, 0, 1, 1], [], []>} : vector<32x16xf32>, vector<16x256xf32>, vector<32x256xf32> -> vector<32x256xf32>
    %c0_89 = arith.constant 0 : index
    %c0_90 = arith.constant 0 : index
    %88 = vector.load %arg8[%c0_89, %c0_90] : memref<32x1xf32, #tpu.memory_space<vmem>>, vector<32x1xf32>
    %89 = vector.broadcast %88 : vector<32x1xf32> to vector<32x256xf32>
    %90 = arith.addf %87, %89 : vector<32x256xf32>
    %c0_91 = arith.constant 0 : index
    %c0_92 = arith.constant 0 : index
    %c0_93 = arith.constant 0 : index
    %91 = vector.load %arg2[%c0_91, %c0_92, %c0_93] : memref<4x256x36xf32, #tpu.memory_space<vmem>>, vector<1x256x36xf32>
    %92 = vector.shape_cast %91 : vector<1x256x36xf32> to vector<256x36xf32>
    %cst_94 = arith.constant dense<0.000000e+00> : vector<16x36xf32>
    %93 = tpu.matmul %85, %92, %cst_94 {dimension_numbers = #tpu.dot_dimension_numbers<[1], [0], [0], [1], [0, 0, 1, 1], [], []>} : vector<16x256xf32>, vector<256x36xf32>, vector<16x36xf32> -> vector<16x36xf32>
    %c0_95 = arith.constant 0 : index
    %c0_96 = arith.constant 0 : index
    %c0_97 = arith.constant 0 : index
    %94 = vector.load %arg4[%c0_95, %c0_96, %c0_97] : memref<4x4x16xf32, #tpu.memory_space<vmem>>, vector<1x4x16xf32>
    %95 = vector.shape_cast %94 : vector<1x4x16xf32> to vector<4x16xf32>
    %cst_98 = arith.constant dense<0.000000e+00> : vector<4x36xf32>
    %96 = tpu.matmul %95, %93, %cst_98 {dimension_numbers = #tpu.dot_dimension_numbers<[1], [0], [0], [1], [0, 0, 1, 1], [], []>} : vector<4x16xf32>, vector<16x36xf32>, vector<4x36xf32> -> vector<4x36xf32>
    %c0_99 = arith.constant 0 : index
    %c0_100 = arith.constant 0 : index
    %c0_101 = arith.constant 0 : index
    %97 = vector.load %arg5[%c0_99, %c0_100, %c0_101] : memref<4x4x1xf32, #tpu.memory_space<vmem>>, vector<1x4x1xf32>
    %98 = vector.shape_cast %97 : vector<1x4x1xf32> to vector<4x1xf32>
    %99 = vector.broadcast %98 : vector<4x1xf32> to vector<4x36xf32>
    %100 = arith.addf %96, %99 : vector<4x36xf32>
    %cst_102 = arith.constant 0.000000e+00 : f32
    %101 = vector.broadcast %cst_102 : f32 to vector<4x36xf32>
    %102 = arith.maximumf %100, %101 : vector<4x36xf32>
    %c0_103 = arith.constant 0 : index
    %c0_104 = arith.constant 0 : index
    %c0_105 = arith.constant 0 : index
    %103 = vector.load %arg3[%c0_103, %c0_104, %c0_105] : memref<4x36x256xf32, #tpu.memory_space<vmem>>, vector<1x36x256xf32>
    %104 = vector.shape_cast %103 : vector<1x36x256xf32> to vector<36x256xf32>
    %cst_106 = arith.constant dense<0.000000e+00> : vector<4x256xf32>
    %105 = tpu.matmul %102, %104, %cst_106 {dimension_numbers = #tpu.dot_dimension_numbers<[1], [0], [0], [1], [0, 0, 1, 1], [], []>} : vector<4x36xf32>, vector<36x256xf32>, vector<4x256xf32> -> vector<4x256xf32>
    %c0_107 = arith.constant 0 : index
    %c0_108 = arith.constant 0 : index
    %c0_109 = arith.constant 0 : index
    %106 = vector.load %arg7[%c0_107, %c0_108, %c0_109] : memref<4x32x4xf32, #tpu.memory_space<vmem>>, vector<1x32x4xf32>
    %107 = vector.shape_cast %106 : vector<1x32x4xf32> to vector<32x4xf32>
    %cst_110 = arith.constant dense<0.000000e+00> : vector<32x256xf32>
    %108 = tpu.matmul %107, %105, %cst_110 {dimension_numbers = #tpu.dot_dimension_numbers<[1], [0], [0], [1], [0, 0, 1, 1], [], []>} : vector<32x4xf32>, vector<4x256xf32>, vector<32x256xf32> -> vector<32x256xf32>
    %109 = arith.addf %90, %108 : vector<32x256xf32>
    %c1_111 = arith.constant 1 : index
    %c0_112 = arith.constant 0 : index
    %c0_113 = arith.constant 0 : index
    %110 = vector.load %arg2[%c1_111, %c0_112, %c0_113] : memref<4x256x36xf32, #tpu.memory_space<vmem>>, vector<1x256x36xf32>
    %111 = vector.shape_cast %110 : vector<1x256x36xf32> to vector<256x36xf32>
    %cst_114 = arith.constant dense<0.000000e+00> : vector<16x36xf32>
    %112 = tpu.matmul %85, %111, %cst_114 {dimension_numbers = #tpu.dot_dimension_numbers<[1], [0], [0], [1], [0, 0, 1, 1], [], []>} : vector<16x256xf32>, vector<256x36xf32>, vector<16x36xf32> -> vector<16x36xf32>
    %c1_115 = arith.constant 1 : index
    %c0_116 = arith.constant 0 : index
    %c0_117 = arith.constant 0 : index
    %113 = vector.load %arg4[%c1_115, %c0_116, %c0_117] : memref<4x4x16xf32, #tpu.memory_space<vmem>>, vector<1x4x16xf32>
    %114 = vector.shape_cast %113 : vector<1x4x16xf32> to vector<4x16xf32>
    %cst_118 = arith.constant dense<0.000000e+00> : vector<4x36xf32>
    %115 = tpu.matmul %114, %112, %cst_118 {dimension_numbers = #tpu.dot_dimension_numbers<[1], [0], [0], [1], [0, 0, 1, 1], [], []>} : vector<4x16xf32>, vector<16x36xf32>, vector<4x36xf32> -> vector<4x36xf32>
    %c1_119 = arith.constant 1 : index
    %c0_120 = arith.constant 0 : index
    %c0_121 = arith.constant 0 : index
    %116 = vector.load %arg5[%c1_119, %c0_120, %c0_121] : memref<4x4x1xf32, #tpu.memory_space<vmem>>, vector<1x4x1xf32>
    %117 = vector.shape_cast %116 : vector<1x4x1xf32> to vector<4x1xf32>
    %118 = vector.broadcast %117 : vector<4x1xf32> to vector<4x36xf32>
    %119 = arith.addf %115, %118 : vector<4x36xf32>
    %cst_122 = arith.constant 0.000000e+00 : f32
    %120 = vector.broadcast %cst_122 : f32 to vector<4x36xf32>
    %121 = arith.maximumf %119, %120 : vector<4x36xf32>
    %c1_123 = arith.constant 1 : index
    %c0_124 = arith.constant 0 : index
    %c0_125 = arith.constant 0 : index
    %122 = vector.load %arg3[%c1_123, %c0_124, %c0_125] : memref<4x36x256xf32, #tpu.memory_space<vmem>>, vector<1x36x256xf32>
    %123 = vector.shape_cast %122 : vector<1x36x256xf32> to vector<36x256xf32>
    %cst_126 = arith.constant dense<0.000000e+00> : vector<4x256xf32>
    %124 = tpu.matmul %121, %123, %cst_126 {dimension_numbers = #tpu.dot_dimension_numbers<[1], [0], [0], [1], [0, 0, 1, 1], [], []>} : vector<4x36xf32>, vector<36x256xf32>, vector<4x256xf32> -> vector<4x256xf32>
    %c1_127 = arith.constant 1 : index
    %c0_128 = arith.constant 0 : index
    %c0_129 = arith.constant 0 : index
    %125 = vector.load %arg7[%c1_127, %c0_128, %c0_129] : memref<4x32x4xf32, #tpu.memory_space<vmem>>, vector<1x32x4xf32>
    %126 = vector.shape_cast %125 : vector<1x32x4xf32> to vector<32x4xf32>
    %cst_130 = arith.constant dense<0.000000e+00> : vector<32x256xf32>
    %127 = tpu.matmul %126, %124, %cst_130 {dimension_numbers = #tpu.dot_dimension_numbers<[1], [0], [0], [1], [0, 0, 1, 1], [], []>} : vector<32x4xf32>, vector<4x256xf32>, vector<32x256xf32> -> vector<32x256xf32>
    %128 = arith.addf %109, %127 : vector<32x256xf32>
    %c2_131 = arith.constant 2 : index
    %c0_132 = arith.constant 0 : index
    %c0_133 = arith.constant 0 : index
    %129 = vector.load %arg2[%c2_131, %c0_132, %c0_133] : memref<4x256x36xf32, #tpu.memory_space<vmem>>, vector<1x256x36xf32>
    %130 = vector.shape_cast %129 : vector<1x256x36xf32> to vector<256x36xf32>
    %cst_134 = arith.constant dense<0.000000e+00> : vector<16x36xf32>
    %131 = tpu.matmul %85, %130, %cst_134 {dimension_numbers = #tpu.dot_dimension_numbers<[1], [0], [0], [1], [0, 0, 1, 1], [], []>} : vector<16x256xf32>, vector<256x36xf32>, vector<16x36xf32> -> vector<16x36xf32>
    %c2_135 = arith.constant 2 : index
    %c0_136 = arith.constant 0 : index
    %c0_137 = arith.constant 0 : index
    %132 = vector.load %arg4[%c2_135, %c0_136, %c0_137] : memref<4x4x16xf32, #tpu.memory_space<vmem>>, vector<1x4x16xf32>
    %133 = vector.shape_cast %132 : vector<1x4x16xf32> to vector<4x16xf32>
    %cst_138 = arith.constant dense<0.000000e+00> : vector<4x36xf32>
    %134 = tpu.matmul %133, %131, %cst_138 {dimension_numbers = #tpu.dot_dimension_numbers<[1], [0], [0], [1], [0, 0, 1, 1], [], []>} : vector<4x16xf32>, vector<16x36xf32>, vector<4x36xf32> -> vector<4x36xf32>
    %c2_139 = arith.constant 2 : index
    %c0_140 = arith.constant 0 : index
    %c0_141 = arith.constant 0 : index
    %135 = vector.load %arg5[%c2_139, %c0_140, %c0_141] : memref<4x4x1xf32, #tpu.memory_space<vmem>>, vector<1x4x1xf32>
    %136 = vector.shape_cast %135 : vector<1x4x1xf32> to vector<4x1xf32>
    %137 = vector.broadcast %136 : vector<4x1xf32> to vector<4x36xf32>
    %138 = arith.addf %134, %137 : vector<4x36xf32>
    %cst_142 = arith.constant 0.000000e+00 : f32
    %139 = vector.broadcast %cst_142 : f32 to vector<4x36xf32>
    %140 = arith.maximumf %138, %139 : vector<4x36xf32>
    %c2_143 = arith.constant 2 : index
    %c0_144 = arith.constant 0 : index
    %c0_145 = arith.constant 0 : index
    %141 = vector.load %arg3[%c2_143, %c0_144, %c0_145] : memref<4x36x256xf32, #tpu.memory_space<vmem>>, vector<1x36x256xf32>
    %142 = vector.shape_cast %141 : vector<1x36x256xf32> to vector<36x256xf32>
    %cst_146 = arith.constant dense<0.000000e+00> : vector<4x256xf32>
    %143 = tpu.matmul %140, %142, %cst_146 {dimension_numbers = #tpu.dot_dimension_numbers<[1], [0], [0], [1], [0, 0, 1, 1], [], []>} : vector<4x36xf32>, vector<36x256xf32>, vector<4x256xf32> -> vector<4x256xf32>
    %c2_147 = arith.constant 2 : index
    %c0_148 = arith.constant 0 : index
    %c0_149 = arith.constant 0 : index
    %144 = vector.load %arg7[%c2_147, %c0_148, %c0_149] : memref<4x32x4xf32, #tpu.memory_space<vmem>>, vector<1x32x4xf32>
    %145 = vector.shape_cast %144 : vector<1x32x4xf32> to vector<32x4xf32>
    %cst_150 = arith.constant dense<0.000000e+00> : vector<32x256xf32>
    %146 = tpu.matmul %145, %143, %cst_150 {dimension_numbers = #tpu.dot_dimension_numbers<[1], [0], [0], [1], [0, 0, 1, 1], [], []>} : vector<32x4xf32>, vector<4x256xf32>, vector<32x256xf32> -> vector<32x256xf32>
    %147 = arith.addf %128, %146 : vector<32x256xf32>
    %c3_151 = arith.constant 3 : index
    %c0_152 = arith.constant 0 : index
    %c0_153 = arith.constant 0 : index
    %148 = vector.load %arg2[%c3_151, %c0_152, %c0_153] : memref<4x256x36xf32, #tpu.memory_space<vmem>>, vector<1x256x36xf32>
    %149 = vector.shape_cast %148 : vector<1x256x36xf32> to vector<256x36xf32>
    %cst_154 = arith.constant dense<0.000000e+00> : vector<16x36xf32>
    %150 = tpu.matmul %85, %149, %cst_154 {dimension_numbers = #tpu.dot_dimension_numbers<[1], [0], [0], [1], [0, 0, 1, 1], [], []>} : vector<16x256xf32>, vector<256x36xf32>, vector<16x36xf32> -> vector<16x36xf32>
    %c3_155 = arith.constant 3 : index
    %c0_156 = arith.constant 0 : index
    %c0_157 = arith.constant 0 : index
    %151 = vector.load %arg4[%c3_155, %c0_156, %c0_157] : memref<4x4x16xf32, #tpu.memory_space<vmem>>, vector<1x4x16xf32>
    %152 = vector.shape_cast %151 : vector<1x4x16xf32> to vector<4x16xf32>
    %cst_158 = arith.constant dense<0.000000e+00> : vector<4x36xf32>
    %153 = tpu.matmul %152, %150, %cst_158 {dimension_numbers = #tpu.dot_dimension_numbers<[1], [0], [0], [1], [0, 0, 1, 1], [], []>} : vector<4x16xf32>, vector<16x36xf32>, vector<4x36xf32> -> vector<4x36xf32>
    %c3_159 = arith.constant 3 : index
    %c0_160 = arith.constant 0 : index
    %c0_161 = arith.constant 0 : index
    %154 = vector.load %arg5[%c3_159, %c0_160, %c0_161] : memref<4x4x1xf32, #tpu.memory_space<vmem>>, vector<1x4x1xf32>
    %155 = vector.shape_cast %154 : vector<1x4x1xf32> to vector<4x1xf32>
    %156 = vector.broadcast %155 : vector<4x1xf32> to vector<4x36xf32>
    %157 = arith.addf %153, %156 : vector<4x36xf32>
    %cst_162 = arith.constant 0.000000e+00 : f32
    %158 = vector.broadcast %cst_162 : f32 to vector<4x36xf32>
    %159 = arith.maximumf %157, %158 : vector<4x36xf32>
    %c3_163 = arith.constant 3 : index
    %c0_164 = arith.constant 0 : index
    %c0_165 = arith.constant 0 : index
    %160 = vector.load %arg3[%c3_163, %c0_164, %c0_165] : memref<4x36x256xf32, #tpu.memory_space<vmem>>, vector<1x36x256xf32>
    %161 = vector.shape_cast %160 : vector<1x36x256xf32> to vector<36x256xf32>
    %cst_166 = arith.constant dense<0.000000e+00> : vector<4x256xf32>
    %162 = tpu.matmul %159, %161, %cst_166 {dimension_numbers = #tpu.dot_dimension_numbers<[1], [0], [0], [1], [0, 0, 1, 1], [], []>} : vector<4x36xf32>, vector<36x256xf32>, vector<4x256xf32> -> vector<4x256xf32>
    %c3_167 = arith.constant 3 : index
    %c0_168 = arith.constant 0 : index
    %c0_169 = arith.constant 0 : index
    %163 = vector.load %arg7[%c3_167, %c0_168, %c0_169] : memref<4x32x4xf32, #tpu.memory_space<vmem>>, vector<1x32x4xf32>
    %164 = vector.shape_cast %163 : vector<1x32x4xf32> to vector<32x4xf32>
    %cst_170 = arith.constant dense<0.000000e+00> : vector<32x256xf32>
    %165 = tpu.matmul %164, %162, %cst_170 {dimension_numbers = #tpu.dot_dimension_numbers<[1], [0], [0], [1], [0, 0, 1, 1], [], []>} : vector<32x4xf32>, vector<4x256xf32>, vector<32x256xf32> -> vector<32x256xf32>
    %166 = arith.addf %147, %165 : vector<32x256xf32>
    %cst_171 = arith.constant 0.000000e+00 : f32
    %167 = vector.broadcast %cst_171 : f32 to vector<32x256xf32>
    %168 = arith.maximumf %166, %167 : vector<32x256xf32>
    %c0_172 = arith.constant 0 : index
    %c256_173 = arith.constant 256 : index
    %169 = vector.load %arg9[%c0_172, %c256_173] : memref<32x512xf32, #tpu.memory_space<vmem>>, vector<32x256xf32>
    tpu.vector_store %arg9[%c0_172, %c256_173], %168 {strides = array<i32>} : memref<32x512xf32, #tpu.memory_space<vmem>>, vector<32x256xf32>,
    return
  }
  func.func @transform_0(%arg0: i32) -> (i32, i32) {
    %c0_i32 = arith.constant 0 : i32
    %c0_i32_0 = arith.constant 0 : i32
    %c0_i32_1 = arith.constant 0 : i32
    return %c0_i32, %c0_i32_0 : i32, i32
  }
  func.func @transform_1(%arg0: i32) -> (i32, i32, i32) {
    %c0_i32 = arith.constant 0 : i32
    %c0_i32_0 = arith.constant 0 : i32
    %c0_i32_1 = arith.constant 0 : i32
    %c0_i32_2 = arith.constant 0 : i32
    return %c0_i32, %c0_i32_0, %c0_i32_1 : i32, i32, i32
  }
  func.func @transform_2(%arg0: i32) -> (i32, i32, i32) {
    %c0_i32 = arith.constant 0 : i32
    %c0_i32_0 = arith.constant 0 : i32
    %c0_i32_1 = arith.constant 0 : i32
    %c0_i32_2 = arith.constant 0 : i32
    return %c0_i32, %c0_i32_0, %c0_i32_1 : i32, i32, i32
  }
  func.func @transform_3(%arg0: i32) -> (i32, i32, i32) {
    %c0_i32 = arith.constant 0 : i32
    %c0_i32_0 = arith.constant 0 : i32
    %c0_i32_1 = arith.constant 0 : i32
    %c0_i32_2 = arith.constant 0 : i32
    return %c0_i32, %c0_i32_0, %c0_i32_1 : i32, i32, i32
  }
  func.func @transform_4(%arg0: i32) -> (i32, i32, i32) {
    %c0_i32 = arith.constant 0 : i32
    %c0_i32_0 = arith.constant 0 : i32
    %c0_i32_1 = arith.constant 0 : i32
    %c0_i32_2 = arith.constant 0 : i32
    return %c0_i32, %c0_i32_0, %c0_i32_1 : i32, i32, i32
  }
  func.func @transform_5(%arg0: i32) -> (i32, i32) {
    %c0_i32 = arith.constant 0 : i32
    %c0_i32_0 = arith.constant 0 : i32
    %c0_i32_1 = arith.constant 0 : i32
    return %c0_i32, %c0_i32_0 : i32, i32
  }
  func.func @transform_6(%arg0: i32) -> (i32, i32, i32) {
    %c0_i32 = arith.constant 0 : i32
    %c0_i32_0 = arith.constant 0 : i32
    %c0_i32_1 = arith.constant 0 : i32
    %c0_i32_2 = arith.constant 0 : i32
    return %c0_i32, %c0_i32_0, %c0_i32_1 : i32, i32, i32
  }
  func.func @transform_7(%arg0: i32) -> (i32, i32) {
    %c0_i32 = arith.constant 0 : i32
    %c0_i32_0 = arith.constant 0 : i32
    %c0_i32_1 = arith.constant 0 : i32
    return %c0_i32, %c0_i32_0 : i32, i32
  }
  func.func @transform_8(%arg0: i32) -> (i32, i32) {
    %c0_i32 = arith.constant 0 : i32
    %c0_i32_0 = arith.constant 0 : i32
    %c0_i32_1 = arith.constant 0 : i32
    return %c0_i32, %c0_i32_0 : i32, i32
  }
}

</mosaic_0001>

<llo_original>
// kernel: _pyramid_forward.1
$region0: #{_pyramid_forward.1}
  #allocation0 [shape = 'u32[]', space=smem, size = 0x4, offset = 0x4, fixed_abs, tag = 'smem constant byte address 0x4 - core index']
  #allocation1 [shape = 'u32[144,128]{1,0:T(1,128)}', space=vmem, size = 0x12000, scoped, tag = 'internal scratch']
  %s0 = inlined_call_operand.vmem [shape: f32[16,512], index: 0, kind: input, shape index: {}]
  %s1 = inlined_call_operand.vmem [shape: f32[4,256,36], index: 1, kind: input, shape index: {}]
  %s2 = inlined_call_operand.vmem [shape: f32[4,36,256], index: 2, kind: input, shape index: {}]
  %s3 = inlined_call_operand.vmem [shape: f32[4,4,16], index: 3, kind: input, shape index: {}]
  %s4 = inlined_call_operand.vmem [shape: f32[4,4,1], index: 4, kind: input, shape index: {}]
  %s5 = inlined_call_operand.vmem [shape: f32[32,16], index: 5, kind: input, shape index: {}]
  %s6 = inlined_call_operand.vmem [shape: f32[4,32,4], index: 6, kind: input, shape index: {}]
  %s7 = inlined_call_operand.vmem [shape: f32[32,1], index: 7, kind: input, shape index: {}]
  %s8 = inlined_call_operand.vmem [shape: f32[32,512], index: 8, kind: output, shape index: {}]
  %s9 = sld [smem:[#allocation0]]
  $region42: #{_pyramid_forward.1} parent=0
    _
  %s11 = ssub.s32 1, %s9
  %s12 = scalar_select 0, %s11, %s9
  // Predicated region
  $region2: #{_pyramid_forward.1} parent=0 // pred_check
    _
  $region3: #{_pyramid_forward.1} parent=0 // pred_check_branch
    %14 = sbr.rel (0) target = $region5
  $region4: #{_pyramid_forward.1} parent=0 // pred_region
    _
  $region5: #{_pyramid_forward.1} parent=0 // pred_fallthru
    _
  // Predicated region
  $region6: #{_pyramid_forward.1} parent=0 // pred_check
    _
  $region7: #{_pyramid_forward.1} parent=0 // pred_check_branch
    %16 = sbr.rel (0) target = $region9
  $region8: #{_pyramid_forward.1} parent=0 // pred_region
    _
  $region9: #{_pyramid_forward.1} parent=0 // pred_fallthru
    _
  // Predicated region
  $region10: #{_pyramid_forward.1} parent=0 // pred_check
    _
  $region11: #{_pyramid_forward.1} parent=0 // pred_check_branch
    %18 = sbr.rel (0) target = $region13
  $region12: #{_pyramid_forward.1} parent=0 // pred_region
    _
  $region13: #{_pyramid_forward.1} parent=0 // pred_fallthru
    _
  // Predicated region
  $region14: #{_pyramid_forward.1} parent=0 // pred_check
    _
  $region15: #{_pyramid_forward.1} parent=0 // pred_check_branch
    %20 = sbr.rel (0) target = $region17
  $region16: #{_pyramid_forward.1} parent=0 // pred_region
    _
  $region17: #{_pyramid_forward.1} parent=0 // pred_fallthru
    _
  // Predicated region
  $region18: #{_pyramid_forward.1} parent=0 // pred_check
    _
  $region19: #{_pyramid_forward.1} parent=0 // pred_check_branch
    %22 = sbr.rel (0) target = $region21
  $region20: #{_pyramid_forward.1} parent=0 // pred_region
    _
  $region21: #{_pyramid_forward.1} parent=0 // pred_fallthru
    _
  // Predicated region
  $region22: #{_pyramid_forward.1} parent=0 // pred_check
    _
  $region23: #{_pyramid_forward.1} parent=0 // pred_check_branch
    %24 = sbr.rel (0) target = $region25
  $region24: #{_pyramid_forward.1} parent=0 // pred_region
    _
  $region25: #{_pyramid_forward.1} parent=0 // pred_fallthru
    _
  // Predicated region
  $region26: #{_pyramid_forward.1} parent=0 // pred_check
    _
  $region27: #{_pyramid_forward.1} parent=0 // pred_check_branch
    %26 = sbr.rel (0) target = $region29
  $region28: #{_pyramid_forward.1} parent=0 // pred_region
    _
  $region29: #{_pyramid_forward.1} parent=0 // pred_fallthru
    _
  // Predicated region
  $region30: #{_pyramid_forward.1} parent=0 // pred_check
    _
  $region31: #{_pyramid_forward.1} parent=0 // pred_check_branch
    %28 = sbr.rel (0) target = $region33
  $region32: #{_pyramid_forward.1} parent=0 // pred_region
    _
  $region33: #{_pyramid_forward.1} parent=0 // pred_fallthru
    _
  %v29 = vld [vmem:[%s0] sm:$0xff]
  %v30 = vld [vmem:[%s0 + $0x8] sm:$0xff]
  %v31 = vld [vmem:[%s0 + $0x20] sm:$0xff]
  %v32 = vld [vmem:[%s0 + $0x28] sm:$0xff]
  %v33 = vld [vmem:[%s5] sm:$0xff]
  %v34 = vld [vmem:[%s5 + $0x8] sm:$0xff]
  %v35 = vld [vmem:[%s5 + $0x10] sm:$0xff]
  %v36 = vld [vmem:[%s5 + $0x18] sm:$0xff]
  %v37 = vld [vmem:[%s7] sm:$0xff]
  %v38 = vld [vmem:[%s7 + $0x8] sm:$0xff]
  %v39 = vld [vmem:[%s7 + $0x10] sm:$0xff]
  %v40 = vld [vmem:[%s7 + $0x18] sm:$0xff]
  %42 = vset.pattern.permute.xlu0 0
  %43 = vperm.xlu0 %42, %v37
  %v44 = vpop.permute.xlu0 %43
  %47 = vset.pattern.permute.xlu0 0
  %48 = vperm.xlu0 %47, %v38
  %v49 = vpop.permute.xlu0 %48
  %52 = vset.pattern.permute.xlu0 0
  %53 = vperm.xlu0 %52, %v39
  %v54 = vpop.permute.xlu0 %53
  %57 = vset.pattern.permute.xlu0 0
  %58 = vperm.xlu0 %57, %v40
  %v59 = vpop.permute.xlu0 %58
  %vm61 = vcmask 130048
  %v63 = vsel %vm61, %v33, 0
  %v66 = vsel %vm61, %v34, 0
  %v69 = vsel %vm61, %v35, 0
  %v72 = vsel %vm61, %v36, 0
  %74 = vmatprep.subr.mxu0 0.0
  %75 = vmatpush1.msra.mxu0 0.0
  %76 = vmatprep.subr.mxu0 0.0
  %77 = vmatpush1.msra.mxu0 0.0
  %78 = vmatprep.subr.mxu0 0.0
  %79 = vmatpush1.msra.mxu0 0.0
  %80 = vmatprep.subr.mxu0 0.0
  %81 = vmatpush1.msra.mxu0 0.0
  %82 = vmatprep.subr.mxu0 0.0
  %83 = vmatpush1.msra.mxu0 0.0
  %84 = vmatprep.subr.mxu0 0.0
  %85 = vmatpush1.msra.mxu0 0.0
  %86 = vmatprep.subr.mxu0 0.0
  %87 = vmatpush1.msra.mxu0 0.0
  %88 = vmatprep.subr.mxu0 0.0
  %89 = vmatpush1.msra.mxu0 0.0
  %90 = vmatprep.subr.mxu0 0.0
  %91 = vmatpush1.msra.mxu0 0.0
  %92 = vmatprep.subr.mxu0 0.0
  %93 = vmatpush1.msra.mxu0 0.0
  %94 = vmatprep.subr.mxu0 0.0
  %95 = vmatpush1.msra.mxu0 0.0
  %96 = vmatprep.subr.mxu0 0.0
  %97 = vmatpush1.msra.mxu0 0.0
  %98 = vmatprep.subr.mxu0 0.0
  %99 = vmatpush1.msra.mxu0 0.0
  %100 = vmatprep.subr.mxu0 0.0
  %101 = vmatpush1.msra.mxu0 0.0
  %102 = vmatprep.subr.mxu0 %v32
  %103 = vmatpush1.msra.mxu0 %v31
  %104 = vmatprep.subr.mxu0 %v30
  %105 = vmatpush1.msra.mxu0 %v29
  %106 = vmatprep.subr.mxu0 0.0
  %107 = vmatpush2.msra.mxu0 0.0
  %108 = vmatprep.subr.mxu0 0.0
  %109 = vmatpush2.msra.mxu0 0.0
  %110 = vmatprep.subr.mxu0 0.0
  %111 = vmatpush2.msra.mxu0 0.0
  %112 = vmatprep.subr.mxu0 0.0
  %113 = vmatpush2.msra.mxu0 0.0
  %114 = vmatprep.subr.mxu0 0.0
  %115 = vmatpush2.msra.mxu0 0.0
  %116 = vmatprep.subr.mxu0 0.0
  %117 = vmatpush2.msra.mxu0 0.0
  %118 = vmatprep.subr.mxu0 0.0
  %119 = vmatpush2.msra.mxu0 0.0
  %120 = vmatprep.subr.mxu0 0.0
  %121 = vmatpush2.msra.mxu0 0.0
  %122 = vmatprep.subr.mxu0 0.0
  %123 = vmatpush2.msra.mxu0 0.0
  %124 = vmatprep.subr.mxu0 0.0
  %125 = vmatpush2.msra.mxu0 0.0
  %126 = vmatprep.subr.mxu0 0.0
  %127 = vmatpush2.msra.mxu0 0.0
  %128 = vmatprep.subr.mxu0 0.0
  %129 = vmatpush2.msra.mxu0 0.0
  %130 = vmatprep.subr.mxu0 0.0
  %131 = vmatpush2.msra.mxu0 0.0
  %132 = vmatprep.subr.mxu0 0.0
  %133 = vmatpush2.msra.mxu0 0.0
  %134 = vmatprep.subr.mxu0 0.0
  %135 = vmatpush2.msra.mxu0 0.0
  %136 = vmatprep.subr.mxu0 0.0
  %137 = vmatpush2.msra.mxu0 0.0
  %138 = vmatprep.mubr.f32.mxu0 0.0
  %139 = vmatmul.mubr.f32.gmra.mxu0 %v63
  %v140 = vpop.f32.mrf.mxu0
  %v141 = vadd.f32 %v44, %v140
  %v142 = vpop.f32.mrf.mxu0
  %v143 = vadd.f32 %v44, %v142
  %144 = vmatprep.mubr.f32.mxu0 0.0
  %145 = vmatmul.mubr.f32.gmra.mxu0 %v66
  %v146 = vpop.f32.mrf.mxu0
  %v147 = vadd.f32 %v49, %v146
  %v148 = vpop.f32.mrf.mxu0
  %v149 = vadd.f32 %v49, %v148
  %150 = vmatprep.mubr.f32.mxu0 0.0
  %151 = vmatmul.mubr.f32.gmra.mxu0 %v69
  %v152 = vpop.f32.mrf.mxu0
  %v153 = vadd.f32 %v54, %v152
  %v154 = vpop.f32.mrf.mxu0
  %v155 = vadd.f32 %v54, %v154
  %156 = vmatprep.mubr.f32.mxu0 0.0
  %157 = vmatmul.mubr.f32.gmra.mxu0 %v72
  %v158 = vpop.f32.mrf.mxu0
  %v159 = vadd.f32 %v59, %v158
  %v160 = vpop.f32.mrf.mxu0
  %v161 = vadd.f32 %v59, %v160
  %162 = vdwg.mxu0
  %v163 = vld [vmem:[%s1] sm:$0xff]
  %v164 = vld [vmem:[%s1 + $0x8] sm:$0xff]
  %v165 = vld [vmem:[%s1 + $0x10] sm:$0xff]
  %v166 = vld [vmem:[%s1 + $0x18] sm:$0xff]
  %v167 = vld [vmem:[%s1 + $0x20] sm:$0xff]
  %v168 = vld [vmem:[%s1 + $0x28] sm:$0xff]
  %v169 = vld [vmem:[%s1 + $0x30] sm:$0xff]
  %v170 = vld [vmem:[%s1 + $0x38] sm:$0xff]
  %v171 = vld [vmem:[%s1 + $0x40] sm:$0xff]
  %v172 = vld [vmem:[%s1 + $0x48] sm:$0xff]
  %v173 = vld [vmem:[%s1 + $0x50] sm:$0xff]
  %v174 = vld [vmem:[%s1 + $0x58] sm:$0xff]
  %v175 = vld [vmem:[%s1 + $0x60] sm:$0xff]
  %v176 = vld [vmem:[%s1 + $0x68] sm:$0xff]
  %v177 = vld [vmem:[%s1 + $0x70] sm:$0xff]
  %v178 = vld [vmem:[%s1 + $0x78] sm:$0xff]
  %v179 = vld [vmem:[%s1 + $0x80] sm:$0xff]
  %v180 = vld [vmem:[%s1 + $0x88] sm:$0xff]
  %v181 = vld [vmem:[%s1 + $0x90] sm:$0xff]
  %v182 = vld [vmem:[%s1 + $0x98] sm:$0xff]
  %v183 = vld [vmem:[%s1 + $0xa0] sm:$0xff]
  %v184 = vld [vmem:[%s1 + $0xa8] sm:$0xff]
  %v185 = vld [vmem:[%s1 + $0xb0] sm:$0xff]
  %v186 = vld [vmem:[%s1 + $0xb8] sm:$0xff]
  %v187 = vld [vmem:[%s1 + $0xc0] sm:$0xff]
  %v188 = vld [vmem:[%s1 + $0xc8] sm:$0xff]
  %v189 = vld [vmem:[%s1 + $0xd0] sm:$0xff]
  %v190 = vld [vmem:[%s1 + $0xd8] sm:$0xff]
  %v191 = vld [vmem:[%s1 + $0xe0] sm:$0xff]
  %v192 = vld [vmem:[%s1 + $0xe8] sm:$0xff]
  %v193 = vld [vmem:[%s1 + $0xf0] sm:$0xff]
  %v194 = vld [vmem:[%s1 + $0xf8] sm:$0xff]
  %195 = vmatprep.subr.mxu0 0.0
  %196 = vmatpush1.msra.mxu0 %v178
  %197 = vmatprep.subr.mxu0 0.0
  %198 = vmatpush1.msra.mxu0 %v177
  %199 = vmatprep.subr.mxu0 0.0
  %200 = vmatpush1.msra.mxu0 %v176
  %201 = vmatprep.subr.mxu0 0.0
  %202 = vmatpush1.msra.mxu0 %v175
  %203 = vmatprep.subr.mxu0 0.0
  %204 = vmatpush1.msra.mxu0 %v174
  %205 = vmatprep.subr.mxu0 0.0
  %206 = vmatpush1.msra.mxu0 %v173
  %207 = vmatprep.subr.mxu0 0.0
  %208 = vmatpush1.msra.mxu0 %v172
  %209 = vmatprep.subr.mxu0 0.0
  %210 = vmatpush1.msra.mxu0 %v171
  %211 = vmatprep.subr.mxu0 0.0
  %212 = vmatpush1.msra.mxu0 %v170
  %213 = vmatprep.subr.mxu0 0.0
  %214 = vmatpush1.msra.mxu0 %v169
  %215 = vmatprep.subr.mxu0 0.0
  %216 = vmatpush1.msra.mxu0 %v168
  %217 = vmatprep.subr.mxu0 0.0
  %218 = vmatpush1.msra.mxu0 %v167
  %219 = vmatprep.subr.mxu0 0.0
  %220 = vmatpush1.msra.mxu0 %v166
  %221 = vmatprep.subr.mxu0 0.0
  %222 = vmatpush1.msra.mxu0 %v165
  %223 = vmatprep.subr.mxu0 0.0
  %224 = vmatpush1.msra.mxu0 %v164
  %225 = vmatprep.subr.mxu0 0.0
  %226 = vmatpush1.msra.mxu0 %v163
  %227 = vmatprep.subr.mxu0 0.0
  %228 = vmatpush2.msra.mxu0 %v194
  %229 = vmatprep.subr.mxu0 0.0
  %230 = vmatpush2.msra.mxu0 %v193
  %231 = vmatprep.subr.mxu0 0.0
  %232 = vmatpush2.msra.mxu0 %v192
  %233 = vmatprep.subr.mxu0 0.0
  %234 = vmatpush2.msra.mxu0 %v191
  %235 = vmatprep.subr.mxu0 0.0
  %236 = vmatpush2.msra.mxu0 %v190
  %237 = vmatprep.subr.mxu0 0.0
  %238 = vmatpush2.msra.mxu0 %v189
  %239 = vmatprep.subr.mxu0 0.0
  %240 = vmatpush2.msra.mxu0 %v188
  %241 = vmatprep.subr.mxu0 0.0
  %242 = vmatpush2.msra.mxu0 %v187
  %243 = vmatprep.subr.mxu0 0.0
  %244 = vmatpush2.msra.mxu0 %v186
  %245 = vmatprep.subr.mxu0 0.0
  %246 = vmatpush2.msra.mxu0 %v185
  %247 = vmatprep.subr.mxu0 0.0
  %248 = vmatpush2.msra.mxu0 %v184
  %249 = vmatprep.subr.mxu0 0.0
  %250 = vmatpush2.msra.mxu0 %v183
  %251 = vmatprep.subr.mxu0 0.0
  %252 = vmatpush2.msra.mxu0 %v182
  %253 = vmatprep.subr.mxu0 0.0
  %254 = vmatpush2.msra.mxu0 %v181
  %255 = vmatprep.subr.mxu0 0.0
  %256 = vmatpush2.msra.mxu0 %v180
  %257 = vmatprep.subr.mxu0 0.0
  %258 = vmatpush2.msra.mxu0 %v179
  %259 = vmatprep.mubr.f32.mxu0 %v30
  %260 = vmatmul.mubr.f32.gmra.mxu0 %v29
  %v261 = vpop.f32.mrf.mxu0
  %v262 = vadd.f32 0.0, %v261
  %v263 = vpop.f32.mrf.mxu0
  %264 = vmatprep.mubr.f32.mxu0 %v32
  %265 = vmatmul.mubr.f32.gmra.mxu0 %v31
  %v266 = vpop.f32.mrf.mxu0
  %v267 = vadd.f32 0.0, %v266
  %v268 = vpop.f32.mrf.mxu0
  %269 = vdwg.mxu0
  %v270 = vld [vmem:[%s3] sm:$0xf]
  %v271 = vld [vmem:[%s4] sm:$0xf]
  %273 = vset.pattern.permute.xlu0 0
  %274 = vperm.xlu0 %273, %v271
  %v275 = vpop.permute.xlu0 %274
  %v278 = vsel %vm61, %v270, 0
  %280 = vmatprep.subr.mxu0 0.0
  %281 = vmatpush1.msra.mxu0 0.0
  %282 = vmatprep.subr.mxu0 0.0
  %283 = vmatpush1.msra.mxu0 0.0
  %284 = vmatprep.subr.mxu0 0.0
  %285 = vmatpush1.msra.mxu0 0.0
  %286 = vmatprep.subr.mxu0 0.0
  %287 = vmatpush1.msra.mxu0 0.0
  %288 = vmatprep.subr.mxu0 0.0
  %289 = vmatpush1.msra.mxu0 0.0
  %290 = vmatprep.subr.mxu0 0.0
  %291 = vmatpush1.msra.mxu0 0.0
  %292 = vmatprep.subr.mxu0 0.0
  %293 = vmatpush1.msra.mxu0 0.0
  %294 = vmatprep.subr.mxu0 0.0
  %295 = vmatpush1.msra.mxu0 0.0
  %296 = vmatprep.subr.mxu0 0.0
  %297 = vmatpush1.msra.mxu0 0.0
  %298 = vmatprep.subr.mxu0 0.0
  %299 = vmatpush1.msra.mxu0 0.0
  %300 = vmatprep.subr.mxu0 0.0
  %301 = vmatpush1.msra.mxu0 0.0
  %302 = vmatprep.subr.mxu0 0.0
  %303 = vmatpush1.msra.mxu0 0.0
  %304 = vmatprep.subr.mxu0 0.0
  %305 = vmatpush1.msra.mxu0 0.0
  %306 = vmatprep.subr.mxu0 0.0
  %307 = vmatpush1.msra.mxu0 0.0
  %308 = vmatprep.subr.mxu0 0.0
  %309 = vmatpush1.msra.mxu0 %v267
  %310 = vmatprep.subr.mxu0 0.0
  %311 = vmatpush1.msra.mxu0 %v262
  %312 = vmatprep.subr.mxu0 0.0
  %313 = vmatpush2.msra.mxu0 0.0
  %314 = vmatprep.subr.mxu0 0.0
  %315 = vmatpush2.msra.mxu0 0.0
  %316 = vmatprep.subr.mxu0 0.0
  %317 = vmatpush2.msra.mxu0 0.0
  %318 = vmatprep.subr.mxu0 0.0
  %319 = vmatpush2.msra.mxu0 0.0
  %320 = vmatprep.subr.mxu0 0.0
  %321 = vmatpush2.msra.mxu0 0.0
  %322 = vmatprep.subr.mxu0 0.0
  %323 = vmatpush2.msra.mxu0 0.0
  %324 = vmatprep.subr.mxu0 0.0
  %325 = vmatpush2.msra.mxu0 0.0
  %326 = vmatprep.subr.mxu0 0.0
  %327 = vmatpush2.msra.mxu0 0.0
  %328 = vmatprep.subr.mxu0 0.0
  %329 = vmatpush2.msra.mxu0 0.0
  %330 = vmatprep.subr.mxu0 0.0
  %331 = vmatpush2.msra.mxu0 0.0
  %332 = vmatprep.subr.mxu0 0.0
  %333 = vmatpush2.msra.mxu0 0.0
  %334 = vmatprep.subr.mxu0 0.0
  %335 = vmatpush2.msra.mxu0 0.0
  %336 = vmatprep.subr.mxu0 0.0
  %337 = vmatpush2.msra.mxu0 0.0
  %338 = vmatprep.subr.mxu0 0.0
  %339 = vmatpush2.msra.mxu0 0.0
  %340 = vmatprep.subr.mxu0 0.0
  %341 = vmatpush2.msra.mxu0 0.0
  %342 = vmatprep.subr.mxu0 0.0
  %343 = vmatpush2.msra.mxu0 0.0
  %344 = vmatprep.mubr.f32.mxu0 0.0
  %345 = vmatmul.mubr.f32.gmra.mxu0 %v278
  %v346 = vpop.f32.mrf.mxu0
  %v347 = vadd.f32 %v275, %v346
  %v348 = vpop.f32.mrf.mxu0
  %349 = vdwg.mxu0
  %v350 = vmax.f32 %v347, 0.0
  %v351 = vld [vmem:[%s2] sm:$0xff]
  %v352 = vld [vmem:[%s2 + $0x8] sm:$0xff]
  %v353 = vld [vmem:[%s2 + $0x10] sm:$0xff]
  %v354 = vld [vmem:[%s2 + $0x18] sm:$0xff]
  %v355 = vld [vmem:[%s2 + $0x20] sm:$0xff]
  %v356 = vld [vmem:[%s2 + $0x28] sm:$0xff]
  %v357 = vld [vmem:[%s2 + $0x30] sm:$0xff]
  %v358 = vld [vmem:[%s2 + $0x38] sm:$0xff]
  %v359 = vld [vmem:[%s2 + $0x40] sm:$0xf]
  %v360 = vld [vmem:[%s2 + $0x48] sm:$0xf]
  %vm361 = vcmask 293888
  %v363 = vsel %vm361, %v350, 0
  %vm365 = vcmask 1043456
  %v367 = vsel %vm365, %v359, 0
  %v370 = vsel %vm365, %v360, 0
  %372 = vmatprep.subr.mxu0 0.0
  %373 = vmatpush1.msra.mxu0 0.0
  %374 = vmatprep.subr.mxu0 0.0
  %375 = vmatpush1.msra.mxu0 0.0
  %376 = vmatprep.subr.mxu0 0.0
  %377 = vmatpush1.msra.mxu0 0.0
  %378 = vmatprep.subr.mxu0 0.0
  %379 = vmatpush1.msra.mxu0 0.0
  %380 = vmatprep.subr.mxu0 0.0
  %381 = vmatpush1.msra.mxu0 0.0
  %382 = vmatprep.subr.mxu0 0.0
  %383 = vmatpush1.msra.mxu0 0.0
  %384 = vmatprep.subr.mxu0 0.0
  %385 = vmatpush1.msra.mxu0 0.0
  %386 = vmatprep.subr.mxu0 0.0
  %387 = vmatpush1.msra.mxu0 0.0
  %388 = vmatprep.subr.mxu0 0.0
  %389 = vmatpush1.msra.mxu0 0.0
  %390 = vmatprep.subr.mxu0 0.0
  %391 = vmatpush1.msra.mxu0 0.0
  %392 = vmatprep.subr.mxu0 0.0
  %393 = vmatpush1.msra.mxu0 0.0
  %394 = vmatprep.subr.mxu0 %v370
  %395 = vmatpush1.msra.mxu0 %v367
  %396 = vmatprep.subr.mxu0 %v358
  %397 = vmatpush1.msra.mxu0 %v357
  %398 = vmatprep.subr.mxu0 %v356
  %399 = vmatpush1.msra.mxu0 %v355
  %400 = vmatprep.subr.mxu0 %v354
  %401 = vmatpush1.msra.mxu0 %v353
  %402 = vmatprep.subr.mxu0 %v352
  %403 = vmatpush1.msra.mxu0 %v351
  %404 = vmatprep.subr.mxu0 0.0
  %405 = vmatpush2.msra.mxu0 0.0
  %406 = vmatprep.subr.mxu0 0.0
  %407 = vmatpush2.msra.mxu0 0.0
  %408 = vmatprep.subr.mxu0 0.0
  %409 = vmatpush2.msra.mxu0 0.0
  %410 = vmatprep.subr.mxu0 0.0
  %411 = vmatpush2.msra.mxu0 0.0
  %412 = vmatprep.subr.mxu0 0.0
  %413 = vmatpush2.msra.mxu0 0.0
  %414 = vmatprep.subr.mxu0 0.0
  %415 = vmatpush2.msra.mxu0 0.0
  %416 = vmatprep.subr.mxu0 0.0
  %417 = vmatpush2.msra.mxu0 0.0
  %418 = vmatprep.subr.mxu0 0.0
  %419 = vmatpush2.msra.mxu0 0.0
  %420 = vmatprep.subr.mxu0 0.0
  %421 = vmatpush2.msra.mxu0 0.0
  %422 = vmatprep.subr.mxu0 0.0
  %423 = vmatpush2.msra.mxu0 0.0
  %424 = vmatprep.subr.mxu0 0.0
  %425 = vmatpush2.msra.mxu0 0.0
  %426 = vmatprep.subr.mxu0 0.0
  %427 = vmatpush2.msra.mxu0 0.0
  %428 = vmatprep.subr.mxu0 0.0
  %429 = vmatpush2.msra.mxu0 0.0
  %430 = vmatprep.subr.mxu0 0.0
  %431 = vmatpush2.msra.mxu0 0.0
  %432 = vmatprep.subr.mxu0 0.0
  %433 = vmatpush2.msra.mxu0 0.0
  %434 = vmatprep.subr.mxu0 0.0
  %435 = vmatpush2.msra.mxu0 0.0
  %436 = vmatprep.mubr.f32.mxu0 0.0
  %437 = vmatmul.mubr.f32.gmra.mxu0 %v363
  %v438 = vpop.f32.mrf.mxu0
  %v439 = vadd.f32 0.0, %v438
  %v440 = vpop.f32.mrf.mxu0
  %v441 = vadd.f32 0.0, %v440
  %442 = vdwg.mxu0
  %v443 = vld [vmem:[%s6] sm:$0xff]
  %v444 = vld [vmem:[%s6 + $0x8] sm:$0xff]
  %v445 = vld [vmem:[%s6 + $0x10] sm:$0xff]
  %v446 = vld [vmem:[%s6 + $0x18] sm:$0xff]
  %vm447 = vcmask 31744
  %v449 = vsel %vm447, %v443, 0
  %v452 = vsel %vm447, %v444, 0
  %v455 = vsel %vm447, %v445, 0
  %v458 = vsel %vm447, %v446, 0
  %v461 = vsel %vm365, %v439, 0
  %v464 = vsel %vm365, %v441, 0
  %466 = vmatprep.subr.mxu0 0.0
  %467 = vmatpush1.msra.mxu0 0.0
  %468 = vmatprep.subr.mxu0 0.0
  %469 = vmatpush1.msra.mxu0 0.0
  %470 = vmatprep.subr.mxu0 0.0
  %471 = vmatpush1.msra.mxu0 0.0
  %472 = vmatprep.subr.mxu0 0.0
  %473 = vmatpush1.msra.mxu0 0.0
  %474 = vmatprep.subr.mxu0 0.0
  %475 = vmatpush1.msra.mxu0 0.0
  %476 = vmatprep.subr.mxu0 0.0
  %477 = vmatpush1.msra.mxu0 0.0
  %478 = vmatprep.subr.mxu0 0.0
  %479 = vmatpush1.msra.mxu0 0.0
  %480 = vmatprep.subr.mxu0 0.0
  %481 = vmatpush1.msra.mxu0 0.0
  %482 = vmatprep.subr.mxu0 0.0
  %483 = vmatpush1.msra.mxu0 0.0
  %484 = vmatprep.subr.mxu0 0.0
  %485 = vmatpush1.msra.mxu0 0.0
  %486 = vmatprep.subr.mxu0 0.0
  %487 = vmatpush1.msra.mxu0 0.0
  %488 = vmatprep.subr.mxu0 0.0
  %489 = vmatpush1.msra.mxu0 0.0
  %490 = vmatprep.subr.mxu0 0.0
  %491 = vmatpush1.msra.mxu0 0.0
  %492 = vmatprep.subr.mxu0 0.0
  %493 = vmatpush1.msra.mxu0 0.0
  %494 = vmatprep.subr.mxu0 0.0
  %495 = vmatpush1.msra.mxu0 0.0
  %496 = vmatprep.subr.mxu0 %v464
  %497 = vmatpush1.msra.mxu0 %v461
  %498 = vmatprep.subr.mxu0 0.0
  %499 = vmatpush2.msra.mxu0 0.0
  %500 = vmatprep.subr.mxu0 0.0
  %501 = vmatpush2.msra.mxu0 0.0
  %502 = vmatprep.subr.mxu0 0.0
  %503 = vmatpush2.msra.mxu0 0.0
  %504 = vmatprep.subr.mxu0 0.0
  %505 = vmatpush2.msra.mxu0 0.0
  %506 = vmatprep.subr.mxu0 0.0
  %507 = vmatpush2.msra.mxu0 0.0
  %508 = vmatprep.subr.mxu0 0.0
  %509 = vmatpush2.msra.mxu0 0.0
  %510 = vmatprep.subr.mxu0 0.0
  %511 = vmatpush2.msra.mxu0 0.0
  %512 = vmatprep.subr.mxu0 0.0
  %513 = vmatpush2.msra.mxu0 0.0
  %514 = vmatprep.subr.mxu0 0.0
  %515 = vmatpush2.msra.mxu0 0.0
  %516 = vmatprep.subr.mxu0 0.0
  %517 = vmatpush2.msra.mxu0 0.0
  %518 = vmatprep.subr.mxu0 0.0
  %519 = vmatpush2.msra.mxu0 0.0
  %520 = vmatprep.subr.mxu0 0.0
  %521 = vmatpush2.msra.mxu0 0.0
  %522 = vmatprep.subr.mxu0 0.0
  %523 = vmatpush2.msra.mxu0 0.0
  %524 = vmatprep.subr.mxu0 0.0
  %525 = vmatpush2.msra.mxu0 0.0
  %526 = vmatprep.subr.mxu0 0.0
  %527 = vmatpush2.msra.mxu0 0.0
  %528 = vmatprep.subr.mxu0 0.0
  %529 = vmatpush2.msra.mxu0 0.0
  %530 = vmatprep.mubr.f32.mxu0 0.0
  %531 = vmatmul.mubr.f32.gmra.mxu0 %v449
  %v532 = vpop.f32.mrf.mxu0
  %v533 = vadd.f32 0.0, %v532
  %v534 = vpop.f32.mrf.mxu0
  %v535 = vadd.f32 0.0, %v534
  %536 = vmatprep.mubr.f32.mxu0 0.0
  %537 = vmatmul.mubr.f32.gmra.mxu0 %v452
  %v538 = vpop.f32.mrf.mxu0
  %v539 = vadd.f32 0.0, %v538
  %v540 = vpop.f32.mrf.mxu0
  %v541 = vadd.f32 0.0, %v540
  %542 = vmatprep.mubr.f32.mxu0 0.0
  %543 = vmatmul.mubr.f32.gmra.mxu0 %v455
  %v544 = vpop.f32.mrf.mxu0
  %v545 = vadd.f32 0.0, %v544
  %v546 = vpop.f32.mrf.mxu0
  %v547 = vadd.f32 0.0, %v546
  %548 = vmatprep.mubr.f32.mxu0 0.0
  %549 = vmatmul.mubr.f32.gmra.mxu0 %v458
  %v550 = vpop.f32.mrf.mxu0
  %v551 = vadd.f32 0.0, %v550
  %v552 = vpop.f32.mrf.mxu0
  %v553 = vadd.f32 0.0, %v552
  %554 = vdwg.mxu0
  %v555 = vadd.f32 %v141, %v533
  %v556 = vadd.f32 %v143, %v535
  %v557 = vadd.f32 %v147, %v539
  %v558 = vadd.f32 %v149, %v541
  %v559 = vadd.f32 %v153, %v545
  %v560 = vadd.f32 %v155, %v547
  %v561 = vadd.f32 %v159, %v551
  %v562 = vadd.f32 %v161, %v553
  %s563 = scalar_lea.vmem %s1, 256
  %v564 = vld [vmem:[%s563] sm:$0xff]
  %v565 = vld [vmem:[%s563 + $0x8] sm:$0xff]
  %v566 = vld [vmem:[%s563 + $0x10] sm:$0xff]
  %v567 = vld [vmem:[%s563 + $0x18] sm:$0xff]
  %v568 = vld [vmem:[%s563 + $0x20] sm:$0xff]
  %v569 = vld [vmem:[%s563 + $0x28] sm:$0xff]
  %v570 = vld [vmem:[%s563 + $0x30] sm:$0xff]
  %v571 = vld [vmem:[%s563 + $0x38] sm:$0xff]
  %v572 = vld [vmem:[%s563 + $0x40] sm:$0xff]
  %v573 = vld [vmem:[%s563 + $0x48] sm:$0xff]
  %v574 = vld [vmem:[%s563 + $0x50] sm:$0xff]
  %v575 = vld [vmem:[%s563 + $0x58] sm:$0xff]
  %v576 = vld [vmem:[%s563 + $0x60] sm:$0xff]
  %v577 = vld [vmem:[%s563 + $0x68] sm:$0xff]
  %v578 = vld [vmem:[%s563 + $0x70] sm:$0xff]
  %v579 = vld [vmem:[%s563 + $0x78] sm:$0xff]
  %v580 = vld [vmem:[%s563 + $0x80] sm:$0xff]
  %v581 = vld [vmem:[%s563 + $0x88] sm:$0xff]
  %v582 = vld [vmem:[%s563 + $0x90] sm:$0xff]
  %v583 = vld [vmem:[%s563 + $0x98] sm:$0xff]
  %v584 = vld [vmem:[%s563 + $0xa0] sm:$0xff]
  %v585 = vld [vmem:[%s563 + $0xa8] sm:$0xff]
  %v586 = vld [vmem:[%s563 + $0xb0] sm:$0xff]
  %v587 = vld [vmem:[%s563 + $0xb8] sm:$0xff]
  %v588 = vld [vmem:[%s563 + $0xc0] sm:$0xff]
  %v589 = vld [vmem:[%s563 + $0xc8] sm:$0xff]
  %v590 = vld [vmem:[%s563 + $0xd0] sm:$0xff]
  %v591 = vld [vmem:[%s563 + $0xd8] sm:$0xff]
  %v592 = vld [vmem:[%s563 + $0xe0] sm:$0xff]
  %v593 = vld [vmem:[%s563 + $0xe8] sm:$0xff]
  %v594 = vld [vmem:[%s563 + $0xf0] sm:$0xff]
  %v595 = vld [vmem:[%s563 + $0xf8] sm:$0xff]
  %596 = vmatprep.subr.mxu0 0.0
  %597 = vmatpush1.msra.mxu0 %v579
  %598 = vmatprep.subr.mxu0 0.0
  %599 = vmatpush1.msra.mxu0 %v578
  %600 = vmatprep.subr.mxu0 0.0
  %601 = vmatpush1.msra.mxu0 %v577
  %602 = vmatprep.subr.mxu0 0.0
  %603 = vmatpush1.msra.mxu0 %v576
  %604 = vmatprep.subr.mxu0 0.0
  %605 = vmatpush1.msra.mxu0 %v575
  %606 = vmatprep.subr.mxu0 0.0
  %607 = vmatpush1.msra.mxu0 %v574
  %608 = vmatprep.subr.mxu0 0.0
  %609 = vmatpush1.msra.mxu0 %v573
  %610 = vmatprep.subr.mxu0 0.0
  %611 = vmatpush1.msra.mxu0 %v572
  %612 = vmatprep.subr.mxu0 0.0
  %613 = vmatpush1.msra.mxu0 %v571
  %614 = vmatprep.subr.mxu0 0.0
  %615 = vmatpush1.msra.mxu0 %v570
  %616 = vmatprep.subr.mxu0 0.0
  %617 = vmatpush1.msra.mxu0 %v569
  %618 = vmatprep.subr.mxu0 0.0
  %619 = vmatpush1.msra.mxu0 %v568
  %620 = vmatprep.subr.mxu0 0.0
  %621 = vmatpush1.msra.mxu0 %v567
  %622 = vmatprep.subr.mxu0 0.0
  %623 = vmatpush1.msra.mxu0 %v566
  %624 = vmatprep.subr.mxu0 0.0
  %625 = vmatpush1.msra.mxu0 %v565
  %626 = vmatprep.subr.mxu0 0.0
  %627 = vmatpush1.msra.mxu0 %v564
  %628 = vmatprep.subr.mxu0 0.0
  %629 = vmatpush2.msra.mxu0 %v595
  %630 = vmatprep.subr.mxu0 0.0
  %631 = vmatpush2.msra.mxu0 %v594
  %632 = vmatprep.subr.mxu0 0.0
  %633 = vmatpush2.msra.mxu0 %v593
  %634 = vmatprep.subr.mxu0 0.0
  %635 = vmatpush2.msra.mxu0 %v592
  %636 = vmatprep.subr.mxu0 0.0
  %637 = vmatpush2.msra.mxu0 %v591
  %638 = vmatprep.subr.mxu0 0.0
  %639 = vmatpush2.msra.mxu0 %v590
  %640 = vmatprep.subr.mxu0 0.0
  %641 = vmatpush2.msra.mxu0 %v589
  %642 = vmatprep.subr.mxu0 0.0
  %643 = vmatpush2.msra.mxu0 %v588
  %644 = vmatprep.subr.mxu0 0.0
  %645 = vmatpush2.msra.mxu0 %v587
  %646 = vmatprep.subr.mxu0 0.0
  %647 = vmatpush2.msra.mxu0 %v586
  %648 = vmatprep.subr.mxu0 0.0
  %649 = vmatpush2.msra.mxu0 %v585
  %650 = vmatprep.subr.mxu0 0.0
  %651 = vmatpush2.msra.mxu0 %v584
  %652 = vmatprep.subr.mxu0 0.0
  %653 = vmatpush2.msra.mxu0 %v583
  %654 = vmatprep.subr.mxu0 0.0
  %655 = vmatpush2.msra.mxu0 %v582
  %656 = vmatprep.subr.mxu0 0.0
  %657 = vmatpush2.msra.mxu0 %v581
  %658 = vmatprep.subr.mxu0 0.0
  %659 = vmatpush2.msra.mxu0 %v580
  %660 = vmatprep.mubr.f32.mxu0 %v30
  %661 = vmatmul.mubr.f32.gmra.mxu0 %v29
  %v662 = vpop.f32.mrf.mxu0
  %v663 = vadd.f32 0.0, %v662
  %v664 = vpop.f32.mrf.mxu0
  %665 = vmatprep.mubr.f32.mxu0 %v32
  %666 = vmatmul.mubr.f32.gmra.mxu0 %v31
  %v667 = vpop.f32.mrf.mxu0
  %v668 = vadd.f32 0.0, %v667
  %v669 = vpop.f32.mrf.mxu0
  %670 = vdwg.mxu0
  %s671 = scalar_lea.vmem %s3, 4
  %v672 = vld [vmem:[%s671] sm:$0xf]
  %s673 = scalar_lea.vmem %s4, 4
  %v674 = vld [vmem:[%s673] sm:$0xf]
  %676 = vset.pattern.permute.xlu0 0
  %677 = vperm.xlu0 %676, %v674
  %v678 = vpop.permute.xlu0 %677
  %v681 = vsel %vm61, %v672, 0
  %683 = vmatprep.subr.mxu0 0.0
  %684 = vmatpush1.msra.mxu0 0.0
  %685 = vmatprep.subr.mxu0 0.0
  %686 = vmatpush1.msra.mxu0 0.0
  %687 = vmatprep.subr.mxu0 0.0
  %688 = vmatpush1.msra.mxu0 0.0
  %689 = vmatprep.subr.mxu0 0.0
  %690 = vmatpush1.msra.mxu0 0.0
  %691 = vmatprep.subr.mxu0 0.0
  %692 = vmatpush1.msra.mxu0 0.0
  %693 = vmatprep.subr.mxu0 0.0
  %694 = vmatpush1.msra.mxu0 0.0
  %695 = vmatprep.subr.mxu0 0.0
  %696 = vmatpush1.msra.mxu0 0.0
  %697 = vmatprep.subr.mxu0 0.0
  %698 = vmatpush1.msra.mxu0 0.0
  %699 = vmatprep.subr.mxu0 0.0
  %700 = vmatpush1.msra.mxu0 0.0
  %701 = vmatprep.subr.mxu0 0.0
  %702 = vmatpush1.msra.mxu0 0.0
  %703 = vmatprep.subr.mxu0 0.0
  %704 = vmatpush1.msra.mxu0 0.0
  %705 = vmatprep.subr.mxu0 0.0
  %706 = vmatpush1.msra.mxu0 0.0
  %707 = vmatprep.subr.mxu0 0.0
  %708 = vmatpush1.msra.mxu0 0.0
  %709 = vmatprep.subr.mxu0 0.0
  %710 = vmatpush1.msra.mxu0 0.0
  %711 = vmatprep.subr.mxu0 0.0
  %712 = vmatpush1.msra.mxu0 %v668
  %713 = vmatprep.subr.mxu0 0.0
  %714 = vmatpush1.msra.mxu0 %v663
  %715 = vmatprep.subr.mxu0 0.0
  %716 = vmatpush2.msra.mxu0 0.0
  %717 = vmatprep.subr.mxu0 0.0
  %718 = vmatpush2.msra.mxu0 0.0
  %719 = vmatprep.subr.mxu0 0.0
  %720 = vmatpush2.msra.mxu0 0.0
  %721 = vmatprep.subr.mxu0 0.0
  %722 = vmatpush2.msra.mxu0 0.0
  %723 = vmatprep.subr.mxu0 0.0
  %724 = vmatpush2.msra.mxu0 0.0
  %725 = vmatprep.subr.mxu0 0.0
  %726 = vmatpush2.msra.mxu0 0.0
  %727 = vmatprep.subr.mxu0 0.0
  %728 = vmatpush2.msra.mxu0 0.0
  %729 = vmatprep.subr.mxu0 0.0
  %730 = vmatpush2.msra.mxu0 0.0
  %731 = vmatprep.subr.mxu0 0.0
  %732 = vmatpush2.msra.mxu0 0.0
  %733 = vmatprep.subr.mxu0 0.0
  %734 = vmatpush2.msra.mxu0 0.0
  %735 = vmatprep.subr.mxu0 0.0
  %736 = vmatpush2.msra.mxu0 0.0
  %737 = vmatprep.subr.mxu0 0.0
  %738 = vmatpush2.msra.mxu0 0.0
  %739 = vmatprep.subr.mxu0 0.0
  %740 = vmatpush2.msra.mxu0 0.0
  %741 = vmatprep.subr.mxu0 0.0
  %742 = vmatpush2.msra.mxu0 0.0
  %743 = vmatprep.subr.mxu0 0.0
  %744 = vmatpush2.msra.mxu0 0.0
  %745 = vmatprep.subr.mxu0 0.0
  %746 = vmatpush2.msra.mxu0 0.0
  %747 = vmatprep.mubr.f32.mxu0 0.0
  %748 = vmatmul.mubr.f32.gmra.mxu0 %v681
  %v749 = vpop.f32.mrf.mxu0
  %v750 = vadd.f32 %v678, %v749
  %v751 = vpop.f32.mrf.mxu0
  %752 = vdwg.mxu0
  %v753 = vmax.f32 %v750, 0.0
  %s754 = scalar_lea.vmem %s2, 80
  %v755 = vld [vmem:[%s754] sm:$0xff]
  %v756 = vld [vmem:[%s754 + $0x8] sm:$0xff]
  %v757 = vld [vmem:[%s754 + $0x10] sm:$0xff]
  %v758 = vld [vmem:[%s754 + $0x18] sm:$0xff]
  %v759 = vld [vmem:[%s754 + $0x20] sm:$0xff]
  %v760 = vld [vmem:[%s754 + $0x28] sm:$0xff]
  %v761 = vld [vmem:[%s754 + $0x30] sm:$0xff]
  %v762 = vld [vmem:[%s754 + $0x38] sm:$0xff]
  %v763 = vld [vmem:[%s754 + $0x40] sm:$0xf]
  %v764 = vld [vmem:[%s754 + $0x48] sm:$0xf]
  %v766 = vsel %vm361, %v753, 0
  %v769 = vsel %vm365, %v763, 0
  %v772 = vsel %vm365, %v764, 0
  %774 = vmatprep.subr.mxu0 0.0
  %775 = vmatpush1.msra.mxu0 0.0
  %776 = vmatprep.subr.mxu0 0.0
  %777 = vmatpush1.msra.mxu0 0.0
  %778 = vmatprep.subr.mxu0 0.0
  %779 = vmatpush1.msra.mxu0 0.0
  %780 = vmatprep.subr.mxu0 0.0
  %781 = vmatpush1.msra.mxu0 0.0
  %782 = vmatprep.subr.mxu0 0.0
  %783 = vmatpush1.msra.mxu0 0.0
  %784 = vmatprep.subr.mxu0 0.0
  %785 = vmatpush1.msra.mxu0 0.0
  %786 = vmatprep.subr.mxu0 0.0
  %787 = vmatpush1.msra.mxu0 0.0
  %788 = vmatprep.subr.mxu0 0.0
  %789 = vmatpush1.msra.mxu0 0.0
  %790 = vmatprep.subr.mxu0 0.0
  %791 = vmatpush1.msra.mxu0 0.0
  %792 = vmatprep.subr.mxu0 0.0
  %793 = vmatpush1.msra.mxu0 0.0
  %794 = vmatprep.subr.mxu0 0.0
  %795 = vmatpush1.msra.mxu0 0.0
  %796 = vmatprep.subr.mxu0 %v772
  %797 = vmatpush1.msra.mxu0 %v769
  %798 = vmatprep.subr.mxu0 %v762
  %799 = vmatpush1.msra.mxu0 %v761
  %800 = vmatprep.subr.mxu0 %v760
  %801 = vmatpush1.msra.mxu0 %v759
  %802 = vmatprep.subr.mxu0 %v758
  %803 = vmatpush1.msra.mxu0 %v757
  %804 = vmatprep.subr.mxu0 %v756
  %805 = vmatpush1.msra.mxu0 %v755
  %806 = vmatprep.subr.mxu0 0.0
  %807 = vmatpush2.msra.mxu0 0.0
  %808 = vmatprep.subr.mxu0 0.0
  %809 = vmatpush2.msra.mxu0 0.0
  %810 = vmatprep.subr.mxu0 0.0
  %811 = vmatpush2.msra.mxu0 0.0
  %812 = vmatprep.subr.mxu0 0.0
  %813 = vmatpush2.msra.mxu0 0.0
  %814 = vmatprep.subr.mxu0 0.0
  %815 = vmatpush2.msra.mxu0 0.0
  %816 = vmatprep.subr.mxu0 0.0
  %817 = vmatpush2.msra.mxu0 0.0
  %818 = vmatprep.subr.mxu0 0.0
  %819 = vmatpush2.msra.mxu0 0.0
  %820 = vmatprep.subr.mxu0 0.0
  %821 = vmatpush2.msra.mxu0 0.0
  %822 = vmatprep.subr.mxu0 0.0
  %823 = vmatpush2.msra.mxu0 0.0
  %824 = vmatprep.subr.mxu0 0.0
  %825 = vmatpush2.msra.mxu0 0.0
  %826 = vmatprep.subr.mxu0 0.0
  %827 = vmatpush2.msra.mxu0 0.0
  %828 = vmatprep.subr.mxu0 0.0
  %829 = vmatpush2.msra.mxu0 0.0
  %830 = vmatprep.subr.mxu0 0.0
  %831 = vmatpush2.msra.mxu0 0.0
  %832 = vmatprep.subr.mxu0 0.0
  %833 = vmatpush2.msra.mxu0 0.0
  %834 = vmatprep.subr.mxu0 0.0
  %835 = vmatpush2.msra.mxu0 0.0
  %836 = vmatprep.subr.mxu0 0.0
  %837 = vmatpush2.msra.mxu0 0.0
  %838 = vmatprep.mubr.f32.mxu0 0.0
  %839 = vmatmul.mubr.f32.gmra.mxu0 %v766
  %v840 = vpop.f32.mrf.mxu0
  %v841 = vadd.f32 0.0, %v840
  %v842 = vpop.f32.mrf.mxu0
  %v843 = vadd.f32 0.0, %v842
  %844 = vdwg.mxu0
  %s845 = scalar_lea.vmem %s6, 32
  %v846 = vld [vmem:[%s845] sm:$0xff]
  %v847 = vld [vmem:[%s845 + $0x8] sm:$0xff]
  %v848 = vld [vmem:[%s845 + $0x10] sm:$0xff]
  %v849 = vld [vmem:[%s845 + $0x18] sm:$0xff]
  %v851 = vsel %vm447, %v846, 0
  %v854 = vsel %vm447, %v847, 0
  %v857 = vsel %vm447, %v848, 0
  %v860 = vsel %vm447, %v849, 0
  %v863 = vsel %vm365, %v841, 0
  %v866 = vsel %vm365, %v843, 0
  %868 = vmatprep.subr.mxu0 0.0
  %869 = vmatpush1.msra.mxu0 0.0
  %870 = vmatprep.subr.mxu0 0.0
  %871 = vmatpush1.msra.mxu0 0.0
  %872 = vmatprep.subr.mxu0 0.0
  %873 = vmatpush1.msra.mxu0 0.0
  %874 = vmatprep.subr.mxu0 0.0
  %875 = vmatpush1.msra.mxu0 0.0
  %876 = vmatprep.subr.mxu0 0.0
  %877 = vmatpush1.msra.mxu0 0.0
  %878 = vmatprep.subr.mxu0 0.0
  %879 = vmatpush1.msra.mxu0 0.0
  %880 = vmatprep.subr.mxu0 0.0
  %881 = vmatpush1.msra.mxu0 0.0
  %882 = vmatprep.subr.mxu0 0.0
  %883 = vmatpush1.msra.mxu0 0.0
  %884 = vmatprep.subr.mxu0 0.0
  %885 = vmatpush1.msra.mxu0 0.0
  %886 = vmatprep.subr.mxu0 0.0
  %887 = vmatpush1.msra.mxu0 0.0
  %888 = vmatprep.subr.mxu0 0.0
  %889 = vmatpush1.msra.mxu0 0.0
  %890 = vmatprep.subr.mxu0 0.0
  %891 = vmatpush1.msra.mxu0 0.0
  %892 = vmatprep.subr.mxu0 0.0
  %893 = vmatpush1.msra.mxu0 0.0
  %894 = vmatprep.subr.mxu0 0.0
  %895 = vmatpush1.msra.mxu0 0.0
  %896 = vmatprep.subr.mxu0 0.0
  %897 = vmatpush1.msra.mxu0 0.0
  %898 = vmatprep.subr.mxu0 %v866
  %899 = vmatpush1.msra.mxu0 %v863
  %900 = vmatprep.subr.mxu0 0.0
  %901 = vmatpush2.msra.mxu0 0.0
  %902 = vmatprep.subr.mxu0 0.0
  %903 = vmatpush2.msra.mxu0 0.0
  %904 = vmatprep.subr.mxu0 0.0
  %905 = vmatpush2.msra.mxu0 0.0
  %906 = vmatprep.subr.mxu0 0.0
  %907 = vmatpush2.msra.mxu0 0.0
  %908 = vmatprep.subr.mxu0 0.0
  %909 = vmatpush2.msra.mxu0 0.0
  %910 = vmatprep.subr.mxu0 0.0
  %911 = vmatpush2.msra.mxu0 0.0
  %912 = vmatprep.subr.mxu0 0.0
  %913 = vmatpush2.msra.mxu0 0.0
  %914 = vmatprep.subr.mxu0 0.0
  %915 = vmatpush2.msra.mxu0 0.0
  %916 = vmatprep.subr.mxu0 0.0
  %917 = vmatpush2.msra.mxu0 0.0
  %918 = vmatprep.subr.mxu0 0.0
  %919 = vmatpush2.msra.mxu0 0.0
  %920 = vmatprep.subr.mxu0 0.0
  %921 = vmatpush2.msra.mxu0 0.0
  %922 = vmatprep.subr.mxu0 0.0
  %923 = vmatpush2.msra.mxu0 0.0
  %924 = vmatprep.subr.mxu0 0.0
  %925 = vmatpush2.msra.mxu0 0.0
  %926 = vmatprep.subr.mxu0 0.0
  %927 = vmatpush2.msra.mxu0 0.0
  %928 = vmatprep.subr.mxu0 0.0
  %929 = vmatpush2.msra.mxu0 0.0
  %930 = vmatprep.subr.mxu0 0.0
  %931 = vmatpush2.msra.mxu0 0.0
  %932 = vmatprep.mubr.f32.mxu0 0.0
  %933 = vmatmul.mubr.f32.gmra.mxu0 %v851
  %v934 = vpop.f32.mrf.mxu0
  %v935 = vadd.f32 0.0, %v934
  %v936 = vpop.f32.mrf.mxu0
  %v937 = vadd.f32 0.0, %v936
  %938 = vmatprep.mubr.f32.mxu0 0.0
  %939 = vmatmul.mubr.f32.gmra.mxu0 %v854
  %v940 = vpop.f32.mrf.mxu0
  %v941 = vadd.f32 0.0, %v940
  %v942 = vpop.f32.mrf.mxu0
  %v943 = vadd.f32 0.0, %v942
  %944 = vmatprep.mubr.f32.mxu0 0.0
  %945 = vmatmul.mubr.f32.gmra.mxu0 %v857
  %v946 = vpop.f32.mrf.mxu0
  %v947 = vadd.f32 0.0, %v946
  %v948 = vpop.f32.mrf.mxu0
  %v949 = vadd.f32 0.0, %v948
  %950 = vmatprep.mubr.f32.mxu0 0.0
  %951 = vmatmul.mubr.f32.gmra.mxu0 %v860
  %v952 = vpop.f32.mrf.mxu0
  %v953 = vadd.f32 0.0, %v952
  %v954 = vpop.f32.mrf.mxu0
  %v955 = vadd.f32 0.0, %v954
  %956 = vdwg.mxu0
  %v957 = vadd.f32 %v555, %v935
  %v958 = vadd.f32 %v556, %v937
  %v959 = vadd.f32 %v557, %v941
  %v960 = vadd.f32 %v558, %v943
  %v961 = vadd.f32 %v559, %v947
  %v962 = vadd.f32 %v560, %v949
  %v963 = vadd.f32 %v561, %v953
  %v964 = vadd.f32 %v562, %v955
  %s965 = scalar_lea.vmem %s1, 512
  %v966 = vld [vmem:[%s965] sm:$0xff]
  %v967 = vld [vmem:[%s965 + $0x8] sm:$0xff]
  %v968 = vld [vmem:[%s965 + $0x10] sm:$0xff]
  %v969 = vld [vmem:[%s965 + $0x18] sm:$0xff]
  %v970 = vld [vmem:[%s965 + $0x20] sm:$0xff]
  %v971 = vld [vmem:[%s965 + $0x28] sm:$0xff]
  %v972 = vld [vmem:[%s965 + $0x30] sm:$0xff]
  %v973 = vld [vmem:[%s965 + $0x38] sm:$0xff]
  %v974 = vld [vmem:[%s965 + $0x40] sm:$0xff]
  %v975 = vld [vmem:[%s965 + $0x48] sm:$0xff]
  %v976 = vld [vmem:[%s965 + $0x50] sm:$0xff]
  %v977 = vld [vmem:[%s965 + $0x58] sm:$0xff]
  %v978 = vld [vmem:[%s965 + $0x60] sm:$0xff]
  %v979 = vld [vmem:[%s965 + $0x68] sm:$0xff]
  %v980 = vld [vmem:[%s965 + $0x70] sm:$0xff]
  %v981 = vld [vmem:[%s965 + $0x78] sm:$0xff]
  %v982 = vld [vmem:[%s965 + $0x80] sm:$0xff]
  %v983 = vld [vmem:[%s965 + $0x88] sm:$0xff]
  %v984 = vld [vmem:[%s965 + $0x90] sm:$0xff]
  %v985 = vld [vmem:[%s965 + $0x98] sm:$0xff]
  %v986 = vld [vmem:[%s965 + $0xa0] sm:$0xff]
  %v987 = vld [vmem:[%s965 + $0xa8] sm:$0xff]
  %v988 = vld [vmem:[%s965 + $0xb0] sm:$0xff]
  %v989 = vld [vmem:[%s965 + $0xb8] sm:$0xff]
  %v990 = vld [vmem:[%s965 + $0xc0] sm:$0xff]
  %v991 = vld [vmem:[%s965 + $0xc8] sm:$0xff]
  %v992 = vld [vmem:[%s965 + $0xd0] sm:$0xff]
  %v993 = vld [vmem:[%s965 + $0xd8] sm:$0xff]
  %v994 = vld [vmem:[%s965 + $0xe0] sm:$0xff]
  %v995 = vld [vmem:[%s965 + $0xe8] sm:$0xff]
  %v996 = vld [vmem:[%s965 + $0xf0] sm:$0xff]
  %v997 = vld [vmem:[%s965 + $0xf8] sm:$0xff]
  %998 = vmatprep.subr.mxu0 0.0
  %999 = vmatpush1.msra.mxu0 %v981
  %1000 = vmatprep.subr.mxu0 0.0
  %1001 = vmatpush1.msra.mxu0 %v980
  %1002 = vmatprep.subr.mxu0 0.0
  %1003 = vmatpush1.msra.mxu0 %v979
  %1004 = vmatprep.subr.mxu0 0.0
  %1005 = vmatpush1.msra.mxu0 %v978
  %1006 = vmatprep.subr.mxu0 0.0
  %1007 = vmatpush1.msra.mxu0 %v977
  %1008 = vmatprep.subr.mxu0 0.0
  %1009 = vmatpush1.msra.mxu0 %v976
  %1010 = vmatprep.subr.mxu0 0.0
  %1011 = vmatpush1.msra.mxu0 %v975
  %1012 = vmatprep.subr.mxu0 0.0
  %1013 = vmatpush1.msra.mxu0 %v974
  %1014 = vmatprep.subr.mxu0 0.0
  %1015 = vmatpush1.msra.mxu0 %v973
  %1016 = vmatprep.subr.mxu0 0.0
  %1017 = vmatpush1.msra.mxu0 %v972
  %1018 = vmatprep.subr.mxu0 0.0
  %1019 = vmatpush1.msra.mxu0 %v971
  %1020 = vmatprep.subr.mxu0 0.0
  %1021 = vmatpush1.msra.mxu0 %v970
  %1022 = vmatprep.subr.mxu0 0.0
  %1023 = vmatpush1.msra.mxu0 %v969
  %1024 = vmatprep.subr.mxu0 0.0
  %1025 = vmatpush1.msra.mxu0 %v968
  %1026 = vmatprep.subr.mxu0 0.0
  %1027 = vmatpush1.msra.mxu0 %v967
  %1028 = vmatprep.subr.mxu0 0.0
  %1029 = vmatpush1.msra.mxu0 %v966
  %1030 = vmatprep.subr.mxu0 0.0
  %1031 = vmatpush2.msra.mxu0 %v997
  %1032 = vmatprep.subr.mxu0 0.0
  %1033 = vmatpush2.msra.mxu0 %v996
  %1034 = vmatprep.subr.mxu0 0.0
  %1035 = vmatpush2.msra.mxu0 %v995
  %1036 = vmatprep.subr.mxu0 0.0
  %1037 = vmatpush2.msra.mxu0 %v994
  %1038 = vmatprep.subr.mxu0 0.0
  %1039 = vmatpush2.msra.mxu0 %v993
  %1040 = vmatprep.subr.mxu0 0.0
  %1041 = vmatpush2.msra.mxu0 %v992
  %1042 = vmatprep.subr.mxu0 0.0
  %1043 = vmatpush2.msra.mxu0 %v991
  %1044 = vmatprep.subr.mxu0 0.0
  %1045 = vmatpush2.msra.mxu0 %v990
  %1046 = vmatprep.subr.mxu0 0.0
  %1047 = vmatpush2.msra.mxu0 %v989
  %1048 = vmatprep.subr.mxu0 0.0
  %1049 = vmatpush2.msra.mxu0 %v988
  %1050 = vmatprep.subr.mxu0 0.0
  %1051 = vmatpush2.msra.mxu0 %v987
  %1052 = vmatprep.subr.mxu0 0.0
  %1053 = vmatpush2.msra.mxu0 %v986
  %1054 = vmatprep.subr.mxu0 0.0
  %1055 = vmatpush2.msra.mxu0 %v985
  %1056 = vmatprep.subr.mxu0 0.0
  %1057 = vmatpush2.msra.mxu0 %v984
  %1058 = vmatprep.subr.mxu0 0.0
  %1059 = vmatpush2.msra.mxu0 %v983
  %1060 = vmatprep.subr.mxu0 0.0
  %1061 = vmatpush2.msra.mxu0 %v982
  %1062 = vmatprep.mubr.f32.mxu0 %v30
  %1063 = vmatmul.mubr.f32.gmra.mxu0 %v29
  %v1064 = vpop.f32.mrf.mxu0
  %v1065 = vadd.f32 0.0, %v1064
  %v1066 = vpop.f32.mrf.mxu0
  %1067 = vmatprep.mubr.f32.mxu0 %v32
  %1068 = vmatmul.mubr.f32.gmra.mxu0 %v31
  %v1069 = vpop.f32.mrf.mxu0
  %v1070 = vadd.f32 0.0, %v1069
  %v1071 = vpop.f32.mrf.mxu0
  %1072 = vdwg.mxu0
  %s1073 = scalar_lea.vmem %s3, 8
  %v1074 = vld [vmem:[%s1073] sm:$0xf]
  %s1075 = scalar_lea.vmem %s4, 8
  %v1076 = vld [vmem:[%s1075] sm:$0xf]
  %1078 = vset.pattern.permute.xlu0 0
  %1079 = vperm.xlu0 %1078, %v1076
  %v1080 = vpop.permute.xlu0 %1079
  %v1083 = vsel %vm61, %v1074, 0
  %1085 = vmatprep.subr.mxu0 0.0
  %1086 = vmatpush1.msra.mxu0 0.0
  %1087 = vmatprep.subr.mxu0 0.0
  %1088 = vmatpush1.msra.mxu0 0.0
  %1089 = vmatprep.subr.mxu0 0.0
  %1090 = vmatpush1.msra.mxu0 0.0
  %1091 = vmatprep.subr.mxu0 0.0
  %1092 = vmatpush1.msra.mxu0 0.0
  %1093 = vmatprep.subr.mxu0 0.0
  %1094 = vmatpush1.msra.mxu0 0.0
  %1095 = vmatprep.subr.mxu0 0.0
  %1096 = vmatpush1.msra.mxu0 0.0
  %1097 = vmatprep.subr.mxu0 0.0
  %1098 = vmatpush1.msra.mxu0 0.0
  %1099 = vmatprep.subr.mxu0 0.0
  %1100 = vmatpush1.msra.mxu0 0.0
  %1101 = vmatprep.subr.mxu0 0.0
  %1102 = vmatpush1.msra.mxu0 0.0
  %1103 = vmatprep.subr.mxu0 0.0
  %1104 = vmatpush1.msra.mxu0 0.0
  %1105 = vmatprep.subr.mxu0 0.0
  %1106 = vmatpush1.msra.mxu0 0.0
  %1107 = vmatprep.subr.mxu0 0.0
  %1108 = vmatpush1.msra.mxu0 0.0
  %1109 = vmatprep.subr.mxu0 0.0
  %1110 = vmatpush1.msra.mxu0 0.0
  %1111 = vmatprep.subr.mxu0 0.0
  %1112 = vmatpush1.msra.mxu0 0.0
  %1113 = vmatprep.subr.mxu0 0.0
  %1114 = vmatpush1.msra.mxu0 %v1070
  %1115 = vmatprep.subr.mxu0 0.0
  %1116 = vmatpush1.msra.mxu0 %v1065
  %1117 = vmatprep.subr.mxu0 0.0
  %1118 = vmatpush2.msra.mxu0 0.0
  %1119 = vmatprep.subr.mxu0 0.0
  %1120 = vmatpush2.msra.mxu0 0.0
  %1121 = vmatprep.subr.mxu0 0.0
  %1122 = vmatpush2.msra.mxu0 0.0
  %1123 = vmatprep.subr.mxu0 0.0
  %1124 = vmatpush2.msra.mxu0 0.0
  %1125 = vmatprep.subr.mxu0 0.0
  %1126 = vmatpush2.msra.mxu0 0.0
  %1127 = vmatprep.subr.mxu0 0.0
  %1128 = vmatpush2.msra.mxu0 0.0
  %1129 = vmatprep.subr.mxu0 0.0
  %1130 = vmatpush2.msra.mxu0 0.0
  %1131 = vmatprep.subr.mxu0 0.0
  %1132 = vmatpush2.msra.mxu0 0.0
  %1133 = vmatprep.subr.mxu0 0.0
  %1134 = vmatpush2.msra.mxu0 0.0
  %1135 = vmatprep.subr.mxu0 0.0
  %1136 = vmatpush2.msra.mxu0 0.0
  %1137 = vmatprep.subr.mxu0 0.0
  %1138 = vmatpush2.msra.mxu0 0.0
  %1139 = vmatprep.subr.mxu0 0.0
  %1140 = vmatpush2.msra.mxu0 0.0
  %1141 = vmatprep.subr.mxu0 0.0
  %1142 = vmatpush2.msra.mxu0 0.0
  %1143 = vmatprep.subr.mxu0 0.0
  %1144 = vmatpush2.msra.mxu0 0.0
  %1145 = vmatprep.subr.mxu0 0.0
  %1146 = vmatpush2.msra.mxu0 0.0
  %1147 = vmatprep.subr.mxu0 0.0
  %1148 = vmatpush2.msra.mxu0 0.0
  %1149 = vmatprep.mubr.f32.mxu0 0.0
  %1150 = vmatmul.mubr.f32.gmra.mxu0 %v1083
  %v1151 = vpop.f32.mrf.mxu0
  %v1152 = vadd.f32 %v1080, %v1151
  %v1153 = vpop.f32.mrf.mxu0
  %1154 = vdwg.mxu0
  %v1155 = vmax.f32 %v1152, 0.0
  %s1156 = scalar_lea.vmem %s2, 160
  %v1157 = vld [vmem:[%s1156] sm:$0xff]
  %v1158 = vld [vmem:[%s1156 + $0x8] sm:$0xff]
  %v1159 = vld [vmem:[%s1156 + $0x10] sm:$0xff]
  %v1160 = vld [vmem:[%s1156 + $0x18] sm:$0xff]
  %v1161 = vld [vmem:[%s1156 + $0x20] sm:$0xff]
  %v1162 = vld [vmem:[%s1156 + $0x28] sm:$0xff]
  %v1163 = vld [vmem:[%s1156 + $0x30] sm:$0xff]
  %v1164 = vld [vmem:[%s1156 + $0x38] sm:$0xff]
  %v1165 = vld [vmem:[%s1156 + $0x40] sm:$0xf]
  %v1166 = vld [vmem:[%s1156 + $0x48] sm:$0xf]
  %v1168 = vsel %vm361, %v1155, 0
  %v1171 = vsel %vm365, %v1165, 0
  %v1174 = vsel %vm365, %v1166, 0
  %1176 = vmatprep.subr.mxu0 0.0
  %1177 = vmatpush1.msra.mxu0 0.0
  %1178 = vmatprep.subr.mxu0 0.0
  %1179 = vmatpush1.msra.mxu0 0.0
  %1180 = vmatprep.subr.mxu0 0.0
  %1181 = vmatpush1.msra.mxu0 0.0
  %1182 = vmatprep.subr.mxu0 0.0
  %1183 = vmatpush1.msra.mxu0 0.0
  %1184 = vmatprep.subr.mxu0 0.0
  %1185 = vmatpush1.msra.mxu0 0.0
  %1186 = vmatprep.subr.mxu0 0.0
  %1187 = vmatpush1.msra.mxu0 0.0
  %1188 = vmatprep.subr.mxu0 0.0
  %1189 = vmatpush1.msra.mxu0 0.0
  %1190 = vmatprep.subr.mxu0 0.0
  %1191 = vmatpush1.msra.mxu0 0.0
  %1192 = vmatprep.subr.mxu0 0.0
  %1193 = vmatpush1.msra.mxu0 0.0
  %1194 = vmatprep.subr.mxu0 0.0
  %1195 = vmatpush1.msra.mxu0 0.0
  %1196 = vmatprep.subr.mxu0 0.0
  %1197 = vmatpush1.msra.mxu0 0.0
  %1198 = vmatprep.subr.mxu0 %v1174
  %1199 = vmatpush1.msra.mxu0 %v1171
  %1200 = vmatprep.subr.mxu0 %v1164
  %1201 = vmatpush1.msra.mxu0 %v1163
  %1202 = vmatprep.subr.mxu0 %v1162
  %1203 = vmatpush1.msra.mxu0 %v1161
  %1204 = vmatprep.subr.mxu0 %v1160
  %1205 = vmatpush1.msra.mxu0 %v1159
  %1206 = vmatprep.subr.mxu0 %v1158
  %1207 = vmatpush1.msra.mxu0 %v1157
  %1208 = vmatprep.subr.mxu0 0.0
  %1209 = vmatpush2.msra.mxu0 0.0
  %1210 = vmatprep.subr.mxu0 0.0
  %1211 = vmatpush2.msra.mxu0 0.0
  %1212 = vmatprep.subr.mxu0 0.0
  %1213 = vmatpush2.msra.mxu0 0.0
  %1214 = vmatprep.subr.mxu0 0.0
  %1215 = vmatpush2.msra.mxu0 0.0
  %1216 = vmatprep.subr.mxu0 0.0
  %1217 = vmatpush2.msra.mxu0 0.0
  %1218 = vmatprep.subr.mxu0 0.0
  %1219 = vmatpush2.msra.mxu0 0.0
  %1220 = vmatprep.subr.mxu0 0.0
  %1221 = vmatpush2.msra.mxu0 0.0
  %1222 = vmatprep.subr.mxu0 0.0
  %1223 = vmatpush2.msra.mxu0 0.0
  %1224 = vmatprep.subr.mxu0 0.0
  %1225 = vmatpush2.msra.mxu0 0.0
  %1226 = vmatprep.subr.mxu0 0.0
  %1227 = vmatpush2.msra.mxu0 0.0
  %1228 = vmatprep.subr.mxu0 0.0
  %1229 = vmatpush2.msra.mxu0 0.0
  %1230 = vmatprep.subr.mxu0 0.0
  %1231 = vmatpush2.msra.mxu0 0.0
  %1232 = vmatprep.subr.mxu0 0.0
  %1233 = vmatpush2.msra.mxu0 0.0
  %1234 = vmatprep.subr.mxu0 0.0
  %1235 = vmatpush2.msra.mxu0 0.0
  %1236 = vmatprep.subr.mxu0 0.0
  %1237 = vmatpush2.msra.mxu0 0.0
  %1238 = vmatprep.subr.mxu0 0.0
  %1239 = vmatpush2.msra.mxu0 0.0
  %1240 = vmatprep.mubr.f32.mxu0 0.0
  %1241 = vmatmul.mubr.f32.gmra.mxu0 %v1168
  %v1242 = vpop.f32.mrf.mxu0
  %v1243 = vadd.f32 0.0, %v1242
  %v1244 = vpop.f32.mrf.mxu0
  %v1245 = vadd.f32 0.0, %v1244
  %1246 = vdwg.mxu0
  %s1247 = scalar_lea.vmem %s6, 64
  %v1248 = vld [vmem:[%s1247] sm:$0xff]
  %v1249 = vld [vmem:[%s1247 + $0x8] sm:$0xff]
  %v1250 = vld [vmem:[%s1247 + $0x10] sm:$0xff]
  %v1251 = vld [vmem:[%s1247 + $0x18] sm:$0xff]
  %v1253 = vsel %vm447, %v1248, 0
  %v1256 = vsel %vm447, %v1249, 0
  %v1259 = vsel %vm447, %v1250, 0
  %v1262 = vsel %vm447, %v1251, 0
  %v1265 = vsel %vm365, %v1243, 0
  %v1268 = vsel %vm365, %v1245, 0
  %1270 = vmatprep.subr.mxu0 0.0
  %1271 = vmatpush1.msra.mxu0 0.0
  %1272 = vmatprep.subr.mxu0 0.0
  %1273 = vmatpush1.msra.mxu0 0.0
  %1274 = vmatprep.subr.mxu0 0.0
  %1275 = vmatpush1.msra.mxu0 0.0
  %1276 = vmatprep.subr.mxu0 0.0
  %1277 = vmatpush1.msra.mxu0 0.0
  %1278 = vmatprep.subr.mxu0 0.0
  %1279 = vmatpush1.msra.mxu0 0.0
  %1280 = vmatprep.subr.mxu0 0.0
  %1281 = vmatpush1.msra.mxu0 0.0
  %1282 = vmatprep.subr.mxu0 0.0
  %1283 = vmatpush1.msra.mxu0 0.0
  %1284 = vmatprep.subr.mxu0 0.0
  %1285 = vmatpush1.msra.mxu0 0.0
  %1286 = vmatprep.subr.mxu0 0.0
  %1287 = vmatpush1.msra.mxu0 0.0
  %1288 = vmatprep.subr.mxu0 0.0
  %1289 = vmatpush1.msra.mxu0 0.0
  %1290 = vmatprep.subr.mxu0 0.0
  %1291 = vmatpush1.msra.mxu0 0.0
  %1292 = vmatprep.subr.mxu0 0.0
  %1293 = vmatpush1.msra.mxu0 0.0
  %1294 = vmatprep.subr.mxu0 0.0
  %1295 = vmatpush1.msra.mxu0 0.0
  %1296 = vmatprep.subr.mxu0 0.0
  %1297 = vmatpush1.msra.mxu0 0.0
  %1298 = vmatprep.subr.mxu0 0.0
  %1299 = vmatpush1.msra.mxu0 0.0
  %1300 = vmatprep.subr.mxu0 %v1268
  %1301 = vmatpush1.msra.mxu0 %v1265
  %1302 = vmatprep.subr.mxu0 0.0
  %1303 = vmatpush2.msra.mxu0 0.0
  %1304 = vmatprep.subr.mxu0 0.0
  %1305 = vmatpush2.msra.mxu0 0.0
  %1306 = vmatprep.subr.mxu0 0.0
  %1307 = vmatpush2.msra.mxu0 0.0
  %1308 = vmatprep.subr.mxu0 0.0
  %1309 = vmatpush2.msra.mxu0 0.0
  %1310 = vmatprep.subr.mxu0 0.0
  %1311 = vmatpush2.msra.mxu0 0.0
  %1312 = vmatprep.subr.mxu0 0.0
  %1313 = vmatpush2.msra.mxu0 0.0
  %1314 = vmatprep.subr.mxu0 0.0
  %1315 = vmatpush2.msra.mxu0 0.0
  %1316 = vmatprep.subr.mxu0 0.0
  %1317 = vmatpush2.msra.mxu0 0.0
  %1318 = vmatprep.subr.mxu0 0.0
  %1319 = vmatpush2.msra.mxu0 0.0
  %1320 = vmatprep.subr.mxu0 0.0
  %1321 = vmatpush2.msra.mxu0 0.0
  %1322 = vmatprep.subr.mxu0 0.0
  %1323 = vmatpush2.msra.mxu0 0.0
  %1324 = vmatprep.subr.mxu0 0.0
  %1325 = vmatpush2.msra.mxu0 0.0
  %1326 = vmatprep.subr.mxu0 0.0
  %1327 = vmatpush2.msra.mxu0 0.0
  %1328 = vmatprep.subr.mxu0 0.0
  %1329 = vmatpush2.msra.mxu0 0.0
  %1330 = vmatprep.subr.mxu0 0.0
  %1331 = vmatpush2.msra.mxu0 0.0
  %1332 = vmatprep.subr.mxu0 0.0
  %1333 = vmatpush2.msra.mxu0 0.0
  %1334 = vmatprep.mubr.f32.mxu0 0.0
  %1335 = vmatmul.mubr.f32.gmra.mxu0 %v1253
  %v1336 = vpop.f32.mrf.mxu0
  %v1337 = vadd.f32 0.0, %v1336
  %v1338 = vpop.f32.mrf.mxu0
  %v1339 = vadd.f32 0.0, %v1338
  %1340 = vmatprep.mubr.f32.mxu0 0.0
  %1341 = vmatmul.mubr.f32.gmra.mxu0 %v1256
  %v1342 = vpop.f32.mrf.mxu0
  %v1343 = vadd.f32 0.0, %v1342
  %v1344 = vpop.f32.mrf.mxu0
  %v1345 = vadd.f32 0.0, %v1344
  %1346 = vmatprep.mubr.f32.mxu0 0.0
  %1347 = vmatmul.mubr.f32.gmra.mxu0 %v1259
  %v1348 = vpop.f32.mrf.mxu0
  %v1349 = vadd.f32 0.0, %v1348
  %v1350 = vpop.f32.mrf.mxu0
  %v1351 = vadd.f32 0.0, %v1350
  %1352 = vmatprep.mubr.f32.mxu0 0.0
  %1353 = vmatmul.mubr.f32.gmra.mxu0 %v1262
  %v1354 = vpop.f32.mrf.mxu0
  %v1355 = vadd.f32 0.0, %v1354
  %v1356 = vpop.f32.mrf.mxu0
  %v1357 = vadd.f32 0.0, %v1356
  %1358 = vdwg.mxu0
  %v1359 = vadd.f32 %v957, %v1337
  %v1360 = vadd.f32 %v958, %v1339
  %v1361 = vadd.f32 %v959, %v1343
  %v1362 = vadd.f32 %v960, %v1345
  %v1363 = vadd.f32 %v961, %v1349
  %v1364 = vadd.f32 %v962, %v1351
  %v1365 = vadd.f32 %v963, %v1355
  %v1366 = vadd.f32 %v964, %v1357
  %s1367 = scalar_lea.vmem %s1, 768
  %v1368 = vld [vmem:[%s1367] sm:$0xff]
  %v1369 = vld [vmem:[%s1367 + $0x8] sm:$0xff]
  %v1370 = vld [vmem:[%s1367 + $0x10] sm:$0xff]
  %v1371 = vld [vmem:[%s1367 + $0x18] sm:$0xff]
  %v1372 = vld [vmem:[%s1367 + $0x20] sm:$0xff]
  %v1373 = vld [vmem:[%s1367 + $0x28] sm:$0xff]
  %v1374 = vld [vmem:[%s1367 + $0x30] sm:$0xff]
  %v1375 = vld [vmem:[%s1367 + $0x38] sm:$0xff]
  %v1376 = vld [vmem:[%s1367 + $0x40] sm:$0xff]
  %v1377 = vld [vmem:[%s1367 + $0x48] sm:$0xff]
  %v1378 = vld [vmem:[%s1367 + $0x50] sm:$0xff]
  %v1379 = vld [vmem:[%s1367 + $0x58] sm:$0xff]
  %v1380 = vld [vmem:[%s1367 + $0x60] sm:$0xff]
  %v1381 = vld [vmem:[%s1367 + $0x68] sm:$0xff]
  %v1382 = vld [vmem:[%s1367 + $0x70] sm:$0xff]
  %v1383 = vld [vmem:[%s1367 + $0x78] sm:$0xff]
  %v1384 = vld [vmem:[%s1367 + $0x80] sm:$0xff]
  %v1385 = vld [vmem:[%s1367 + $0x88] sm:$0xff]
  %v1386 = vld [vmem:[%s1367 + $0x90] sm:$0xff]
  %v1387 = vld [vmem:[%s1367 + $0x98] sm:$0xff]
  %v1388 = vld [vmem:[%s1367 + $0xa0] sm:$0xff]
  %v1389 = vld [vmem:[%s1367 + $0xa8] sm:$0xff]
  %v1390 = vld [vmem:[%s1367 + $0xb0] sm:$0xff]
  %v1391 = vld [vmem:[%s1367 + $0xb8] sm:$0xff]
  %v1392 = vld [vmem:[%s1367 + $0xc0] sm:$0xff]
  %v1393 = vld [vmem:[%s1367 + $0xc8] sm:$0xff]
  %v1394 = vld [vmem:[%s1367 + $0xd0] sm:$0xff]
  %v1395 = vld [vmem:[%s1367 + $0xd8] sm:$0xff]
  %v1396 = vld [vmem:[%s1367 + $0xe0] sm:$0xff]
  %v1397 = vld [vmem:[%s1367 + $0xe8] sm:$0xff]
  %v1398 = vld [vmem:[%s1367 + $0xf0] sm:$0xff]
  %v1399 = vld [vmem:[%s1367 + $0xf8] sm:$0xff]
  %1400 = vmatprep.subr.mxu0 0.0
  %1401 = vmatpush1.msra.mxu0 %v1383
  %1402 = vmatprep.subr.mxu0 0.0
  %1403 = vmatpush1.msra.mxu0 %v1382
  %1404 = vmatprep.subr.mxu0 0.0
  %1405 = vmatpush1.msra.mxu0 %v1381
  %1406 = vmatprep.subr.mxu0 0.0
  %1407 = vmatpush1.msra.mxu0 %v1380
  %1408 = vmatprep.subr.mxu0 0.0
  %1409 = vmatpush1.msra.mxu0 %v1379
  %1410 = vmatprep.subr.mxu0 0.0
  %1411 = vmatpush1.msra.mxu0 %v1378
  %1412 = vmatprep.subr.mxu0 0.0
  %1413 = vmatpush1.msra.mxu0 %v1377
  %1414 = vmatprep.subr.mxu0 0.0
  %1415 = vmatpush1.msra.mxu0 %v1376
  %1416 = vmatprep.subr.mxu0 0.0
  %1417 = vmatpush1.msra.mxu0 %v1375
  %1418 = vmatprep.subr.mxu0 0.0
  %1419 = vmatpush1.msra.mxu0 %v1374
  %1420 = vmatprep.subr.mxu0 0.0
  %1421 = vmatpush1.msra.mxu0 %v1373
  %1422 = vmatprep.subr.mxu0 0.0
  %1423 = vmatpush1.msra.mxu0 %v1372
  %1424 = vmatprep.subr.mxu0 0.0
  %1425 = vmatpush1.msra.mxu0 %v1371
  %1426 = vmatprep.subr.mxu0 0.0
  %1427 = vmatpush1.msra.mxu0 %v1370
  %1428 = vmatprep.subr.mxu0 0.0
  %1429 = vmatpush1.msra.mxu0 %v1369
  %1430 = vmatprep.subr.mxu0 0.0
  %1431 = vmatpush1.msra.mxu0 %v1368
  %1432 = vmatprep.subr.mxu0 0.0
  %1433 = vmatpush2.msra.mxu0 %v1399
  %1434 = vmatprep.subr.mxu0 0.0
  %1435 = vmatpush2.msra.mxu0 %v1398
  %1436 = vmatprep.subr.mxu0 0.0
  %1437 = vmatpush2.msra.mxu0 %v1397
  %1438 = vmatprep.subr.mxu0 0.0
  %1439 = vmatpush2.msra.mxu0 %v1396
  %1440 = vmatprep.subr.mxu0 0.0
  %1441 = vmatpush2.msra.mxu0 %v1395
  %1442 = vmatprep.subr.mxu0 0.0
  %1443 = vmatpush2.msra.mxu0 %v1394
  %1444 = vmatprep.subr.mxu0 0.0
  %1445 = vmatpush2.msra.mxu0 %v1393
  %1446 = vmatprep.subr.mxu0 0.0
  %1447 = vmatpush2.msra.mxu0 %v1392
  %1448 = vmatprep.subr.mxu0 0.0
  %1449 = vmatpush2.msra.mxu0 %v1391
  %1450 = vmatprep.subr.mxu0 0.0
  %1451 = vmatpush2.msra.mxu0 %v1390
  %1452 = vmatprep.subr.mxu0 0.0
  %1453 = vmatpush2.msra.mxu0 %v1389
  %1454 = vmatprep.subr.mxu0 0.0
  %1455 = vmatpush2.msra.mxu0 %v1388
  %1456 = vmatprep.subr.mxu0 0.0
  %1457 = vmatpush2.msra.mxu0 %v1387
  %1458 = vmatprep.subr.mxu0 0.0
  %1459 = vmatpush2.msra.mxu0 %v1386
  %1460 = vmatprep.subr.mxu0 0.0
  %1461 = vmatpush2.msra.mxu0 %v1385
  %1462 = vmatprep.subr.mxu0 0.0
  %1463 = vmatpush2.msra.mxu0 %v1384
  %1464 = vmatprep.mubr.f32.mxu0 %v30
  %1465 = vmatmul.mubr.f32.gmra.mxu0 %v29
  %v1466 = vpop.f32.mrf.mxu0
  %v1467 = vadd.f32 0.0, %v1466
  %v1468 = vpop.f32.mrf.mxu0
  %1469 = vmatprep.mubr.f32.mxu0 %v32
  %1470 = vmatmul.mubr.f32.gmra.mxu0 %v31
  %v1471 = vpop.f32.mrf.mxu0
  %v1472 = vadd.f32 0.0, %v1471
  %v1473 = vpop.f32.mrf.mxu0
  %1474 = vdwg.mxu0
  %s1475 = scalar_lea.vmem %s3, 12
  %v1476 = vld [vmem:[%s1475] sm:$0xf]
  %s1477 = scalar_lea.vmem %s4, 12
  %v1478 = vld [vmem:[%s1477] sm:$0xf]
  %1480 = vset.pattern.permute.xlu0 0
  %1481 = vperm.xlu0 %1480, %v1478
  %v1482 = vpop.permute.xlu0 %1481
  %v1485 = vsel %vm61, %v1476, 0
  %1487 = vmatprep.subr.mxu0 0.0
  %1488 = vmatpush1.msra.mxu0 0.0
  %1489 = vmatprep.subr.mxu0 0.0
  %1490 = vmatpush1.msra.mxu0 0.0
  %1491 = vmatprep.subr.mxu0 0.0
  %1492 = vmatpush1.msra.mxu0 0.0
  %1493 = vmatprep.subr.mxu0 0.0
  %1494 = vmatpush1.msra.mxu0 0.0
  %1495 = vmatprep.subr.mxu0 0.0
  %1496 = vmatpush1.msra.mxu0 0.0
  %1497 = vmatprep.subr.mxu0 0.0
  %1498 = vmatpush1.msra.mxu0 0.0
  %1499 = vmatprep.subr.mxu0 0.0
  %1500 = vmatpush1.msra.mxu0 0.0
  %1501 = vmatprep.subr.mxu0 0.0
  %1502 = vmatpush1.msra.mxu0 0.0
  %1503 = vmatprep.subr.mxu0 0.0
  %1504 = vmatpush1.msra.mxu0 0.0
  %1505 = vmatprep.subr.mxu0 0.0
  %1506 = vmatpush1.msra.mxu0 0.0
  %1507 = vmatprep.subr.mxu0 0.0
  %1508 = vmatpush1.msra.mxu0 0.0
  %1509 = vmatprep.subr.mxu0 0.0
  %1510 = vmatpush1.msra.mxu0 0.0
  %1511 = vmatprep.subr.mxu0 0.0
  %1512 = vmatpush1.msra.mxu0 0.0
  %1513 = vmatprep.subr.mxu0 0.0
  %1514 = vmatpush1.msra.mxu0 0.0
  %1515 = vmatprep.subr.mxu0 0.0
  %1516 = vmatpush1.msra.mxu0 %v1472
  %1517 = vmatprep.subr.mxu0 0.0
  %1518 = vmatpush1.msra.mxu0 %v1467
  %1519 = vmatprep.subr.mxu0 0.0
  %1520 = vmatpush2.msra.mxu0 0.0
  %1521 = vmatprep.subr.mxu0 0.0
  %1522 = vmatpush2.msra.mxu0 0.0
  %1523 = vmatprep.subr.mxu0 0.0
  %1524 = vmatpush2.msra.mxu0 0.0
  %1525 = vmatprep.subr.mxu0 0.0
  %1526 = vmatpush2.msra.mxu0 0.0
  %1527 = vmatprep.subr.mxu0 0.0
  %1528 = vmatpush2.msra.mxu0 0.0
  %1529 = vmatprep.subr.mxu0 0.0
  %1530 = vmatpush2.msra.mxu0 0.0
  %1531 = vmatprep.subr.mxu0 0.0
  %1532 = vmatpush2.msra.mxu0 0.0
  %1533 = vmatprep.subr.mxu0 0.0
  %1534 = vmatpush2.msra.mxu0 0.0
  %1535 = vmatprep.subr.mxu0 0.0
  %1536 = vmatpush2.msra.mxu0 0.0
  %1537 = vmatprep.subr.mxu0 0.0
  %1538 = vmatpush2.msra.mxu0 0.0
  %1539 = vmatprep.subr.mxu0 0.0
  %1540 = vmatpush2.msra.mxu0 0.0
  %1541 = vmatprep.subr.mxu0 0.0
  %1542 = vmatpush2.msra.mxu0 0.0
  %1543 = vmatprep.subr.mxu0 0.0
  %1544 = vmatpush2.msra.mxu0 0.0
  %1545 = vmatprep.subr.mxu0 0.0
  %1546 = vmatpush2.msra.mxu0 0.0
  %1547 = vmatprep.subr.mxu0 0.0
  %1548 = vmatpush2.msra.mxu0 0.0
  %1549 = vmatprep.subr.mxu0 0.0
  %1550 = vmatpush2.msra.mxu0 0.0
  %1551 = vmatprep.mubr.f32.mxu0 0.0
  %1552 = vmatmul.mubr.f32.gmra.mxu0 %v1485
  %v1553 = vpop.f32.mrf.mxu0
  %v1554 = vadd.f32 %v1482, %v1553
  %v1555 = vpop.f32.mrf.mxu0
  %1556 = vdwg.mxu0
  %v1557 = vmax.f32 %v1554, 0.0
  %s1558 = scalar_lea.vmem %s2, 240
  %v1559 = vld [vmem:[%s1558] sm:$0xff]
  %v1560 = vld [vmem:[%s1558 + $0x8] sm:$0xff]
  %v1561 = vld [vmem:[%s1558 + $0x10] sm:$0xff]
  %v1562 = vld [vmem:[%s1558 + $0x18] sm:$0xff]
  %v1563 = vld [vmem:[%s1558 + $0x20] sm:$0xff]
  %v1564 = vld [vmem:[%s1558 + $0x28] sm:$0xff]
  %v1565 = vld [vmem:[%s1558 + $0x30] sm:$0xff]
  %v1566 = vld [vmem:[%s1558 + $0x38] sm:$0xff]
  %v1567 = vld [vmem:[%s1558 + $0x40] sm:$0xf]
  %v1568 = vld [vmem:[%s1558 + $0x48] sm:$0xf]
  %v1570 = vsel %vm361, %v1557, 0
  %v1573 = vsel %vm365, %v1567, 0
  %v1576 = vsel %vm365, %v1568, 0
  %1578 = vmatprep.subr.mxu0 0.0
  %1579 = vmatpush1.msra.mxu0 0.0
  %1580 = vmatprep.subr.mxu0 0.0
  %1581 = vmatpush1.msra.mxu0 0.0
  %1582 = vmatprep.subr.mxu0 0.0
  %1583 = vmatpush1.msra.mxu0 0.0
  %1584 = vmatprep.subr.mxu0 0.0
  %1585 = vmatpush1.msra.mxu0 0.0
  %1586 = vmatprep.subr.mxu0 0.0
  %1587 = vmatpush1.msra.mxu0 0.0
  %1588 = vmatprep.subr.mxu0 0.0
  %1589 = vmatpush1.msra.mxu0 0.0
  %1590 = vmatprep.subr.mxu0 0.0
  %1591 = vmatpush1.msra.mxu0 0.0
  %1592 = vmatprep.subr.mxu0 0.0
  %1593 = vmatpush1.msra.mxu0 0.0
  %1594 = vmatprep.subr.mxu0 0.0
  %1595 = vmatpush1.msra.mxu0 0.0
  %1596 = vmatprep.subr.mxu0 0.0
  %1597 = vmatpush1.msra.mxu0 0.0
  %1598 = vmatprep.subr.mxu0 0.0
  %1599 = vmatpush1.msra.mxu0 0.0
  %1600 = vmatprep.subr.mxu0 %v1576
  %1601 = vmatpush1.msra.mxu0 %v1573
  %1602 = vmatprep.subr.mxu0 %v1566
  %1603 = vmatpush1.msra.mxu0 %v1565
  %1604 = vmatprep.subr.mxu0 %v1564
  %1605 = vmatpush1.msra.mxu0 %v1563
  %1606 = vmatprep.subr.mxu0 %v1562
  %1607 = vmatpush1.msra.mxu0 %v1561
  %1608 = vmatprep.subr.mxu0 %v1560
  %1609 = vmatpush1.msra.mxu0 %v1559
  %1610 = vmatprep.subr.mxu0 0.0
  %1611 = vmatpush2.msra.mxu0 0.0
  %1612 = vmatprep.subr.mxu0 0.0
  %1613 = vmatpush2.msra.mxu0 0.0
  %1614 = vmatprep.subr.mxu0 0.0
  %1615 = vmatpush2.msra.mxu0 0.0
  %1616 = vmatprep.subr.mxu0 0.0
  %1617 = vmatpush2.msra.mxu0 0.0
  %1618 = vmatprep.subr.mxu0 0.0
  %1619 = vmatpush2.msra.mxu0 0.0
  %1620 = vmatprep.subr.mxu0 0.0
  %1621 = vmatpush2.msra.mxu0 0.0
  %1622 = vmatprep.subr.mxu0 0.0
  %1623 = vmatpush2.msra.mxu0 0.0
  %1624 = vmatprep.subr.mxu0 0.0
  %1625 = vmatpush2.msra.mxu0 0.0
  %1626 = vmatprep.subr.mxu0 0.0
  %1627 = vmatpush2.msra.mxu0 0.0
  %1628 = vmatprep.subr.mxu0 0.0
  %1629 = vmatpush2.msra.mxu0 0.0
  %1630 = vmatprep.subr.mxu0 0.0
  %1631 = vmatpush2.msra.mxu0 0.0
  %1632 = vmatprep.subr.mxu0 0.0
  %1633 = vmatpush2.msra.mxu0 0.0
  %1634 = vmatprep.subr.mxu0 0.0
  %1635 = vmatpush2.msra.mxu0 0.0
  %1636 = vmatprep.subr.mxu0 0.0
  %1637 = vmatpush2.msra.mxu0 0.0
  %1638 = vmatprep.subr.mxu0 0.0
  %1639 = vmatpush2.msra.mxu0 0.0
  %1640 = vmatprep.subr.mxu0 0.0
  %1641 = vmatpush2.msra.mxu0 0.0
  %1642 = vmatprep.mubr.f32.mxu0 0.0
  %1643 = vmatmul.mubr.f32.gmra.mxu0 %v1570
  %v1644 = vpop.f32.mrf.mxu0
  %v1645 = vadd.f32 0.0, %v1644
  %v1646 = vpop.f32.mrf.mxu0
  %v1647 = vadd.f32 0.0, %v1646
  %1648 = vdwg.mxu0
  %s1649 = scalar_lea.vmem %s6, 96
  %v1650 = vld [vmem:[%s1649] sm:$0xff]
  %v1651 = vld [vmem:[%s1649 + $0x8] sm:$0xff]
  %v1652 = vld [vmem:[%s1649 + $0x10] sm:$0xff]
  %v1653 = vld [vmem:[%s1649 + $0x18] sm:$0xff]
  %v1655 = vsel %vm447, %v1650, 0
  %v1658 = vsel %vm447, %v1651, 0
  %v1661 = vsel %vm447, %v1652, 0
  %v1664 = vsel %vm447, %v1653, 0
  %v1667 = vsel %vm365, %v1645, 0
  %v1670 = vsel %vm365, %v1647, 0
  %1672 = vmatprep.subr.mxu0 0.0
  %1673 = vmatpush1.msra.mxu0 0.0
  %1674 = vmatprep.subr.mxu0 0.0
  %1675 = vmatpush1.msra.mxu0 0.0
  %1676 = vmatprep.subr.mxu0 0.0
  %1677 = vmatpush1.msra.mxu0 0.0
  %1678 = vmatprep.subr.mxu0 0.0
  %1679 = vmatpush1.msra.mxu0 0.0
  %1680 = vmatprep.subr.mxu0 0.0
  %1681 = vmatpush1.msra.mxu0 0.0
  %1682 = vmatprep.subr.mxu0 0.0
  %1683 = vmatpush1.msra.mxu0 0.0
  %1684 = vmatprep.subr.mxu0 0.0
  %1685 = vmatpush1.msra.mxu0 0.0
  %1686 = vmatprep.subr.mxu0 0.0
  %1687 = vmatpush1.msra.mxu0 0.0
  %1688 = vmatprep.subr.mxu0 0.0
  %1689 = vmatpush1.msra.mxu0 0.0
  %1690 = vmatprep.subr.mxu0 0.0
  %1691 = vmatpush1.msra.mxu0 0.0
  %1692 = vmatprep.subr.mxu0 0.0
  %1693 = vmatpush1.msra.mxu0 0.0
  %1694 = vmatprep.subr.mxu0 0.0
  %1695 = vmatpush1.msra.mxu0 0.0
  %1696 = vmatprep.subr.mxu0 0.0
  %1697 = vmatpush1.msra.mxu0 0.0
  %1698 = vmatprep.subr.mxu0 0.0
  %1699 = vmatpush1.msra.mxu0 0.0
  %1700 = vmatprep.subr.mxu0 0.0
  %1701 = vmatpush1.msra.mxu0 0.0
  %1702 = vmatprep.subr.mxu0 %v1670
  %1703 = vmatpush1.msra.mxu0 %v1667
  %1704 = vmatprep.subr.mxu0 0.0
  %1705 = vmatpush2.msra.mxu0 0.0
  %1706 = vmatprep.subr.mxu0 0.0
  %1707 = vmatpush2.msra.mxu0 0.0
  %1708 = vmatprep.subr.mxu0 0.0
  %1709 = vmatpush2.msra.mxu0 0.0
  %1710 = vmatprep.subr.mxu0 0.0
  %1711 = vmatpush2.msra.mxu0 0.0
  %1712 = vmatprep.subr.mxu0 0.0
  %1713 = vmatpush2.msra.mxu0 0.0
  %1714 = vmatprep.subr.mxu0 0.0
  %1715 = vmatpush2.msra.mxu0 0.0
  %1716 = vmatprep.subr.mxu0 0.0
  %1717 = vmatpush2.msra.mxu0 0.0
  %1718 = vmatprep.subr.mxu0 0.0
  %1719 = vmatpush2.msra.mxu0 0.0
  %1720 = vmatprep.subr.mxu0 0.0
  %1721 = vmatpush2.msra.mxu0 0.0
  %1722 = vmatprep.subr.mxu0 0.0
  %1723 = vmatpush2.msra.mxu0 0.0
  %1724 = vmatprep.subr.mxu0 0.0
  %1725 = vmatpush2.msra.mxu0 0.0
  %1726 = vmatprep.subr.mxu0 0.0
  %1727 = vmatpush2.msra.mxu0 0.0
  %1728 = vmatprep.subr.mxu0 0.0
  %1729 = vmatpush2.msra.mxu0 0.0
  %1730 = vmatprep.subr.mxu0 0.0
  %1731 = vmatpush2.msra.mxu0 0.0
  %1732 = vmatprep.subr.mxu0 0.0
  %1733 = vmatpush2.msra.mxu0 0.0
  %1734 = vmatprep.subr.mxu0 0.0
  %1735 = vmatpush2.msra.mxu0 0.0
  %1736 = vmatprep.mubr.f32.mxu0 0.0
  %1737 = vmatmul.mubr.f32.gmra.mxu0 %v1655
  %v1738 = vpop.f32.mrf.mxu0
  %v1739 = vadd.f32 0.0, %v1738
  %v1740 = vpop.f32.mrf.mxu0
  %v1741 = vadd.f32 0.0, %v1740
  %1742 = vmatprep.mubr.f32.mxu0 0.0
  %1743 = vmatmul.mubr.f32.gmra.mxu0 %v1658
  %v1744 = vpop.f32.mrf.mxu0
  %v1745 = vadd.f32 0.0, %v1744
  %v1746 = vpop.f32.mrf.mxu0
  %v1747 = vadd.f32 0.0, %v1746
  %1748 = vmatprep.mubr.f32.mxu0 0.0
  %1749 = vmatmul.mubr.f32.gmra.mxu0 %v1661
  %v1750 = vpop.f32.mrf.mxu0
  %v1751 = vadd.f32 0.0, %v1750
  %v1752 = vpop.f32.mrf.mxu0
  %v1753 = vadd.f32 0.0, %v1752
  %1754 = vmatprep.mubr.f32.mxu0 0.0
  %1755 = vmatmul.mubr.f32.gmra.mxu0 %v1664
  %v1756 = vpop.f32.mrf.mxu0
  %v1757 = vadd.f32 0.0, %v1756
  %v1758 = vpop.f32.mrf.mxu0
  %v1759 = vadd.f32 0.0, %v1758
  %1760 = vdwg.mxu0
  %v1761 = vadd.f32 %v1359, %v1739
  %v1762 = vadd.f32 %v1360, %v1741
  %v1763 = vadd.f32 %v1361, %v1745
  %v1764 = vadd.f32 %v1362, %v1747
  %v1765 = vadd.f32 %v1363, %v1751
  %v1766 = vadd.f32 %v1364, %v1753
  %v1767 = vadd.f32 %v1365, %v1757
  %v1768 = vadd.f32 %v1366, %v1759
  %v1769 = vmax.f32 %v1761, 0.0
  %v1770 = vmax.f32 %v1762, 0.0
  %v1771 = vmax.f32 %v1763, 0.0
  %v1772 = vmax.f32 %v1764, 0.0
  %v1773 = vmax.f32 %v1765, 0.0
  %v1774 = vmax.f32 %v1766, 0.0
  %v1775 = vmax.f32 %v1767, 0.0
  %v1776 = vmax.f32 %v1768, 0.0
  %1777 = vst [vmem:[%s8] sm:$0xff] %v1769
  %1778 = vst [vmem:[%s8 + $0x8] sm:$0xff] %v1770
  %1779 = vst [vmem:[%s8 + $0x20] sm:$0xff] %v1771
  %1780 = vst [vmem:[%s8 + $0x28] sm:$0xff] %v1772
  %1781 = vst [vmem:[%s8 + $0x40] sm:$0xff] %v1773
  %1782 = vst [vmem:[%s8 + $0x48] sm:$0xff] %v1774
  %1783 = vst [vmem:[%s8 + $0x60] sm:$0xff] %v1775
  %1784 = vst [vmem:[%s8 + $0x68] sm:$0xff] %v1776
  %v1785 = vld [vmem:[%s0 + $0x10] sm:$0xff]
  %v1786 = vld [vmem:[%s0 + $0x18] sm:$0xff]
  %v1787 = vld [vmem:[%s0 + $0x30] sm:$0xff]
  %v1788 = vld [vmem:[%s0 + $0x38] sm:$0xff]
  %v1789 = vld [vmem:[%s5] sm:$0xff]
  %v1790 = vld [vmem:[%s5 + $0x8] sm:$0xff]
  %v1791 = vld [vmem:[%s5 + $0x10] sm:$0xff]
  %v1792 = vld [vmem:[%s5 + $0x18] sm:$0xff]
  %v1793 = vld [vmem:[%s7] sm:$0xff]
  %v1794 = vld [vmem:[%s7 + $0x8] sm:$0xff]
  %v1795 = vld [vmem:[%s7 + $0x10] sm:$0xff]
  %v1796 = vld [vmem:[%s7 + $0x18] sm:$0xff]
  %1798 = vset.pattern.permute.xlu0 0
  %1799 = vperm.xlu0 %1798, %v1793
  %v1800 = vpop.permute.xlu0 %1799
  %1803 = vset.pattern.permute.xlu0 0
  %1804 = vperm.xlu0 %1803, %v1794
  %v1805 = vpop.permute.xlu0 %1804
  %1808 = vset.pattern.permute.xlu0 0
  %1809 = vperm.xlu0 %1808, %v1795
  %v1810 = vpop.permute.xlu0 %1809
  %1813 = vset.pattern.permute.xlu0 0
  %1814 = vperm.xlu0 %1813, %v1796
  %v1815 = vpop.permute.xlu0 %1814
  %v1818 = vsel %vm61, %v1789, 0
  %v1821 = vsel %vm61, %v1790, 0
  %v1824 = vsel %vm61, %v1791, 0
  %v1827 = vsel %vm61, %v1792, 0
  %1829 = vmatprep.subr.mxu0 0.0
  %1830 = vmatpush1.msra.mxu0 0.0
  %1831 = vmatprep.subr.mxu0 0.0
  %1832 = vmatpush1.msra.mxu0 0.0
  %1833 = vmatprep.subr.mxu0 0.0
  %1834 = vmatpush1.msra.mxu0 0.0
  %1835 = vmatprep.subr.mxu0 0.0
  %1836 = vmatpush1.msra.mxu0 0.0
  %1837 = vmatprep.subr.mxu0 0.0
  %1838 = vmatpush1.msra.mxu0 0.0
  %1839 = vmatprep.subr.mxu0 0.0
  %1840 = vmatpush1.msra.mxu0 0.0
  %1841 = vmatprep.subr.mxu0 0.0
  %1842 = vmatpush1.msra.mxu0 0.0
  %1843 = vmatprep.subr.mxu0 0.0
  %1844 = vmatpush1.msra.mxu0 0.0
  %1845 = vmatprep.subr.mxu0 0.0
  %1846 = vmatpush1.msra.mxu0 0.0
  %1847 = vmatprep.subr.mxu0 0.0
  %1848 = vmatpush1.msra.mxu0 0.0
  %1849 = vmatprep.subr.mxu0 0.0
  %1850 = vmatpush1.msra.mxu0 0.0
  %1851 = vmatprep.subr.mxu0 0.0
  %1852 = vmatpush1.msra.mxu0 0.0
  %1853 = vmatprep.subr.mxu0 0.0
  %1854 = vmatpush1.msra.mxu0 0.0
  %1855 = vmatprep.subr.mxu0 0.0
  %1856 = vmatpush1.msra.mxu0 0.0
  %1857 = vmatprep.subr.mxu0 %v1788
  %1858 = vmatpush1.msra.mxu0 %v1787
  %1859 = vmatprep.subr.mxu0 %v1786
  %1860 = vmatpush1.msra.mxu0 %v1785
  %1861 = vmatprep.subr.mxu0 0.0
  %1862 = vmatpush2.msra.mxu0 0.0
  %1863 = vmatprep.subr.mxu0 0.0
  %1864 = vmatpush2.msra.mxu0 0.0
  %1865 = vmatprep.subr.mxu0 0.0
  %1866 = vmatpush2.msra.mxu0 0.0
  %1867 = vmatprep.subr.mxu0 0.0
  %1868 = vmatpush2.msra.mxu0 0.0
  %1869 = vmatprep.subr.mxu0 0.0
  %1870 = vmatpush2.msra.mxu0 0.0
  %1871 = vmatprep.subr.mxu0 0.0
  %1872 = vmatpush2.msra.mxu0 0.0
  %1873 = vmatprep.subr.mxu0 0.0
  %1874 = vmatpush2.msra.mxu0 0.0
  %1875 = vmatprep.subr.mxu0 0.0
  %1876 = vmatpush2.msra.mxu0 0.0
  %1877 = vmatprep.subr.mxu0 0.0
  %1878 = vmatpush2.msra.mxu0 0.0
  %1879 = vmatprep.subr.mxu0 0.0
  %1880 = vmatpush2.msra.mxu0 0.0
  %1881 = vmatprep.subr.mxu0 0.0
  %1882 = vmatpush2.msra.mxu0 0.0
  %1883 = vmatprep.subr.mxu0 0.0
  %1884 = vmatpush2.msra.mxu0 0.0
  %1885 = vmatprep.subr.mxu0 0.0
  %1886 = vmatpush2.msra.mxu0 0.0
  %1887 = vmatprep.subr.mxu0 0.0
  %1888 = vmatpush2.msra.mxu0 0.0
  %1889 = vmatprep.subr.mxu0 0.0
  %1890 = vmatpush2.msra.mxu0 0.0
  %1891 = vmatprep.subr.mxu0 0.0
  %1892 = vmatpush2.msra.mxu0 0.0
  %1893 = vmatprep.mubr.f32.mxu0 0.0
  %1894 = vmatmul.mubr.f32.gmra.mxu0 %v1818
  %v1895 = vpop.f32.mrf.mxu0
  %v1896 = vadd.f32 %v1800, %v1895
  %v1897 = vpop.f32.mrf.mxu0
  %v1898 = vadd.f32 %v1800, %v1897
  %1899 = vmatprep.mubr.f32.mxu0 0.0
  %1900 = vmatmul.mubr.f32.gmra.mxu0 %v1821
  %v1901 = vpop.f32.mrf.mxu0
  %v1902 = vadd.f32 %v1805, %v1901
  %v1903 = vpop.f32.mrf.mxu0
  %v1904 = vadd.f32 %v1805, %v1903
  %1905 = vmatprep.mubr.f32.mxu0 0.0
  %1906 = vmatmul.mubr.f32.gmra.mxu0 %v1824
  %v1907 = vpop.f32.mrf.mxu0
  %v1908 = vadd.f32 %v1810, %v1907
  %v1909 = vpop.f32.mrf.mxu0
  %v1910 = vadd.f32 %v1810, %v1909
  %1911 = vmatprep.mubr.f32.mxu0 0.0
  %1912 = vmatmul.mubr.f32.gmra.mxu0 %v1827
  %v1913 = vpop.f32.mrf.mxu0
  %v1914 = vadd.f32 %v1815, %v1913
  %v1915 = vpop.f32.mrf.mxu0
  %v1916 = vadd.f32 %v1815, %v1915
  %1917 = vdwg.mxu0
  %v1918 = vld [vmem:[%s1] sm:$0xff]
  %v1919 = vld [vmem:[%s1 + $0x8] sm:$0xff]
  %v1920 = vld [vmem:[%s1 + $0x10] sm:$0xff]
  %v1921 = vld [vmem:[%s1 + $0x18] sm:$0xff]
  %v1922 = vld [vmem:[%s1 + $0x20] sm:$0xff]
  %v1923 = vld [vmem:[%s1 + $0x28] sm:$0xff]
  %v1924 = vld [vmem:[%s1 + $0x30] sm:$0xff]
  %v1925 = vld [vmem:[%s1 + $0x38] sm:$0xff]
  %v1926 = vld [vmem:[%s1 + $0x40] sm:$0xff]
  %v1927 = vld [vmem:[%s1 + $0x48] sm:$0xff]
  %v1928 = vld [vmem:[%s1 + $0x50] sm:$0xff]
  %v1929 = vld [vmem:[%s1 + $0x58] sm:$0xff]
  %v1930 = vld [vmem:[%s1 + $0x60] sm:$0xff]
  %v1931 = vld [vmem:[%s1 + $0x68] sm:$0xff]
  %v1932 = vld [vmem:[%s1 + $0x70] sm:$0xff]
  %v1933 = vld [vmem:[%s1 + $0x78] sm:$0xff]
  %v1934 = vld [vmem:[%s1 + $0x80] sm:$0xff]
  %v1935 = vld [vmem:[%s1 + $0x88] sm:$0xff]
  %v1936 = vld [vmem:[%s1 + $0x90] sm:$0xff]
  %v1937 = vld [vmem:[%s1 + $0x98] sm:$0xff]
  %v1938 = vld [vmem:[%s1 + $0xa0] sm:$0xff]
  %v1939 = vld [vmem:[%s1 + $0xa8] sm:$0xff]
  %v1940 = vld [vmem:[%s1 + $0xb0] sm:$0xff]
  %v1941 = vld [vmem:[%s1 + $0xb8] sm:$0xff]
  %v1942 = vld [vmem:[%s1 + $0xc0] sm:$0xff]
  %v1943 = vld [vmem:[%s1 + $0xc8] sm:$0xff]
  %v1944 = vld [vmem:[%s1 + $0xd0] sm:$0xff]
  %v1945 = vld [vmem:[%s1 + $0xd8] sm:$0xff]
  %v1946 = vld [vmem:[%s1 + $0xe0] sm:$0xff]
  %v1947 = vld [vmem:[%s1 + $0xe8] sm:$0xff]
  %v1948 = vld [vmem:[%s1 + $0xf0] sm:$0xff]
  %v1949 = vld [vmem:[%s1 + $0xf8] sm:$0xff]
  %1950 = vmatprep.subr.mxu0 0.0
  %1951 = vmatpush1.msra.mxu0 %v1933
  %1952 = vmatprep.subr.mxu0 0.0
  %1953 = vmatpush1.msra.mxu0 %v1932
  %1954 = vmatprep.subr.mxu0 0.0
  %1955 = vmatpush1.msra.mxu0 %v1931
  %1956 = vmatprep.subr.mxu0 0.0
  %1957 = vmatpush1.msra.mxu0 %v1930
  %1958 = vmatprep.subr.mxu0 0.0
  %1959 = vmatpush1.msra.mxu0 %v1929
  %1960 = vmatprep.subr.mxu0 0.0
  %1961 = vmatpush1.msra.mxu0 %v1928
  %1962 = vmatprep.subr.mxu0 0.0
  %1963 = vmatpush1.msra.mxu0 %v1927
  %1964 = vmatprep.subr.mxu0 0.0
  %1965 = vmatpush1.msra.mxu0 %v1926
  %1966 = vmatprep.subr.mxu0 0.0
  %1967 = vmatpush1.msra.mxu0 %v1925
  %1968 = vmatprep.subr.mxu0 0.0
  %1969 = vmatpush1.msra.mxu0 %v1924
  %1970 = vmatprep.subr.mxu0 0.0
  %1971 = vmatpush1.msra.mxu0 %v1923
  %1972 = vmatprep.subr.mxu0 0.0
  %1973 = vmatpush1.msra.mxu0 %v1922
  %1974 = vmatprep.subr.mxu0 0.0
  %1975 = vmatpush1.msra.mxu0 %v1921
  %1976 = vmatprep.subr.mxu0 0.0
  %1977 = vmatpush1.msra.mxu0 %v1920
  %1978 = vmatprep.subr.mxu0 0.0
  %1979 = vmatpush1.msra.mxu0 %v1919
  %1980 = vmatprep.subr.mxu0 0.0
  %1981 = vmatpush1.msra.mxu0 %v1918
  %1982 = vmatprep.subr.mxu0 0.0
  %1983 = vmatpush2.msra.mxu0 %v1949
  %1984 = vmatprep.subr.mxu0 0.0
  %1985 = vmatpush2.msra.mxu0 %v1948
  %1986 = vmatprep.subr.mxu0 0.0
  %1987 = vmatpush2.msra.mxu0 %v1947
  %1988 = vmatprep.subr.mxu0 0.0
  %1989 = vmatpush2.msra.mxu0 %v1946
  %1990 = vmatprep.subr.mxu0 0.0
  %1991 = vmatpush2.msra.mxu0 %v1945
  %1992 = vmatprep.subr.mxu0 0.0
  %1993 = vmatpush2.msra.mxu0 %v1944
  %1994 = vmatprep.subr.mxu0 0.0
  %1995 = vmatpush2.msra.mxu0 %v1943
  %1996 = vmatprep.subr.mxu0 0.0
  %1997 = vmatpush2.msra.mxu0 %v1942
  %1998 = vmatprep.subr.mxu0 0.0
  %1999 = vmatpush2.msra.mxu0 %v1941
  %2000 = vmatprep.subr.mxu0 0.0
  %2001 = vmatpush2.msra.mxu0 %v1940
  %2002 = vmatprep.subr.mxu0 0.0
  %2003 = vmatpush2.msra.mxu0 %v1939
  %2004 = vmatprep.subr.mxu0 0.0
  %2005 = vmatpush2.msra.mxu0 %v1938
  %2006 = vmatprep.subr.mxu0 0.0
  %2007 = vmatpush2.msra.mxu0 %v1937
  %2008 = vmatprep.subr.mxu0 0.0
  %2009 = vmatpush2.msra.mxu0 %v1936
  %2010 = vmatprep.subr.mxu0 0.0
  %2011 = vmatpush2.msra.mxu0 %v1935
  %2012 = vmatprep.subr.mxu0 0.0
  %2013 = vmatpush2.msra.mxu0 %v1934
  %2014 = vmatprep.mubr.f32.mxu0 %v1786
  %2015 = vmatmul.mubr.f32.gmra.mxu0 %v1785
  %v2016 = vpop.f32.mrf.mxu0
  %v2017 = vadd.f32 0.0, %v2016
  %v2018 = vpop.f32.mrf.mxu0
  %2019 = vmatprep.mubr.f32.mxu0 %v1788
  %2020 = vmatmul.mubr.f32.gmra.mxu0 %v1787
  %v2021 = vpop.f32.mrf.mxu0
  %v2022 = vadd.f32 0.0, %v2021
  %v2023 = vpop.f32.mrf.mxu0
  %2024 = vdwg.mxu0
  %v2025 = vld [vmem:[%s3] sm:$0xf]
  %v2026 = vld [vmem:[%s4] sm:$0xf]
  %2028 = vset.pattern.permute.xlu0 0
  %2029 = vperm.xlu0 %2028, %v2026
  %v2030 = vpop.permute.xlu0 %2029
  %v2033 = vsel %vm61, %v2025, 0
  %2035 = vmatprep.subr.mxu0 0.0
  %2036 = vmatpush1.msra.mxu0 0.0
  %2037 = vmatprep.subr.mxu0 0.0
  %2038 = vmatpush1.msra.mxu0 0.0
  %2039 = vmatprep.subr.mxu0 0.0
  %2040 = vmatpush1.msra.mxu0 0.0
  %2041 = vmatprep.subr.mxu0 0.0
  %2042 = vmatpush1.msra.mxu0 0.0
  %2043 = vmatprep.subr.mxu0 0.0
  %2044 = vmatpush1.msra.mxu0 0.0
  %2045 = vmatprep.subr.mxu0 0.0
  %2046 = vmatpush1.msra.mxu0 0.0
  %2047 = vmatprep.subr.mxu0 0.0
  %2048 = vmatpush1.msra.mxu0 0.0
  %2049 = vmatprep.subr.mxu0 0.0
  %2050 = vmatpush1.msra.mxu0 0.0
  %2051 = vmatprep.subr.mxu0 0.0
  %2052 = vmatpush1.msra.mxu0 0.0
  %2053 = vmatprep.subr.mxu0 0.0
  %2054 = vmatpush1.msra.mxu0 0.0
  %2055 = vmatprep.subr.mxu0 0.0
  %2056 = vmatpush1.msra.mxu0 0.0
  %2057 = vmatprep.subr.mxu0 0.0
  %2058 = vmatpush1.msra.mxu0 0.0
  %2059 = vmatprep.subr.mxu0 0.0
  %2060 = vmatpush1.msra.mxu0 0.0
  %2061 = vmatprep.subr.mxu0 0.0
  %2062 = vmatpush1.msra.mxu0 0.0
  %2063 = vmatprep.subr.mxu0 0.0
  %2064 = vmatpush1.msra.mxu0 %v2022
  %2065 = vmatprep.subr.mxu0 0.0
  %2066 = vmatpush1.msra.mxu0 %v2017
  %2067 = vmatprep.subr.mxu0 0.0
  %2068 = vmatpush2.msra.mxu0 0.0
  %2069 = vmatprep.subr.mxu0 0.0
  %2070 = vmatpush2.msra.mxu0 0.0
  %2071 = vmatprep.subr.mxu0 0.0
  %2072 = vmatpush2.msra.mxu0 0.0
  %2073 = vmatprep.subr.mxu0 0.0
  %2074 = vmatpush2.msra.mxu0 0.0
  %2075 = vmatprep.subr.mxu0 0.0
  %2076 = vmatpush2.msra.mxu0 0.0
  %2077 = vmatprep.subr.mxu0 0.0
  %2078 = vmatpush2.msra.mxu0 0.0
  %2079 = vmatprep.subr.mxu0 0.0
  %2080 = vmatpush2.msra.mxu0 0.0
  %2081 = vmatprep.subr.mxu0 0.0
  %2082 = vmatpush2.msra.mxu0 0.0
  %2083 = vmatprep.subr.mxu0 0.0
  %2084 = vmatpush2.msra.mxu0 0.0
  %2085 = vmatprep.subr.mxu0 0.0
  %2086 = vmatpush2.msra.mxu0 0.0
  %2087 = vmatprep.subr.mxu0 0.0
  %2088 = vmatpush2.msra.mxu0 0.0
  %2089 = vmatprep.subr.mxu0 0.0
  %2090 = vmatpush2.msra.mxu0 0.0
  %2091 = vmatprep.subr.mxu0 0.0
  %2092 = vmatpush2.msra.mxu0 0.0
  %2093 = vmatprep.subr.mxu0 0.0
  %2094 = vmatpush2.msra.mxu0 0.0
  %2095 = vmatprep.subr.mxu0 0.0
  %2096 = vmatpush2.msra.mxu0 0.0
  %2097 = vmatprep.subr.mxu0 0.0
  %2098 = vmatpush2.msra.mxu0 0.0
  %2099 = vmatprep.mubr.f32.mxu0 0.0
  %2100 = vmatmul.mubr.f32.gmra.mxu0 %v2033
  %v2101 = vpop.f32.mrf.mxu0
  %v2102 = vadd.f32 %v2030, %v2101
  %v2103 = vpop.f32.mrf.mxu0
  %2104 = vdwg.mxu0
  %v2105 = vmax.f32 %v2102, 0.0
  %v2106 = vld [vmem:[%s2] sm:$0xff]
  %v2107 = vld [vmem:[%s2 + $0x8] sm:$0xff]
  %v2108 = vld [vmem:[%s2 + $0x10] sm:$0xff]
  %v2109 = vld [vmem:[%s2 + $0x18] sm:$0xff]
  %v2110 = vld [vmem:[%s2 + $0x20] sm:$0xff]
  %v2111 = vld [vmem:[%s2 + $0x28] sm:$0xff]
  %v2112 = vld [vmem:[%s2 + $0x30] sm:$0xff]
  %v2113 = vld [vmem:[%s2 + $0x38] sm:$0xff]
  %v2114 = vld [vmem:[%s2 + $0x40] sm:$0xf]
  %v2115 = vld [vmem:[%s2 + $0x48] sm:$0xf]
  %v2117 = vsel %vm361, %v2105, 0
  %v2120 = vsel %vm365, %v2114, 0
  %v2123 = vsel %vm365, %v2115, 0
  %2125 = vmatprep.subr.mxu0 0.0
  %2126 = vmatpush1.msra.mxu0 0.0
  %2127 = vmatprep.subr.mxu0 0.0
  %2128 = vmatpush1.msra.mxu0 0.0
  %2129 = vmatprep.subr.mxu0 0.0
  %2130 = vmatpush1.msra.mxu0 0.0
  %2131 = vmatprep.subr.mxu0 0.0
  %2132 = vmatpush1.msra.mxu0 0.0
  %2133 = vmatprep.subr.mxu0 0.0
  %2134 = vmatpush1.msra.mxu0 0.0
  %2135 = vmatprep.subr.mxu0 0.0
  %2136 = vmatpush1.msra.mxu0 0.0
  %2137 = vmatprep.subr.mxu0 0.0
  %2138 = vmatpush1.msra.mxu0 0.0
  %2139 = vmatprep.subr.mxu0 0.0
  %2140 = vmatpush1.msra.mxu0 0.0
  %2141 = vmatprep.subr.mxu0 0.0
  %2142 = vmatpush1.msra.mxu0 0.0
  %2143 = vmatprep.subr.mxu0 0.0
  %2144 = vmatpush1.msra.mxu0 0.0
  %2145 = vmatprep.subr.mxu0 0.0
  %2146 = vmatpush1.msra.mxu0 0.0
  %2147 = vmatprep.subr.mxu0 %v2123
  %2148 = vmatpush1.msra.mxu0 %v2120
  %2149 = vmatprep.subr.mxu0 %v2113
  %2150 = vmatpush1.msra.mxu0 %v2112
  %2151 = vmatprep.subr.mxu0 %v2111
  %2152 = vmatpush1.msra.mxu0 %v2110
  %2153 = vmatprep.subr.mxu0 %v2109
  %2154 = vmatpush1.msra.mxu0 %v2108
  %2155 = vmatprep.subr.mxu0 %v2107
  %2156 = vmatpush1.msra.mxu0 %v2106
  %2157 = vmatprep.subr.mxu0 0.0
  %2158 = vmatpush2.msra.mxu0 0.0
  %2159 = vmatprep.subr.mxu0 0.0
  %2160 = vmatpush2.msra.mxu0 0.0
  %2161 = vmatprep.subr.mxu0 0.0
  %2162 = vmatpush2.msra.mxu0 0.0
  %2163 = vmatprep.subr.mxu0 0.0
  %2164 = vmatpush2.msra.mxu0 0.0
  %2165 = vmatprep.subr.mxu0 0.0
  %2166 = vmatpush2.msra.mxu0 0.0
  %2167 = vmatprep.subr.mxu0 0.0
  %2168 = vmatpush2.msra.mxu0 0.0
  %2169 = vmatprep.subr.mxu0 0.0
  %2170 = vmatpush2.msra.mxu0 0.0
  %2171 = vmatprep.subr.mxu0 0.0
  %2172 = vmatpush2.msra.mxu0 0.0
  %2173 = vmatprep.subr.mxu0 0.0
  %2174 = vmatpush2.msra.mxu0 0.0
  %2175 = vmatprep.subr.mxu0 0.0
  %2176 = vmatpush2.msra.mxu0 0.0
  %2177 = vmatprep.subr.mxu0 0.0
  %2178 = vmatpush2.msra.mxu0 0.0
  %2179 = vmatprep.subr.mxu0 0.0
  %2180 = vmatpush2.msra.mxu0 0.0
  %2181 = vmatprep.subr.mxu0 0.0
  %2182 = vmatpush2.msra.mxu0 0.0
  %2183 = vmatprep.subr.mxu0 0.0
  %2184 = vmatpush2.msra.mxu0 0.0
  %2185 = vmatprep.subr.mxu0 0.0
  %2186 = vmatpush2.msra.mxu0 0.0
  %2187 = vmatprep.subr.mxu0 0.0
  %2188 = vmatpush2.msra.mxu0 0.0
  %2189 = vmatprep.mubr.f32.mxu0 0.0
  %2190 = vmatmul.mubr.f32.gmra.mxu0 %v2117
  %v2191 = vpop.f32.mrf.mxu0
  %v2192 = vadd.f32 0.0, %v2191
  %v2193 = vpop.f32.mrf.mxu0
  %v2194 = vadd.f32 0.0, %v2193
  %2195 = vdwg.mxu0
  %v2196 = vld [vmem:[%s6] sm:$0xff]
  %v2197 = vld [vmem:[%s6 + $0x8] sm:$0xff]
  %v2198 = vld [vmem:[%s6 + $0x10] sm:$0xff]
  %v2199 = vld [vmem:[%s6 + $0x18] sm:$0xff]
  %v2201 = vsel %vm447, %v2196, 0
  %v2204 = vsel %vm447, %v2197, 0
  %v2207 = vsel %vm447, %v2198, 0
  %v2210 = vsel %vm447, %v2199, 0
  %v2213 = vsel %vm365, %v2192, 0
  %v2216 = vsel %vm365, %v2194, 0
  %2218 = vmatprep.subr.mxu0 0.0
  %2219 = vmatpush1.msra.mxu0 0.0
  %2220 = vmatprep.subr.mxu0 0.0
  %2221 = vmatpush1.msra.mxu0 0.0
  %2222 = vmatprep.subr.mxu0 0.0
  %2223 = vmatpush1.msra.mxu0 0.0
  %2224 = vmatprep.subr.mxu0 0.0
  %2225 = vmatpush1.msra.mxu0 0.0
  %2226 = vmatprep.subr.mxu0 0.0
  %2227 = vmatpush1.msra.mxu0 0.0
  %2228 = vmatprep.subr.mxu0 0.0
  %2229 = vmatpush1.msra.mxu0 0.0
  %2230 = vmatprep.subr.mxu0 0.0
  %2231 = vmatpush1.msra.mxu0 0.0
  %2232 = vmatprep.subr.mxu0 0.0
  %2233 = vmatpush1.msra.mxu0 0.0
  %2234 = vmatprep.subr.mxu0 0.0
  %2235 = vmatpush1.msra.mxu0 0.0
  %2236 = vmatprep.subr.mxu0 0.0
  %2237 = vmatpush1.msra.mxu0 0.0
  %2238 = vmatprep.subr.mxu0 0.0
  %2239 = vmatpush1.msra.mxu0 0.0
  %2240 = vmatprep.subr.mxu0 0.0
  %2241 = vmatpush1.msra.mxu0 0.0
  %2242 = vmatprep.subr.mxu0 0.0
  %2243 = vmatpush1.msra.mxu0 0.0
  %2244 = vmatprep.subr.mxu0 0.0
  %2245 = vmatpush1.msra.mxu0 0.0
  %2246 = vmatprep.subr.mxu0 0.0
  %2247 = vmatpush1.msra.mxu0 0.0
  %2248 = vmatprep.subr.mxu0 %v2216
  %2249 = vmatpush1.msra.mxu0 %v2213
  %2250 = vmatprep.subr.mxu0 0.0
  %2251 = vmatpush2.msra.mxu0 0.0
  %2252 = vmatprep.subr.mxu0 0.0
  %2253 = vmatpush2.msra.mxu0 0.0
  %2254 = vmatprep.subr.mxu0 0.0
  %2255 = vmatpush2.msra.mxu0 0.0
  %2256 = vmatprep.subr.mxu0 0.0
  %2257 = vmatpush2.msra.mxu0 0.0
  %2258 = vmatprep.subr.mxu0 0.0
  %2259 = vmatpush2.msra.mxu0 0.0
  %2260 = vmatprep.subr.mxu0 0.0
  %2261 = vmatpush2.msra.mxu0 0.0
  %2262 = vmatprep.subr.mxu0 0.0
  %2263 = vmatpush2.msra.mxu0 0.0
  %2264 = vmatprep.subr.mxu0 0.0
  %2265 = vmatpush2.msra.mxu0 0.0
  %2266 = vmatprep.subr.mxu0 0.0
  %2267 = vmatpush2.msra.mxu0 0.0
  %2268 = vmatprep.subr.mxu0 0.0
  %2269 = vmatpush2.msra.mxu0 0.0
  %2270 = vmatprep.subr.mxu0 0.0
  %2271 = vmatpush2.msra.mxu0 0.0
  %2272 = vmatprep.subr.mxu0 0.0
  %2273 = vmatpush2.msra.mxu0 0.0
  %2274 = vmatprep.subr.mxu0 0.0
  %2275 = vmatpush2.msra.mxu0 0.0
  %2276 = vmatprep.subr.mxu0 0.0
  %2277 = vmatpush2.msra.mxu0 0.0
  %2278 = vmatprep.subr.mxu0 0.0
  %2279 = vmatpush2.msra.mxu0 0.0
  %2280 = vmatprep.subr.mxu0 0.0
  %2281 = vmatpush2.msra.mxu0 0.0
  %2282 = vmatprep.mubr.f32.mxu0 0.0
  %2283 = vmatmul.mubr.f32.gmra.mxu0 %v2201
  %v2284 = vpop.f32.mrf.mxu0
  %v2285 = vadd.f32 0.0, %v2284
  %v2286 = vpop.f32.mrf.mxu0
  %v2287 = vadd.f32 0.0, %v2286
  %2288 = vmatprep.mubr.f32.mxu0 0.0
  %2289 = vmatmul.mubr.f32.gmra.mxu0 %v2204
  %v2290 = vpop.f32.mrf.mxu0
  %v2291 = vadd.f32 0.0, %v2290
  %v2292 = vpop.f32.mrf.mxu0
  %v2293 = vadd.f32 0.0, %v2292
  %2294 = vmatprep.mubr.f32.mxu0 0.0
  %2295 = vmatmul.mubr.f32.gmra.mxu0 %v2207
  %v2296 = vpop.f32.mrf.mxu0
  %v2297 = vadd.f32 0.0, %v2296
  %v2298 = vpop.f32.mrf.mxu0
  %v2299 = vadd.f32 0.0, %v2298
  %2300 = vmatprep.mubr.f32.mxu0 0.0
  %2301 = vmatmul.mubr.f32.gmra.mxu0 %v2210
  %v2302 = vpop.f32.mrf.mxu0
  %v2303 = vadd.f32 0.0, %v2302
  %v2304 = vpop.f32.mrf.mxu0
  %v2305 = vadd.f32 0.0, %v2304
  %2306 = vdwg.mxu0
  %v2307 = vadd.f32 %v1896, %v2285
  %v2308 = vadd.f32 %v1898, %v2287
  %v2309 = vadd.f32 %v1902, %v2291
  %v2310 = vadd.f32 %v1904, %v2293
  %v2311 = vadd.f32 %v1908, %v2297
  %v2312 = vadd.f32 %v1910, %v2299
  %v2313 = vadd.f32 %v1914, %v2303
  %v2314 = vadd.f32 %v1916, %v2305
  %v2315 = vld [vmem:[%s563] sm:$0xff]
  %v2316 = vld [vmem:[%s563 + $0x8] sm:$0xff]
  %v2317 = vld [vmem:[%s563 + $0x10] sm:$0xff]
  %v2318 = vld [vmem:[%s563 + $0x18] sm:$0xff]
  %v2319 = vld [vmem:[%s563 + $0x20] sm:$0xff]
  %v2320 = vld [vmem:[%s563 + $0x28] sm:$0xff]
  %v2321 = vld [vmem:[%s563 + $0x30] sm:$0xff]
  %v2322 = vld [vmem:[%s563 + $0x38] sm:$0xff]
  %v2323 = vld [vmem:[%s563 + $0x40] sm:$0xff]
  %v2324 = vld [vmem:[%s563 + $0x48] sm:$0xff]
  %v2325 = vld [vmem:[%s563 + $0x50] sm:$0xff]
  %v2326 = vld [vmem:[%s563 + $0x58] sm:$0xff]
  %v2327 = vld [vmem:[%s563 + $0x60] sm:$0xff]
  %v2328 = vld [vmem:[%s563 + $0x68] sm:$0xff]
  %v2329 = vld [vmem:[%s563 + $0x70] sm:$0xff]
  %v2330 = vld [vmem:[%s563 + $0x78] sm:$0xff]
  %v2331 = vld [vmem:[%s563 + $0x80] sm:$0xff]
  %v2332 = vld [vmem:[%s563 + $0x88] sm:$0xff]
  %v2333 = vld [vmem:[%s563 + $0x90] sm:$0xff]
  %v2334 = vld [vmem:[%s563 + $0x98] sm:$0xff]
  %v2335 = vld [vmem:[%s563 + $0xa0] sm:$0xff]
  %v2336 = vld [vmem:[%s563 + $0xa8] sm:$0xff]
  %v2337 = vld [vmem:[%s563 + $0xb0] sm:$0xff]
  %v2338 = vld [vmem:[%s563 + $0xb8] sm:$0xff]
  %v2339 = vld [vmem:[%s563 + $0xc0] sm:$0xff]
  %v2340 = vld [vmem:[%s563 + $0xc8] sm:$0xff]
  %v2341 = vld [vmem:[%s563 + $0xd0] sm:$0xff]
  %v2342 = vld [vmem:[%s563 + $0xd8] sm:$0xff]
  %v2343 = vld [vmem:[%s563 + $0xe0] sm:$0xff]
  %v2344 = vld [vmem:[%s563 + $0xe8] sm:$0xff]
  %v2345 = vld [vmem:[%s563 + $0xf0] sm:$0xff]
  %v2346 = vld [vmem:[%s563 + $0xf8] sm:$0xff]
  %2347 = vmatprep.subr.mxu0 0.0
  %2348 = vmatpush1.msra.mxu0 %v2330
  %2349 = vmatprep.subr.mxu0 0.0
  %2350 = vmatpush1.msra.mxu0 %v2329
  %2351 = vmatprep.subr.mxu0 0.0
  %2352 = vmatpush1.msra.mxu0 %v2328
  %2353 = vmatprep.subr.mxu0 0.0
  %2354 = vmatpush1.msra.mxu0 %v2327
  %2355 = vmatprep.subr.mxu0 0.0
  %2356 = vmatpush1.msra.mxu0 %v2326
  %2357 = vmatprep.subr.mxu0 0.0
  %2358 = vmatpush1.msra.mxu0 %v2325
  %2359 = vmatprep.subr.mxu0 0.0
  %2360 = vmatpush1.msra.mxu0 %v2324
  %2361 = vmatprep.subr.mxu0 0.0
  %2362 = vmatpush1.msra.mxu0 %v2323
  %2363 = vmatprep.subr.mxu0 0.0
  %2364 = vmatpush1.msra.mxu0 %v2322
  %2365 = vmatprep.subr.mxu0 0.0
  %2366 = vmatpush1.msra.mxu0 %v2321
  %2367 = vmatprep.subr.mxu0 0.0
  %2368 = vmatpush1.msra.mxu0 %v2320
  %2369 = vmatprep.subr.mxu0 0.0
  %2370 = vmatpush1.msra.mxu0 %v2319
  %2371 = vmatprep.subr.mxu0 0.0
  %2372 = vmatpush1.msra.mxu0 %v2318
  %2373 = vmatprep.subr.mxu0 0.0
  %2374 = vmatpush1.msra.mxu0 %v2317
  %2375 = vmatprep.subr.mxu0 0.0
  %2376 = vmatpush1.msra.mxu0 %v2316
  %2377 = vmatprep.subr.mxu0 0.0
  %2378 = vmatpush1.msra.mxu0 %v2315
  %2379 = vmatprep.subr.mxu0 0.0
  %2380 = vmatpush2.msra.mxu0 %v2346
  %2381 = vmatprep.subr.mxu0 0.0
  %2382 = vmatpush2.msra.mxu0 %v2345
  %2383 = vmatprep.subr.mxu0 0.0
  %2384 = vmatpush2.msra.mxu0 %v2344
  %2385 = vmatprep.subr.mxu0 0.0
  %2386 = vmatpush2.msra.mxu0 %v2343
  %2387 = vmatprep.subr.mxu0 0.0
  %2388 = vmatpush2.msra.mxu0 %v2342
  %2389 = vmatprep.subr.mxu0 0.0
  %2390 = vmatpush2.msra.mxu0 %v2341
  %2391 = vmatprep.subr.mxu0 0.0
  %2392 = vmatpush2.msra.mxu0 %v2340
  %2393 = vmatprep.subr.mxu0 0.0
  %2394 = vmatpush2.msra.mxu0 %v2339
  %2395 = vmatprep.subr.mxu0 0.0
  %2396 = vmatpush2.msra.mxu0 %v2338
  %2397 = vmatprep.subr.mxu0 0.0
  %2398 = vmatpush2.msra.mxu0 %v2337
  %2399 = vmatprep.subr.mxu0 0.0
  %2400 = vmatpush2.msra.mxu0 %v2336
  %2401 = vmatprep.subr.mxu0 0.0
  %2402 = vmatpush2.msra.mxu0 %v2335
  %2403 = vmatprep.subr.mxu0 0.0
  %2404 = vmatpush2.msra.mxu0 %v2334
  %2405 = vmatprep.subr.mxu0 0.0
  %2406 = vmatpush2.msra.mxu0 %v2333
  %2407 = vmatprep.subr.mxu0 0.0
  %2408 = vmatpush2.msra.mxu0 %v2332
  %2409 = vmatprep.subr.mxu0 0.0
  %2410 = vmatpush2.msra.mxu0 %v2331
  %2411 = vmatprep.mubr.f32.mxu0 %v1786
  %2412 = vmatmul.mubr.f32.gmra.mxu0 %v1785
  %v2413 = vpop.f32.mrf.mxu0
  %v2414 = vadd.f32 0.0, %v2413
  %v2415 = vpop.f32.mrf.mxu0
  %2416 = vmatprep.mubr.f32.mxu0 %v1788
  %2417 = vmatmul.mubr.f32.gmra.mxu0 %v1787
  %v2418 = vpop.f32.mrf.mxu0
  %v2419 = vadd.f32 0.0, %v2418
  %v2420 = vpop.f32.mrf.mxu0
  %2421 = vdwg.mxu0
  %v2422 = vld [vmem:[%s671] sm:$0xf]
  %v2423 = vld [vmem:[%s673] sm:$0xf]
  %2425 = vset.pattern.permute.xlu0 0
  %2426 = vperm.xlu0 %2425, %v2423
  %v2427 = vpop.permute.xlu0 %2426
  %v2430 = vsel %vm61, %v2422, 0
  %2432 = vmatprep.subr.mxu0 0.0
  %2433 = vmatpush1.msra.mxu0 0.0
  %2434 = vmatprep.subr.mxu0 0.0
  %2435 = vmatpush1.msra.mxu0 0.0
  %2436 = vmatprep.subr.mxu0 0.0
  %2437 = vmatpush1.msra.mxu0 0.0
  %2438 = vmatprep.subr.mxu0 0.0
  %2439 = vmatpush1.msra.mxu0 0.0
  %2440 = vmatprep.subr.mxu0 0.0
  %2441 = vmatpush1.msra.mxu0 0.0
  %2442 = vmatprep.subr.mxu0 0.0
  %2443 = vmatpush1.msra.mxu0 0.0
  %2444 = vmatprep.subr.mxu0 0.0
  %2445 = vmatpush1.msra.mxu0 0.0
  %2446 = vmatprep.subr.mxu0 0.0
  %2447 = vmatpush1.msra.mxu0 0.0
  %2448 = vmatprep.subr.mxu0 0.0
  %2449 = vmatpush1.msra.mxu0 0.0
  %2450 = vmatprep.subr.mxu0 0.0
  %2451 = vmatpush1.msra.mxu0 0.0
  %2452 = vmatprep.subr.mxu0 0.0
  %2453 = vmatpush1.msra.mxu0 0.0
  %2454 = vmatprep.subr.mxu0 0.0
  %2455 = vmatpush1.msra.mxu0 0.0
  %2456 = vmatprep.subr.mxu0 0.0
  %2457 = vmatpush1.msra.mxu0 0.0
  %2458 = vmatprep.subr.mxu0 0.0
  %2459 = vmatpush1.msra.mxu0 0.0
  %2460 = vmatprep.subr.mxu0 0.0
  %2461 = vmatpush1.msra.mxu0 %v2419
  %2462 = vmatprep.subr.mxu0 0.0
  %2463 = vmatpush1.msra.mxu0 %v2414
  %2464 = vmatprep.subr.mxu0 0.0
  %2465 = vmatpush2.msra.mxu0 0.0
  %2466 = vmatprep.subr.mxu0 0.0
  %2467 = vmatpush2.msra.mxu0 0.0
  %2468 = vmatprep.subr.mxu0 0.0
  %2469 = vmatpush2.msra.mxu0 0.0
  %2470 = vmatprep.subr.mxu0 0.0
  %2471 = vmatpush2.msra.mxu0 0.0
  %2472 = vmatprep.subr.mxu0 0.0
  %2473 = vmatpush2.msra.mxu0 0.0
  %2474 = vmatprep.subr.mxu0 0.0
  %2475 = vmatpush2.msra.mxu0 0.0
  %2476 = vmatprep.subr.mxu0 0.0
  %2477 = vmatpush2.msra.mxu0 0.0
  %2478 = vmatprep.subr.mxu0 0.0
  %2479 = vmatpush2.msra.mxu0 0.0
  %2480 = vmatprep.subr.mxu0 0.0
  %2481 = vmatpush2.msra.mxu0 0.0
  %2482 = vmatprep.subr.mxu0 0.0
  %2483 = vmatpush2.msra.mxu0 0.0
  %2484 = vmatprep.subr.mxu0 0.0
  %2485 = vmatpush2.msra.mxu0 0.0
  %2486 = vmatprep.subr.mxu0 0.0
  %2487 = vmatpush2.msra.mxu0 0.0
  %2488 = vmatprep.subr.mxu0 0.0
  %2489 = vmatpush2.msra.mxu0 0.0
  %2490 = vmatprep.subr.mxu0 0.0
  %2491 = vmatpush2.msra.mxu0 0.0
  %2492 = vmatprep.subr.mxu0 0.0
  %2493 = vmatpush2.msra.mxu0 0.0
  %2494 = vmatprep.subr.mxu0 0.0
  %2495 = vmatpush2.msra.mxu0 0.0
  %2496 = vmatprep.mubr.f32.mxu0 0.0
  %2497 = vmatmul.mubr.f32.gmra.mxu0 %v2430
  %v2498 = vpop.f32.mrf.mxu0
  %v2499 = vadd.f32 %v2427, %v2498
  %v2500 = vpop.f32.mrf.mxu0
  %2501 = vdwg.mxu0
  %v2502 = vmax.f32 %v2499, 0.0
  %v2503 = vld [vmem:[%s754] sm:$0xff]
  %v2504 = vld [vmem:[%s754 + $0x8] sm:$0xff]
  %v2505 = vld [vmem:[%s754 + $0x10] sm:$0xff]
  %v2506 = vld [vmem:[%s754 + $0x18] sm:$0xff]
  %v2507 = vld [vmem:[%s754 + $0x20] sm:$0xff]
  %v2508 = vld [vmem:[%s754 + $0x28] sm:$0xff]
  %v2509 = vld [vmem:[%s754 + $0x30] sm:$0xff]
  %v2510 = vld [vmem:[%s754 + $0x38] sm:$0xff]
  %v2511 = vld [vmem:[%s754 + $0x40] sm:$0xf]
  %v2512 = vld [vmem:[%s754 + $0x48] sm:$0xf]
  %v2514 = vsel %vm361, %v2502, 0
  %v2517 = vsel %vm365, %v2511, 0
  %v2520 = vsel %vm365, %v2512, 0
  %2522 = vmatprep.subr.mxu0 0.0
  %2523 = vmatpush1.msra.mxu0 0.0
  %2524 = vmatprep.subr.mxu0 0.0
  %2525 = vmatpush1.msra.mxu0 0.0
  %2526 = vmatprep.subr.mxu0 0.0
  %2527 = vmatpush1.msra.mxu0 0.0
  %2528 = vmatprep.subr.mxu0 0.0
  %2529 = vmatpush1.msra.mxu0 0.0
  %2530 = vmatprep.subr.mxu0 0.0
  %2531 = vmatpush1.msra.mxu0 0.0
  %2532 = vmatprep.subr.mxu0 0.0
  %2533 = vmatpush1.msra.mxu0 0.0
  %2534 = vmatprep.subr.mxu0 0.0
  %2535 = vmatpush1.msra.mxu0 0.0
  %2536 = vmatprep.subr.mxu0 0.0
  %2537 = vmatpush1.msra.mxu0 0.0
  %2538 = vmatprep.subr.mxu0 0.0
  %2539 = vmatpush1.msra.mxu0 0.0
  %2540 = vmatprep.subr.mxu0 0.0
  %2541 = vmatpush1.msra.mxu0 0.0
  %2542 = vmatprep.subr.mxu0 0.0
  %2543 = vmatpush1.msra.mxu0 0.0
  %2544 = vmatprep.subr.mxu0 %v2520
  %2545 = vmatpush1.msra.mxu0 %v2517
  %2546 = vmatprep.subr.mxu0 %v2510
  %2547 = vmatpush1.msra.mxu0 %v2509
  %2548 = vmatprep.subr.mxu0 %v2508
  %2549 = vmatpush1.msra.mxu0 %v2507
  %2550 = vmatprep.subr.mxu0 %v2506
  %2551 = vmatpush1.msra.mxu0 %v2505
  %2552 = vmatprep.subr.mxu0 %v2504
  %2553 = vmatpush1.msra.mxu0 %v2503
  %2554 = vmatprep.subr.mxu0 0.0
  %2555 = vmatpush2.msra.mxu0 0.0
  %2556 = vmatprep.subr.mxu0 0.0
  %2557 = vmatpush2.msra.mxu0 0.0
  %2558 = vmatprep.subr.mxu0 0.0
  %2559 = vmatpush2.msra.mxu0 0.0
  %2560 = vmatprep.subr.mxu0 0.0
  %2561 = vmatpush2.msra.mxu0 0.0
  %2562 = vmatprep.subr.mxu0 0.0
  %2563 = vmatpush2.msra.mxu0 0.0
  %2564 = vmatprep.subr.mxu0 0.0
  %2565 = vmatpush2.msra.mxu0 0.0
  %2566 = vmatprep.subr.mxu0 0.0
  %2567 = vmatpush2.msra.mxu0 0.0
  %2568 = vmatprep.subr.mxu0 0.0
  %2569 = vmatpush2.msra.mxu0 0.0
  %2570 = vmatprep.subr.mxu0 0.0
  %2571 = vmatpush2.msra.mxu0 0.0
  %2572 = vmatprep.subr.mxu0 0.0
  %2573 = vmatpush2.msra.mxu0 0.0
  %2574 = vmatprep.subr.mxu0 0.0
  %2575 = vmatpush2.msra.mxu0 0.0
  %2576 = vmatprep.subr.mxu0 0.0
  %2577 = vmatpush2.msra.mxu0 0.0
  %2578 = vmatprep.subr.mxu0 0.0
  %2579 = vmatpush2.msra.mxu0 0.0
  %2580 = vmatprep.subr.mxu0 0.0
  %2581 = vmatpush2.msra.mxu0 0.0
  %2582 = vmatprep.subr.mxu0 0.0
  %2583 = vmatpush2.msra.mxu0 0.0
  %2584 = vmatprep.subr.mxu0 0.0
  %2585 = vmatpush2.msra.mxu0 0.0
  %2586 = vmatprep.mubr.f32.mxu0 0.0
  %2587 = vmatmul.mubr.f32.gmra.mxu0 %v2514
  %v2588 = vpop.f32.mrf.mxu0
  %v2589 = vadd.f32 0.0, %v2588
  %v2590 = vpop.f32.mrf.mxu0
  %v2591 = vadd.f32 0.0, %v2590
  %2592 = vdwg.mxu0
  %v2593 = vld [vmem:[%s845] sm:$0xff]
  %v2594 = vld [vmem:[%s845 + $0x8] sm:$0xff]
  %v2595 = vld [vmem:[%s845 + $0x10] sm:$0xff]
  %v2596 = vld [vmem:[%s845 + $0x18] sm:$0xff]
  %v2598 = vsel %vm447, %v2593, 0
  %v2601 = vsel %vm447, %v2594, 0
  %v2604 = vsel %vm447, %v2595, 0
  %v2607 = vsel %vm447, %v2596, 0
  %v2610 = vsel %vm365, %v2589, 0
  %v2613 = vsel %vm365, %v2591, 0
  %2615 = vmatprep.subr.mxu0 0.0
  %2616 = vmatpush1.msra.mxu0 0.0
  %2617 = vmatprep.subr.mxu0 0.0
  %2618 = vmatpush1.msra.mxu0 0.0
  %2619 = vmatprep.subr.mxu0 0.0
  %2620 = vmatpush1.msra.mxu0 0.0
  %2621 = vmatprep.subr.mxu0 0.0
  %2622 = vmatpush1.msra.mxu0 0.0
  %2623 = vmatprep.subr.mxu0 0.0
  %2624 = vmatpush1.msra.mxu0 0.0
  %2625 = vmatprep.subr.mxu0 0.0
  %2626 = vmatpush1.msra.mxu0 0.0
  %2627 = vmatprep.subr.mxu0 0.0
  %2628 = vmatpush1.msra.mxu0 0.0
  %2629 = vmatprep.subr.mxu0 0.0
  %2630 = vmatpush1.msra.mxu0 0.0
  %2631 = vmatprep.subr.mxu0 0.0
  %2632 = vmatpush1.msra.mxu0 0.0
  %2633 = vmatprep.subr.mxu0 0.0
  %2634 = vmatpush1.msra.mxu0 0.0
  %2635 = vmatprep.subr.mxu0 0.0
  %2636 = vmatpush1.msra.mxu0 0.0
  %2637 = vmatprep.subr.mxu0 0.0
  %2638 = vmatpush1.msra.mxu0 0.0
  %2639 = vmatprep.subr.mxu0 0.0
  %2640 = vmatpush1.msra.mxu0 0.0
  %2641 = vmatprep.subr.mxu0 0.0
  %2642 = vmatpush1.msra.mxu0 0.0
  %2643 = vmatprep.subr.mxu0 0.0
  %2644 = vmatpush1.msra.mxu0 0.0
  %2645 = vmatprep.subr.mxu0 %v2613
  %2646 = vmatpush1.msra.mxu0 %v2610
  %2647 = vmatprep.subr.mxu0 0.0
  %2648 = vmatpush2.msra.mxu0 0.0
  %2649 = vmatprep.subr.mxu0 0.0
  %2650 = vmatpush2.msra.mxu0 0.0
  %2651 = vmatprep.subr.mxu0 0.0
  %2652 = vmatpush2.msra.mxu0 0.0
  %2653 = vmatprep.subr.mxu0 0.0
  %2654 = vmatpush2.msra.mxu0 0.0
  %2655 = vmatprep.subr.mxu0 0.0
  %2656 = vmatpush2.msra.mxu0 0.0
  %2657 = vmatprep.subr.mxu0 0.0
  %2658 = vmatpush2.msra.mxu0 0.0
  %2659 = vmatprep.subr.mxu0 0.0
  %2660 = vmatpush2.msra.mxu0 0.0
  %2661 = vmatprep.subr.mxu0 0.0
  %2662 = vmatpush2.msra.mxu0 0.0
  %2663 = vmatprep.subr.mxu0 0.0
  %2664 = vmatpush2.msra.mxu0 0.0
  %2665 = vmatprep.subr.mxu0 0.0
  %2666 = vmatpush2.msra.mxu0 0.0
  %2667 = vmatprep.subr.mxu0 0.0
  %2668 = vmatpush2.msra.mxu0 0.0
  %2669 = vmatprep.subr.mxu0 0.0
  %2670 = vmatpush2.msra.mxu0 0.0
  %2671 = vmatprep.subr.mxu0 0.0
  %2672 = vmatpush2.msra.mxu0 0.0
  %2673 = vmatprep.subr.mxu0 0.0
  %2674 = vmatpush2.msra.mxu0 0.0
  %2675 = vmatprep.subr.mxu0 0.0
  %2676 = vmatpush2.msra.mxu0 0.0
  %2677 = vmatprep.subr.mxu0 0.0
  %2678 = vmatpush2.msra.mxu0 0.0
  %2679 = vmatprep.mubr.f32.mxu0 0.0
  %2680 = vmatmul.mubr.f32.gmra.mxu0 %v2598
  %v2681 = vpop.f32.mrf.mxu0
  %v2682 = vadd.f32 0.0, %v2681
  %v2683 = vpop.f32.mrf.mxu0
  %v2684 = vadd.f32 0.0, %v2683
  %2685 = vmatprep.mubr.f32.mxu0 0.0
  %2686 = vmatmul.mubr.f32.gmra.mxu0 %v2601
  %v2687 = vpop.f32.mrf.mxu0
  %v2688 = vadd.f32 0.0, %v2687
  %v2689 = vpop.f32.mrf.mxu0
  %v2690 = vadd.f32 0.0, %v2689
  %2691 = vmatprep.mubr.f32.mxu0 0.0
  %2692 = vmatmul.mubr.f32.gmra.mxu0 %v2604
  %v2693 = vpop.f32.mrf.mxu0
  %v2694 = vadd.f32 0.0, %v2693
  %v2695 = vpop.f32.mrf.mxu0
  %v2696 = vadd.f32 0.0, %v2695
  %2697 = vmatprep.mubr.f32.mxu0 0.0
  %2698 = vmatmul.mubr.f32.gmra.mxu0 %v2607
  %v2699 = vpop.f32.mrf.mxu0
  %v2700 = vadd.f32 0.0, %v2699
  %v2701 = vpop.f32.mrf.mxu0
  %v2702 = vadd.f32 0.0, %v2701
  %2703 = vdwg.mxu0
  %v2704 = vadd.f32 %v2307, %v2682
  %v2705 = vadd.f32 %v2308, %v2684
  %v2706 = vadd.f32 %v2309, %v2688
  %v2707 = vadd.f32 %v2310, %v2690
  %v2708 = vadd.f32 %v2311, %v2694
  %v2709 = vadd.f32 %v2312, %v2696
  %v2710 = vadd.f32 %v2313, %v2700
  %v2711 = vadd.f32 %v2314, %v2702
  %v2712 = vld [vmem:[%s965] sm:$0xff]
  %v2713 = vld [vmem:[%s965 + $0x8] sm:$0xff]
  %v2714 = vld [vmem:[%s965 + $0x10] sm:$0xff]
  %v2715 = vld [vmem:[%s965 + $0x18] sm:$0xff]
  %v2716 = vld [vmem:[%s965 + $0x20] sm:$0xff]
  %v2717 = vld [vmem:[%s965 + $0x28] sm:$0xff]
  %v2718 = vld [vmem:[%s965 + $0x30] sm:$0xff]
  %v2719 = vld [vmem:[%s965 + $0x38] sm:$0xff]
  %v2720 = vld [vmem:[%s965 + $0x40] sm:$0xff]
  %v2721 = vld [vmem:[%s965 + $0x48] sm:$0xff]
  %v2722 = vld [vmem:[%s965 + $0x50] sm:$0xff]
  %v2723 = vld [vmem:[%s965 + $0x58] sm:$0xff]
  %v2724 = vld [vmem:[%s965 + $0x60] sm:$0xff]
  %v2725 = vld [vmem:[%s965 + $0x68] sm:$0xff]
  %v2726 = vld [vmem:[%s965 + $0x70] sm:$0xff]
  %v2727 = vld [vmem:[%s965 + $0x78] sm:$0xff]
  %v2728 = vld [vmem:[%s965 + $0x80] sm:$0xff]
  %v2729 = vld [vmem:[%s965 + $0x88] sm:$0xff]
  %v2730 = vld [vmem:[%s965 + $0x90] sm:$0xff]
  %v2731 = vld [vmem:[%s965 + $0x98] sm:$0xff]
  %v2732 = vld [vmem:[%s965 + $0xa0] sm:$0xff]
  %v2733 = vld [vmem:[%s965 + $0xa8] sm:$0xff]
  %v2734 = vld [vmem:[%s965 + $0xb0] sm:$0xff]
  %v2735 = vld [vmem:[%s965 + $0xb8] sm:$0xff]
  %v2736 = vld [vmem:[%s965 + $0xc0] sm:$0xff]
  %v2737 = vld [vmem:[%s965 + $0xc8] sm:$0xff]
  %v2738 = vld [vmem:[%s965 + $0xd0] sm:$0xff]
  %v2739 = vld [vmem:[%s965 + $0xd8] sm:$0xff]
  %v2740 = vld [vmem:[%s965 + $0xe0] sm:$0xff]
  %v2741 = vld [vmem:[%s965 + $0xe8] sm:$0xff]
  %v2742 = vld [vmem:[%s965 + $0xf0] sm:$0xff]
  %v2743 = vld [vmem:[%s965 + $0xf8] sm:$0xff]
  %2744 = vmatprep.subr.mxu0 0.0
  %2745 = vmatpush1.msra.mxu0 %v2727
  %2746 = vmatprep.subr.mxu0 0.0
  %2747 = vmatpush1.msra.mxu0 %v2726
  %2748 = vmatprep.subr.mxu0 0.0
  %2749 = vmatpush1.msra.mxu0 %v2725
  %2750 = vmatprep.subr.mxu0 0.0
  %2751 = vmatpush1.msra.mxu0 %v2724
  %2752 = vmatprep.subr.mxu0 0.0
  %2753 = vmatpush1.msra.mxu0 %v2723
  %2754 = vmatprep.subr.mxu0 0.0
  %2755 = vmatpush1.msra.mxu0 %v2722
  %2756 = vmatprep.subr.mxu0 0.0
  %2757 = vmatpush1.msra.mxu0 %v2721
  %2758 = vmatprep.subr.mxu0 0.0
  %2759 = vmatpush1.msra.mxu0 %v2720
  %2760 = vmatprep.subr.mxu0 0.0
  %2761 = vmatpush1.msra.mxu0 %v2719
  %2762 = vmatprep.subr.mxu0 0.0
  %2763 = vmatpush1.msra.mxu0 %v2718
  %2764 = vmatprep.subr.mxu0 0.0
  %2765 = vmatpush1.msra.mxu0 %v2717
  %2766 = vmatprep.subr.mxu0 0.0
  %2767 = vmatpush1.msra.mxu0 %v2716
  %2768 = vmatprep.subr.mxu0 0.0
  %2769 = vmatpush1.msra.mxu0 %v2715
  %2770 = vmatprep.subr.mxu0 0.0
  %2771 = vmatpush1.msra.mxu0 %v2714
  %2772 = vmatprep.subr.mxu0 0.0
  %2773 = vmatpush1.msra.mxu0 %v2713
  %2774 = vmatprep.subr.mxu0 0.0
  %2775 = vmatpush1.msra.mxu0 %v2712
  %2776 = vmatprep.subr.mxu0 0.0
  %2777 = vmatpush2.msra.mxu0 %v2743
  %2778 = vmatprep.subr.mxu0 0.0
  %2779 = vmatpush2.msra.mxu0 %v2742
  %2780 = vmatprep.subr.mxu0 0.0
  %2781 = vmatpush2.msra.mxu0 %v2741
  %2782 = vmatprep.subr.mxu0 0.0
  %2783 = vmatpush2.msra.mxu0 %v2740
  %2784 = vmatprep.subr.mxu0 0.0
  %2785 = vmatpush2.msra.mxu0 %v2739
  %2786 = vmatprep.subr.mxu0 0.0
  %2787 = vmatpush2.msra.mxu0 %v2738
  %2788 = vmatprep.subr.mxu0 0.0
  %2789 = vmatpush2.msra.mxu0 %v2737
  %2790 = vmatprep.subr.mxu0 0.0
  %2791 = vmatpush2.msra.mxu0 %v2736
  %2792 = vmatprep.subr.mxu0 0.0
  %2793 = vmatpush2.msra.mxu0 %v2735
  %2794 = vmatprep.subr.mxu0 0.0
  %2795 = vmatpush2.msra.mxu0 %v2734
  %2796 = vmatprep.subr.mxu0 0.0
  %2797 = vmatpush2.msra.mxu0 %v2733
  %2798 = vmatprep.subr.mxu0 0.0
  %2799 = vmatpush2.msra.mxu0 %v2732
  %2800 = vmatprep.subr.mxu0 0.0
  %2801 = vmatpush2.msra.mxu0 %v2731
  %2802 = vmatprep.subr.mxu0 0.0
  %2803 = vmatpush2.msra.mxu0 %v2730
  %2804 = vmatprep.subr.mxu0 0.0
  %2805 = vmatpush2.msra.mxu0 %v2729
  %2806 = vmatprep.subr.mxu0 0.0
  %2807 = vmatpush2.msra.mxu0 %v2728
  %2808 = vmatprep.mubr.f32.mxu0 %v1786
  %2809 = vmatmul.mubr.f32.gmra.mxu0 %v1785
  %v2810 = vpop.f32.mrf.mxu0
  %v2811 = vadd.f32 0.0, %v2810
  %v2812 = vpop.f32.mrf.mxu0
  %2813 = vmatprep.mubr.f32.mxu0 %v1788
  %2814 = vmatmul.mubr.f32.gmra.mxu0 %v1787
  %v2815 = vpop.f32.mrf.mxu0
  %v2816 = vadd.f32 0.0, %v2815
  %v2817 = vpop.f32.mrf.mxu0
  %2818 = vdwg.mxu0
  %v2819 = vld [vmem:[%s1073] sm:$0xf]
  %v2820 = vld [vmem:[%s1075] sm:$0xf]
  %2822 = vset.pattern.permute.xlu0 0
  %2823 = vperm.xlu0 %2822, %v2820
  %v2824 = vpop.permute.xlu0 %2823
  %v2827 = vsel %vm61, %v2819, 0
  %2829 = vmatprep.subr.mxu0 0.0
  %2830 = vmatpush1.msra.mxu0 0.0
  %2831 = vmatprep.subr.mxu0 0.0
  %2832 = vmatpush1.msra.mxu0 0.0
  %2833 = vmatprep.subr.mxu0 0.0
  %2834 = vmatpush1.msra.mxu0 0.0
  %2835 = vmatprep.subr.mxu0 0.0
  %2836 = vmatpush1.msra.mxu0 0.0
  %2837 = vmatprep.subr.mxu0 0.0
  %2838 = vmatpush1.msra.mxu0 0.0
  %2839 = vmatprep.subr.mxu0 0.0
  %2840 = vmatpush1.msra.mxu0 0.0
  %2841 = vmatprep.subr.mxu0 0.0
  %2842 = vmatpush1.msra.mxu0 0.0
  %2843 = vmatprep.subr.mxu0 0.0
  %2844 = vmatpush1.msra.mxu0 0.0
  %2845 = vmatprep.subr.mxu0 0.0
  %2846 = vmatpush1.msra.mxu0 0.0
  %2847 = vmatprep.subr.mxu0 0.0
  %2848 = vmatpush1.msra.mxu0 0.0
  %2849 = vmatprep.subr.mxu0 0.0
  %2850 = vmatpush1.msra.mxu0 0.0
  %2851 = vmatprep.subr.mxu0 0.0
  %2852 = vmatpush1.msra.mxu0 0.0
  %2853 = vmatprep.subr.mxu0 0.0
  %2854 = vmatpush1.msra.mxu0 0.0
  %2855 = vmatprep.subr.mxu0 0.0
  %2856 = vmatpush1.msra.mxu0 0.0
  %2857 = vmatprep.subr.mxu0 0.0
  %2858 = vmatpush1.msra.mxu0 %v2816
  %2859 = vmatprep.subr.mxu0 0.0
  %2860 = vmatpush1.msra.mxu0 %v2811
  %2861 = vmatprep.subr.mxu0 0.0
  %2862 = vmatpush2.msra.mxu0 0.0
  %2863 = vmatprep.subr.mxu0 0.0
  %2864 = vmatpush2.msra.mxu0 0.0
  %2865 = vmatprep.subr.mxu0 0.0
  %2866 = vmatpush2.msra.mxu0 0.0
  %2867 = vmatprep.subr.mxu0 0.0
  %2868 = vmatpush2.msra.mxu0 0.0
  %2869 = vmatprep.subr.mxu0 0.0
  %2870 = vmatpush2.msra.mxu0 0.0
  %2871 = vmatprep.subr.mxu0 0.0
  %2872 = vmatpush2.msra.mxu0 0.0
  %2873 = vmatprep.subr.mxu0 0.0
  %2874 = vmatpush2.msra.mxu0 0.0
  %2875 = vmatprep.subr.mxu0 0.0
  %2876 = vmatpush2.msra.mxu0 0.0
  %2877 = vmatprep.subr.mxu0 0.0
  %2878 = vmatpush2.msra.mxu0 0.0
  %2879 = vmatprep.subr.mxu0 0.0
  %2880 = vmatpush2.msra.mxu0 0.0
  %2881 = vmatprep.subr.mxu0 0.0
  %2882 = vmatpush2.msra.mxu0 0.0
  %2883 = vmatprep.subr.mxu0 0.0
  %2884 = vmatpush2.msra.mxu0 0.0
  %2885 = vmatprep.subr.mxu0 0.0
  %2886 = vmatpush2.msra.mxu0 0.0
  %2887 = vmatprep.subr.mxu0 0.0
  %2888 = vmatpush2.msra.mxu0 0.0
  %2889 = vmatprep.subr.mxu0 0.0
  %2890 = vmatpush2.msra.mxu0 0.0
  %2891 = vmatprep.subr.mxu0 0.0
  %2892 = vmatpush2.msra.mxu0 0.0
  %2893 = vmatprep.mubr.f32.mxu0 0.0
  %2894 = vmatmul.mubr.f32.gmra.mxu0 %v2827
  %v2895 = vpop.f32.mrf.mxu0
  %v2896 = vadd.f32 %v2824, %v2895
  %v2897 = vpop.f32.mrf.mxu0
  %2898 = vdwg.mxu0
  %v2899 = vmax.f32 %v2896, 0.0
  %v2900 = vld [vmem:[%s1156] sm:$0xff]
  %v2901 = vld [vmem:[%s1156 + $0x8] sm:$0xff]
  %v2902 = vld [vmem:[%s1156 + $0x10] sm:$0xff]
  %v2903 = vld [vmem:[%s1156 + $0x18] sm:$0xff]
  %v2904 = vld [vmem:[%s1156 + $0x20] sm:$0xff]
  %v2905 = vld [vmem:[%s1156 + $0x28] sm:$0xff]
  %v2906 = vld [vmem:[%s1156 + $0x30] sm:$0xff]
  %v2907 = vld [vmem:[%s1156 + $0x38] sm:$0xff]
  %v2908 = vld [vmem:[%s1156 + $0x40] sm:$0xf]
  %v2909 = vld [vmem:[%s1156 + $0x48] sm:$0xf]
  %v2911 = vsel %vm361, %v2899, 0
  %v2914 = vsel %vm365, %v2908, 0
  %v2917 = vsel %vm365, %v2909, 0
  %2919 = vmatprep.subr.mxu0 0.0
  %2920 = vmatpush1.msra.mxu0 0.0
  %2921 = vmatprep.subr.mxu0 0.0
  %2922 = vmatpush1.msra.mxu0 0.0
  %2923 = vmatprep.subr.mxu0 0.0
  %2924 = vmatpush1.msra.mxu0 0.0
  %2925 = vmatprep.subr.mxu0 0.0
  %2926 = vmatpush1.msra.mxu0 0.0
  %2927 = vmatprep.subr.mxu0 0.0
  %2928 = vmatpush1.msra.mxu0 0.0
  %2929 = vmatprep.subr.mxu0 0.0
  %2930 = vmatpush1.msra.mxu0 0.0
  %2931 = vmatprep.subr.mxu0 0.0
  %2932 = vmatpush1.msra.mxu0 0.0
  %2933 = vmatprep.subr.mxu0 0.0
  %2934 = vmatpush1.msra.mxu0 0.0
  %2935 = vmatprep.subr.mxu0 0.0
  %2936 = vmatpush1.msra.mxu0 0.0
  %2937 = vmatprep.subr.mxu0 0.0
  %2938 = vmatpush1.msra.mxu0 0.0
  %2939 = vmatprep.subr.mxu0 0.0
  %2940 = vmatpush1.msra.mxu0 0.0
  %2941 = vmatprep.subr.mxu0 %v2917
  %2942 = vmatpush1.msra.mxu0 %v2914
  %2943 = vmatprep.subr.mxu0 %v2907
  %2944 = vmatpush1.msra.mxu0 %v2906
  %2945 = vmatprep.subr.mxu0 %v2905
  %2946 = vmatpush1.msra.mxu0 %v2904
  %2947 = vmatprep.subr.mxu0 %v2903
  %2948 = vmatpush1.msra.mxu0 %v2902
  %2949 = vmatprep.subr.mxu0 %v2901
  %2950 = vmatpush1.msra.mxu0 %v2900
  %2951 = vmatprep.subr.mxu0 0.0
  %2952 = vmatpush2.msra.mxu0 0.0
  %2953 = vmatprep.subr.mxu0 0.0
  %2954 = vmatpush2.msra.mxu0 0.0
  %2955 = vmatprep.subr.mxu0 0.0
  %2956 = vmatpush2.msra.mxu0 0.0
  %2957 = vmatprep.subr.mxu0 0.0
  %2958 = vmatpush2.msra.mxu0 0.0
  %2959 = vmatprep.subr.mxu0 0.0
  %2960 = vmatpush2.msra.mxu0 0.0
  %2961 = vmatprep.subr.mxu0 0.0
  %2962 = vmatpush2.msra.mxu0 0.0
  %2963 = vmatprep.subr.mxu0 0.0
  %2964 = vmatpush2.msra.mxu0 0.0
  %2965 = vmatprep.subr.mxu0 0.0
  %2966 = vmatpush2.msra.mxu0 0.0
  %2967 = vmatprep.subr.mxu0 0.0
  %2968 = vmatpush2.msra.mxu0 0.0
  %2969 = vmatprep.subr.mxu0 0.0
  %2970 = vmatpush2.msra.mxu0 0.0
  %2971 = vmatprep.subr.mxu0 0.0
  %2972 = vmatpush2.msra.mxu0 0.0
  %2973 = vmatprep.subr.mxu0 0.0
  %2974 = vmatpush2.msra.mxu0 0.0
  %2975 = vmatprep.subr.mxu0 0.0
  %2976 = vmatpush2.msra.mxu0 0.0
  %2977 = vmatprep.subr.mxu0 0.0
  %2978 = vmatpush2.msra.mxu0 0.0
  %2979 = vmatprep.subr.mxu0 0.0
  %2980 = vmatpush2.msra.mxu0 0.0
  %2981 = vmatprep.subr.mxu0 0.0
  %2982 = vmatpush2.msra.mxu0 0.0
  %2983 = vmatprep.mubr.f32.mxu0 0.0
  %2984 = vmatmul.mubr.f32.gmra.mxu0 %v2911
  %v2985 = vpop.f32.mrf.mxu0
  %v2986 = vadd.f32 0.0, %v2985
  %v2987 = vpop.f32.mrf.mxu0
  %v2988 = vadd.f32 0.0, %v2987
  %2989 = vdwg.mxu0
  %v2990 = vld [vmem:[%s1247] sm:$0xff]
  %v2991 = vld [vmem:[%s1247 + $0x8] sm:$0xff]
  %v2992 = vld [vmem:[%s1247 + $0x10] sm:$0xff]
  %v2993 = vld [vmem:[%s1247 + $0x18] sm:$0xff]
  %v2995 = vsel %vm447, %v2990, 0
  %v2998 = vsel %vm447, %v2991, 0
  %v3001 = vsel %vm447, %v2992, 0
  %v3004 = vsel %vm447, %v2993, 0
  %v3007 = vsel %vm365, %v2986, 0
  %v3010 = vsel %vm365, %v2988, 0
  %3012 = vmatprep.subr.mxu0 0.0
  %3013 = vmatpush1.msra.mxu0 0.0
  %3014 = vmatprep.subr.mxu0 0.0
  %3015 = vmatpush1.msra.mxu0 0.0
  %3016 = vmatprep.subr.mxu0 0.0
  %3017 = vmatpush1.msra.mxu0 0.0
  %3018 = vmatprep.subr.mxu0 0.0
  %3019 = vmatpush1.msra.mxu0 0.0
  %3020 = vmatprep.subr.mxu0 0.0
  %3021 = vmatpush1.msra.mxu0 0.0
  %3022 = vmatprep.subr.mxu0 0.0
  %3023 = vmatpush1.msra.mxu0 0.0
  %3024 = vmatprep.subr.mxu0 0.0
  %3025 = vmatpush1.msra.mxu0 0.0
  %3026 = vmatprep.subr.mxu0 0.0
  %3027 = vmatpush1.msra.mxu0 0.0
  %3028 = vmatprep.subr.mxu0 0.0
  %3029 = vmatpush1.msra.mxu0 0.0
  %3030 = vmatprep.subr.mxu0 0.0
  %3031 = vmatpush1.msra.mxu0 0.0
  %3032 = vmatprep.subr.mxu0 0.0
  %3033 = vmatpush1.msra.mxu0 0.0
  %3034 = vmatprep.subr.mxu0 0.0
  %3035 = vmatpush1.msra.mxu0 0.0
  %3036 = vmatprep.subr.mxu0 0.0
  %3037 = vmatpush1.msra.mxu0 0.0
  %3038 = vmatprep.subr.mxu0 0.0
  %3039 = vmatpush1.msra.mxu0 0.0
  %3040 = vmatprep.subr.mxu0 0.0
  %3041 = vmatpush1.msra.mxu0 0.0
  %3042 = vmatprep.subr.mxu0 %v3010
  %3043 = vmatpush1.msra.mxu0 %v3007
  %3044 = vmatprep.subr.mxu0 0.0
  %3045 = vmatpush2.msra.mxu0 0.0
  %3046 = vmatprep.subr.mxu0 0.0
  %3047 = vmatpush2.msra.mxu0 0.0
  %3048 = vmatprep.subr.mxu0 0.0
  %3049 = vmatpush2.msra.mxu0 0.0
  %3050 = vmatprep.subr.mxu0 0.0
  %3051 = vmatpush2.msra.mxu0 0.0
  %3052 = vmatprep.subr.mxu0 0.0
  %3053 = vmatpush2.msra.mxu0 0.0
  %3054 = vmatprep.subr.mxu0 0.0
  %3055 = vmatpush2.msra.mxu0 0.0
  %3056 = vmatprep.subr.mxu0 0.0
  %3057 = vmatpush2.msra.mxu0 0.0
  %3058 = vmatprep.subr.mxu0 0.0
  %3059 = vmatpush2.msra.mxu0 0.0
  %3060 = vmatprep.subr.mxu0 0.0
  %3061 = vmatpush2.msra.mxu0 0.0
  %3062 = vmatprep.subr.mxu0 0.0
  %3063 = vmatpush2.msra.mxu0 0.0
  %3064 = vmatprep.subr.mxu0 0.0
  %3065 = vmatpush2.msra.mxu0 0.0
  %3066 = vmatprep.subr.mxu0 0.0
  %3067 = vmatpush2.msra.mxu0 0.0
  %3068 = vmatprep.subr.mxu0 0.0
  %3069 = vmatpush2.msra.mxu0 0.0
  %3070 = vmatprep.subr.mxu0 0.0
  %3071 = vmatpush2.msra.mxu0 0.0
  %3072 = vmatprep.subr.mxu0 0.0
  %3073 = vmatpush2.msra.mxu0 0.0
  %3074 = vmatprep.subr.mxu0 0.0
  %3075 = vmatpush2.msra.mxu0 0.0
  %3076 = vmatprep.mubr.f32.mxu0 0.0
  %3077 = vmatmul.mubr.f32.gmra.mxu0 %v2995
  %v3078 = vpop.f32.mrf.mxu0
  %v3079 = vadd.f32 0.0, %v3078
  %v3080 = vpop.f32.mrf.mxu0
  %v3081 = vadd.f32 0.0, %v3080
  %3082 = vmatprep.mubr.f32.mxu0 0.0
  %3083 = vmatmul.mubr.f32.gmra.mxu0 %v2998
  %v3084 = vpop.f32.mrf.mxu0
  %v3085 = vadd.f32 0.0, %v3084
  %v3086 = vpop.f32.mrf.mxu0
  %v3087 = vadd.f32 0.0, %v3086
  %3088 = vmatprep.mubr.f32.mxu0 0.0
  %3089 = vmatmul.mubr.f32.gmra.mxu0 %v3001
  %v3090 = vpop.f32.mrf.mxu0
  %v3091 = vadd.f32 0.0, %v3090
  %v3092 = vpop.f32.mrf.mxu0
  %v3093 = vadd.f32 0.0, %v3092
  %3094 = vmatprep.mubr.f32.mxu0 0.0
  %3095 = vmatmul.mubr.f32.gmra.mxu0 %v3004
  %v3096 = vpop.f32.mrf.mxu0
  %v3097 = vadd.f32 0.0, %v3096
  %v3098 = vpop.f32.mrf.mxu0
  %v3099 = vadd.f32 0.0, %v3098
  %3100 = vdwg.mxu0
  %v3101 = vadd.f32 %v2704, %v3079
  %v3102 = vadd.f32 %v2705, %v3081
  %v3103 = vadd.f32 %v2706, %v3085
  %v3104 = vadd.f32 %v2707, %v3087
  %v3105 = vadd.f32 %v2708, %v3091
  %v3106 = vadd.f32 %v2709, %v3093
  %v3107 = vadd.f32 %v2710, %v3097
  %v3108 = vadd.f32 %v2711, %v3099
  %v3109 = vld [vmem:[%s1367] sm:$0xff]
  %v3110 = vld [vmem:[%s1367 + $0x8] sm:$0xff]
  %v3111 = vld [vmem:[%s1367 + $0x10] sm:$0xff]
  %v3112 = vld [vmem:[%s1367 + $0x18] sm:$0xff]
  %v3113 = vld [vmem:[%s1367 + $0x20] sm:$0xff]
  %v3114 = vld [vmem:[%s1367 + $0x28] sm:$0xff]
  %v3115 = vld [vmem:[%s1367 + $0x30] sm:$0xff]
  %v3116 = vld [vmem:[%s1367 + $0x38] sm:$0xff]
  %v3117 = vld [vmem:[%s1367 + $0x40] sm:$0xff]
  %v3118 = vld [vmem:[%s1367 + $0x48] sm:$0xff]
  %v3119 = vld [vmem:[%s1367 + $0x50] sm:$0xff]
  %v3120 = vld [vmem:[%s1367 + $0x58] sm:$0xff]
  %v3121 = vld [vmem:[%s1367 + $0x60] sm:$0xff]
  %v3122 = vld [vmem:[%s1367 + $0x68] sm:$0xff]
  %v3123 = vld [vmem:[%s1367 + $0x70] sm:$0xff]
  %v3124 = vld [vmem:[%s1367 + $0x78] sm:$0xff]
  %v3125 = vld [vmem:[%s1367 + $0x80] sm:$0xff]
  %v3126 = vld [vmem:[%s1367 + $0x88] sm:$0xff]
  %v3127 = vld [vmem:[%s1367 + $0x90] sm:$0xff]
  %v3128 = vld [vmem:[%s1367 + $0x98] sm:$0xff]
  %v3129 = vld [vmem:[%s1367 + $0xa0] sm:$0xff]
  %v3130 = vld [vmem:[%s1367 + $0xa8] sm:$0xff]
  %v3131 = vld [vmem:[%s1367 + $0xb0] sm:$0xff]
  %v3132 = vld [vmem:[%s1367 + $0xb8] sm:$0xff]
  %v3133 = vld [vmem:[%s1367 + $0xc0] sm:$0xff]
  %v3134 = vld [vmem:[%s1367 + $0xc8] sm:$0xff]
  %v3135 = vld [vmem:[%s1367 + $0xd0] sm:$0xff]
  %v3136 = vld [vmem:[%s1367 + $0xd8] sm:$0xff]
  %v3137 = vld [vmem:[%s1367 + $0xe0] sm:$0xff]
  %v3138 = vld [vmem:[%s1367 + $0xe8] sm:$0xff]
  %v3139 = vld [vmem:[%s1367 + $0xf0] sm:$0xff]
  %v3140 = vld [vmem:[%s1367 + $0xf8] sm:$0xff]
  %3141 = vmatprep.subr.mxu0 0.0
  %3142 = vmatpush1.msra.mxu0 %v3124
  %3143 = vmatprep.subr.mxu0 0.0
  %3144 = vmatpush1.msra.mxu0 %v3123
  %3145 = vmatprep.subr.mxu0 0.0
  %3146 = vmatpush1.msra.mxu0 %v3122
  %3147 = vmatprep.subr.mxu0 0.0
  %3148 = vmatpush1.msra.mxu0 %v3121
  %3149 = vmatprep.subr.mxu0 0.0
  %3150 = vmatpush1.msra.mxu0 %v3120
  %3151 = vmatprep.subr.mxu0 0.0
  %3152 = vmatpush1.msra.mxu0 %v3119
  %3153 = vmatprep.subr.mxu0 0.0
  %3154 = vmatpush1.msra.mxu0 %v3118
  %3155 = vmatprep.subr.mxu0 0.0
  %3156 = vmatpush1.msra.mxu0 %v3117
  %3157 = vmatprep.subr.mxu0 0.0
  %3158 = vmatpush1.msra.mxu0 %v3116
  %3159 = vmatprep.subr.mxu0 0.0
  %3160 = vmatpush1.msra.mxu0 %v3115
  %3161 = vmatprep.subr.mxu0 0.0
  %3162 = vmatpush1.msra.mxu0 %v3114
  %3163 = vmatprep.subr.mxu0 0.0
  %3164 = vmatpush1.msra.mxu0 %v3113
  %3165 = vmatprep.subr.mxu0 0.0
  %3166 = vmatpush1.msra.mxu0 %v3112
  %3167 = vmatprep.subr.mxu0 0.0
  %3168 = vmatpush1.msra.mxu0 %v3111
  %3169 = vmatprep.subr.mxu0 0.0
  %3170 = vmatpush1.msra.mxu0 %v3110
  %3171 = vmatprep.subr.mxu0 0.0
  %3172 = vmatpush1.msra.mxu0 %v3109
  %3173 = vmatprep.subr.mxu0 0.0
  %3174 = vmatpush2.msra.mxu0 %v3140
  %3175 = vmatprep.subr.mxu0 0.0
  %3176 = vmatpush2.msra.mxu0 %v3139
  %3177 = vmatprep.subr.mxu0 0.0
  %3178 = vmatpush2.msra.mxu0 %v3138
  %3179 = vmatprep.subr.mxu0 0.0
  %3180 = vmatpush2.msra.mxu0 %v3137
  %3181 = vmatprep.subr.mxu0 0.0
  %3182 = vmatpush2.msra.mxu0 %v3136
  %3183 = vmatprep.subr.mxu0 0.0
  %3184 = vmatpush2.msra.mxu0 %v3135
  %3185 = vmatprep.subr.mxu0 0.0
  %3186 = vmatpush2.msra.mxu0 %v3134
  %3187 = vmatprep.subr.mxu0 0.0
  %3188 = vmatpush2.msra.mxu0 %v3133
  %3189 = vmatprep.subr.mxu0 0.0
  %3190 = vmatpush2.msra.mxu0 %v3132
  %3191 = vmatprep.subr.mxu0 0.0
  %3192 = vmatpush2.msra.mxu0 %v3131
  %3193 = vmatprep.subr.mxu0 0.0
  %3194 = vmatpush2.msra.mxu0 %v3130
  %3195 = vmatprep.subr.mxu0 0.0
  %3196 = vmatpush2.msra.mxu0 %v3129
  %3197 = vmatprep.subr.mxu0 0.0
  %3198 = vmatpush2.msra.mxu0 %v3128
  %3199 = vmatprep.subr.mxu0 0.0
  %3200 = vmatpush2.msra.mxu0 %v3127
  %3201 = vmatprep.subr.mxu0 0.0
  %3202 = vmatpush2.msra.mxu0 %v3126
  %3203 = vmatprep.subr.mxu0 0.0
  %3204 = vmatpush2.msra.mxu0 %v3125
  %3205 = vmatprep.mubr.f32.mxu0 %v1786
  %3206 = vmatmul.mubr.f32.gmra.mxu0 %v1785
  %v3207 = vpop.f32.mrf.mxu0
  %v3208 = vadd.f32 0.0, %v3207
  %v3209 = vpop.f32.mrf.mxu0
  %3210 = vmatprep.mubr.f32.mxu0 %v1788
  %3211 = vmatmul.mubr.f32.gmra.mxu0 %v1787
  %v3212 = vpop.f32.mrf.mxu0
  %v3213 = vadd.f32 0.0, %v3212
  %v3214 = vpop.f32.mrf.mxu0
  %3215 = vdwg.mxu0
  %v3216 = vld [vmem:[%s1475] sm:$0xf]
  %v3217 = vld [vmem:[%s1477] sm:$0xf]
  %3219 = vset.pattern.permute.xlu0 0
  %3220 = vperm.xlu0 %3219, %v3217
  %v3221 = vpop.permute.xlu0 %3220
  %v3224 = vsel %vm61, %v3216, 0
  %3226 = vmatprep.subr.mxu0 0.0
  %3227 = vmatpush1.msra.mxu0 0.0
  %3228 = vmatprep.subr.mxu0 0.0
  %3229 = vmatpush1.msra.mxu0 0.0
  %3230 = vmatprep.subr.mxu0 0.0
  %3231 = vmatpush1.msra.mxu0 0.0
  %3232 = vmatprep.subr.mxu0 0.0
  %3233 = vmatpush1.msra.mxu0 0.0
  %3234 = vmatprep.subr.mxu0 0.0
  %3235 = vmatpush1.msra.mxu0 0.0
  %3236 = vmatprep.subr.mxu0 0.0
  %3237 = vmatpush1.msra.mxu0 0.0
  %3238 = vmatprep.subr.mxu0 0.0
  %3239 = vmatpush1.msra.mxu0 0.0
  %3240 = vmatprep.subr.mxu0 0.0
  %3241 = vmatpush1.msra.mxu0 0.0
  %3242 = vmatprep.subr.mxu0 0.0
  %3243 = vmatpush1.msra.mxu0 0.0
  %3244 = vmatprep.subr.mxu0 0.0
  %3245 = vmatpush1.msra.mxu0 0.0
  %3246 = vmatprep.subr.mxu0 0.0
  %3247 = vmatpush1.msra.mxu0 0.0
  %3248 = vmatprep.subr.mxu0 0.0
  %3249 = vmatpush1.msra.mxu0 0.0
  %3250 = vmatprep.subr.mxu0 0.0
  %3251 = vmatpush1.msra.mxu0 0.0
  %3252 = vmatprep.subr.mxu0 0.0
  %3253 = vmatpush1.msra.mxu0 0.0
  %3254 = vmatprep.subr.mxu0 0.0
  %3255 = vmatpush1.msra.mxu0 %v3213
  %3256 = vmatprep.subr.mxu0 0.0
  %3257 = vmatpush1.msra.mxu0 %v3208
  %3258 = vmatprep.subr.mxu0 0.0
  %3259 = vmatpush2.msra.mxu0 0.0
  %3260 = vmatprep.subr.mxu0 0.0
  %3261 = vmatpush2.msra.mxu0 0.0
  %3262 = vmatprep.subr.mxu0 0.0
  %3263 = vmatpush2.msra.mxu0 0.0
  %3264 = vmatprep.subr.mxu0 0.0
  %3265 = vmatpush2.msra.mxu0 0.0
  %3266 = vmatprep.subr.mxu0 0.0
  %3267 = vmatpush2.msra.mxu0 0.0
  %3268 = vmatprep.subr.mxu0 0.0
  %3269 = vmatpush2.msra.mxu0 0.0
  %3270 = vmatprep.subr.mxu0 0.0
  %3271 = vmatpush2.msra.mxu0 0.0
  %3272 = vmatprep.subr.mxu0 0.0
  %3273 = vmatpush2.msra.mxu0 0.0
  %3274 = vmatprep.subr.mxu0 0.0
  %3275 = vmatpush2.msra.mxu0 0.0
  %3276 = vmatprep.subr.mxu0 0.0
  %3277 = vmatpush2.msra.mxu0 0.0
  %3278 = vmatprep.subr.mxu0 0.0
  %3279 = vmatpush2.msra.mxu0 0.0
  %3280 = vmatprep.subr.mxu0 0.0
  %3281 = vmatpush2.msra.mxu0 0.0
  %3282 = vmatprep.subr.mxu0 0.0
  %3283 = vmatpush2.msra.mxu0 0.0
  %3284 = vmatprep.subr.mxu0 0.0
  %3285 = vmatpush2.msra.mxu0 0.0
  %3286 = vmatprep.subr.mxu0 0.0
  %3287 = vmatpush2.msra.mxu0 0.0
  %3288 = vmatprep.subr.mxu0 0.0
  %3289 = vmatpush2.msra.mxu0 0.0
  %3290 = vmatprep.mubr.f32.mxu0 0.0
  %3291 = vmatmul.mubr.f32.gmra.mxu0 %v3224
  %v3292 = vpop.f32.mrf.mxu0
  %v3293 = vadd.f32 %v3221, %v3292
  %v3294 = vpop.f32.mrf.mxu0
  %3295 = vdwg.mxu0
  %v3296 = vmax.f32 %v3293, 0.0
  %v3297 = vld [vmem:[%s1558] sm:$0xff]
  %v3298 = vld [vmem:[%s1558 + $0x8] sm:$0xff]
  %v3299 = vld [vmem:[%s1558 + $0x10] sm:$0xff]
  %v3300 = vld [vmem:[%s1558 + $0x18] sm:$0xff]
  %v3301 = vld [vmem:[%s1558 + $0x20] sm:$0xff]
  %v3302 = vld [vmem:[%s1558 + $0x28] sm:$0xff]
  %v3303 = vld [vmem:[%s1558 + $0x30] sm:$0xff]
  %v3304 = vld [vmem:[%s1558 + $0x38] sm:$0xff]
  %v3305 = vld [vmem:[%s1558 + $0x40] sm:$0xf]
  %v3306 = vld [vmem:[%s1558 + $0x48] sm:$0xf]
  %v3308 = vsel %vm361, %v3296, 0
  %v3311 = vsel %vm365, %v3305, 0
  %v3314 = vsel %vm365, %v3306, 0
  %3316 = vmatprep.subr.mxu0 0.0
  %3317 = vmatpush1.msra.mxu0 0.0
  %3318 = vmatprep.subr.mxu0 0.0
  %3319 = vmatpush1.msra.mxu0 0.0
  %3320 = vmatprep.subr.mxu0 0.0
  %3321 = vmatpush1.msra.mxu0 0.0
  %3322 = vmatprep.subr.mxu0 0.0
  %3323 = vmatpush1.msra.mxu0 0.0
  %3324 = vmatprep.subr.mxu0 0.0
  %3325 = vmatpush1.msra.mxu0 0.0
  %3326 = vmatprep.subr.mxu0 0.0
  %3327 = vmatpush1.msra.mxu0 0.0
  %3328 = vmatprep.subr.mxu0 0.0
  %3329 = vmatpush1.msra.mxu0 0.0
  %3330 = vmatprep.subr.mxu0 0.0
  %3331 = vmatpush1.msra.mxu0 0.0
  %3332 = vmatprep.subr.mxu0 0.0
  %3333 = vmatpush1.msra.mxu0 0.0
  %3334 = vmatprep.subr.mxu0 0.0
  %3335 = vmatpush1.msra.mxu0 0.0
  %3336 = vmatprep.subr.mxu0 0.0
  %3337 = vmatpush1.msra.mxu0 0.0
  %3338 = vmatprep.subr.mxu0 %v3314
  %3339 = vmatpush1.msra.mxu0 %v3311
  %3340 = vmatprep.subr.mxu0 %v3304
  %3341 = vmatpush1.msra.mxu0 %v3303
  %3342 = vmatprep.subr.mxu0 %v3302
  %3343 = vmatpush1.msra.mxu0 %v3301
  %3344 = vmatprep.subr.mxu0 %v3300
  %3345 = vmatpush1.msra.mxu0 %v3299
  %3346 = vmatprep.subr.mxu0 %v3298
  %3347 = vmatpush1.msra.mxu0 %v3297
  %3348 = vmatprep.subr.mxu0 0.0
  %3349 = vmatpush2.msra.mxu0 0.0
  %3350 = vmatprep.subr.mxu0 0.0
  %3351 = vmatpush2.msra.mxu0 0.0
  %3352 = vmatprep.subr.mxu0 0.0
  %3353 = vmatpush2.msra.mxu0 0.0
  %3354 = vmatprep.subr.mxu0 0.0
  %3355 = vmatpush2.msra.mxu0 0.0
  %3356 = vmatprep.subr.mxu0 0.0
  %3357 = vmatpush2.msra.mxu0 0.0
  %3358 = vmatprep.subr.mxu0 0.0
  %3359 = vmatpush2.msra.mxu0 0.0
  %3360 = vmatprep.subr.mxu0 0.0
  %3361 = vmatpush2.msra.mxu0 0.0
  %3362 = vmatprep.subr.mxu0 0.0
  %3363 = vmatpush2.msra.mxu0 0.0
  %3364 = vmatprep.subr.mxu0 0.0
  %3365 = vmatpush2.msra.mxu0 0.0
  %3366 = vmatprep.subr.mxu0 0.0
  %3367 = vmatpush2.msra.mxu0 0.0
  %3368 = vmatprep.subr.mxu0 0.0
  %3369 = vmatpush2.msra.mxu0 0.0
  %3370 = vmatprep.subr.mxu0 0.0
  %3371 = vmatpush2.msra.mxu0 0.0
  %3372 = vmatprep.subr.mxu0 0.0
  %3373 = vmatpush2.msra.mxu0 0.0
  %3374 = vmatprep.subr.mxu0 0.0
  %3375 = vmatpush2.msra.mxu0 0.0
  %3376 = vmatprep.subr.mxu0 0.0
  %3377 = vmatpush2.msra.mxu0 0.0
  %3378 = vmatprep.subr.mxu0 0.0
  %3379 = vmatpush2.msra.mxu0 0.0
  %3380 = vmatprep.mubr.f32.mxu0 0.0
  %3381 = vmatmul.mubr.f32.gmra.mxu0 %v3308
  %v3382 = vpop.f32.mrf.mxu0
  %v3383 = vadd.f32 0.0, %v3382
  %v3384 = vpop.f32.mrf.mxu0
  %v3385 = vadd.f32 0.0, %v3384
  %3386 = vdwg.mxu0
  %v3387 = vld [vmem:[%s1649] sm:$0xff]
  %v3388 = vld [vmem:[%s1649 + $0x8] sm:$0xff]
  %v3389 = vld [vmem:[%s1649 + $0x10] sm:$0xff]
  %v3390 = vld [vmem:[%s1649 + $0x18] sm:$0xff]
  %v3392 = vsel %vm447, %v3387, 0
  %v3395 = vsel %vm447, %v3388, 0
  %v3398 = vsel %vm447, %v3389, 0
  %v3401 = vsel %vm447, %v3390, 0
  %v3404 = vsel %vm365, %v3383, 0
  %v3407 = vsel %vm365, %v3385, 0
  %3409 = vmatprep.subr.mxu0 0.0
  %3410 = vmatpush1.msra.mxu0 0.0
  %3411 = vmatprep.subr.mxu0 0.0
  %3412 = vmatpush1.msra.mxu0 0.0
  %3413 = vmatprep.subr.mxu0 0.0
  %3414 = vmatpush1.msra.mxu0 0.0
  %3415 = vmatprep.subr.mxu0 0.0
  %3416 = vmatpush1.msra.mxu0 0.0
  %3417 = vmatprep.subr.mxu0 0.0
  %3418 = vmatpush1.msra.mxu0 0.0
  %3419 = vmatprep.subr.mxu0 0.0
  %3420 = vmatpush1.msra.mxu0 0.0
  %3421 = vmatprep.subr.mxu0 0.0
  %3422 = vmatpush1.msra.mxu0 0.0
  %3423 = vmatprep.subr.mxu0 0.0
  %3424 = vmatpush1.msra.mxu0 0.0
  %3425 = vmatprep.subr.mxu0 0.0
  %3426 = vmatpush1.msra.mxu0 0.0
  %3427 = vmatprep.subr.mxu0 0.0
  %3428 = vmatpush1.msra.mxu0 0.0
  %3429 = vmatprep.subr.mxu0 0.0
  %3430 = vmatpush1.msra.mxu0 0.0
  %3431 = vmatprep.subr.mxu0 0.0
  %3432 = vmatpush1.msra.mxu0 0.0
  %3433 = vmatprep.subr.mxu0 0.0
  %3434 = vmatpush1.msra.mxu0 0.0
  %3435 = vmatprep.subr.mxu0 0.0
  %3436 = vmatpush1.msra.mxu0 0.0
  %3437 = vmatprep.subr.mxu0 0.0
  %3438 = vmatpush1.msra.mxu0 0.0
  %3439 = vmatprep.subr.mxu0 %v3407
  %3440 = vmatpush1.msra.mxu0 %v3404
  %3441 = vmatprep.subr.mxu0 0.0
  %3442 = vmatpush2.msra.mxu0 0.0
  %3443 = vmatprep.subr.mxu0 0.0
  %3444 = vmatpush2.msra.mxu0 0.0
  %3445 = vmatprep.subr.mxu0 0.0
  %3446 = vmatpush2.msra.mxu0 0.0
  %3447 = vmatprep.subr.mxu0 0.0
  %3448 = vmatpush2.msra.mxu0 0.0
  %3449 = vmatprep.subr.mxu0 0.0
  %3450 = vmatpush2.msra.mxu0 0.0
  %3451 = vmatprep.subr.mxu0 0.0
  %3452 = vmatpush2.msra.mxu0 0.0
  %3453 = vmatprep.subr.mxu0 0.0
  %3454 = vmatpush2.msra.mxu0 0.0
  %3455 = vmatprep.subr.mxu0 0.0
  %3456 = vmatpush2.msra.mxu0 0.0
  %3457 = vmatprep.subr.mxu0 0.0
  %3458 = vmatpush2.msra.mxu0 0.0
  %3459 = vmatprep.subr.mxu0 0.0
  %3460 = vmatpush2.msra.mxu0 0.0
  %3461 = vmatprep.subr.mxu0 0.0
  %3462 = vmatpush2.msra.mxu0 0.0
  %3463 = vmatprep.subr.mxu0 0.0
  %3464 = vmatpush2.msra.mxu0 0.0
  %3465 = vmatprep.subr.mxu0 0.0
  %3466 = vmatpush2.msra.mxu0 0.0
  %3467 = vmatprep.subr.mxu0 0.0
  %3468 = vmatpush2.msra.mxu0 0.0
  %3469 = vmatprep.subr.mxu0 0.0
  %3470 = vmatpush2.msra.mxu0 0.0
  %3471 = vmatprep.subr.mxu0 0.0
  %3472 = vmatpush2.msra.mxu0 0.0
  %3473 = vmatprep.mubr.f32.mxu0 0.0
  %3474 = vmatmul.mubr.f32.gmra.mxu0 %v3392
  %v3475 = vpop.f32.mrf.mxu0
  %v3476 = vadd.f32 0.0, %v3475
  %v3477 = vpop.f32.mrf.mxu0
  %v3478 = vadd.f32 0.0, %v3477
  %3479 = vmatprep.mubr.f32.mxu0 0.0
  %3480 = vmatmul.mubr.f32.gmra.mxu0 %v3395
  %v3481 = vpop.f32.mrf.mxu0
  %v3482 = vadd.f32 0.0, %v3481
  %v3483 = vpop.f32.mrf.mxu0
  %v3484 = vadd.f32 0.0, %v3483
  %3485 = vmatprep.mubr.f32.mxu0 0.0
  %3486 = vmatmul.mubr.f32.gmra.mxu0 %v3398
  %v3487 = vpop.f32.mrf.mxu0
  %v3488 = vadd.f32 0.0, %v3487
  %v3489 = vpop.f32.mrf.mxu0
  %v3490 = vadd.f32 0.0, %v3489
  %3491 = vmatprep.mubr.f32.mxu0 0.0
  %3492 = vmatmul.mubr.f32.gmra.mxu0 %v3401
  %v3493 = vpop.f32.mrf.mxu0
  %v3494 = vadd.f32 0.0, %v3493
  %v3495 = vpop.f32.mrf.mxu0
  %v3496 = vadd.f32 0.0, %v3495
  %3497 = vdwg.mxu0
  %v3498 = vadd.f32 %v3101, %v3476
  %v3499 = vadd.f32 %v3102, %v3478
  %v3500 = vadd.f32 %v3103, %v3482
  %v3501 = vadd.f32 %v3104, %v3484
  %v3502 = vadd.f32 %v3105, %v3488
  %v3503 = vadd.f32 %v3106, %v3490
  %v3504 = vadd.f32 %v3107, %v3494
  %v3505 = vadd.f32 %v3108, %v3496
  %v3506 = vmax.f32 %v3498, 0.0
  %v3507 = vmax.f32 %v3499, 0.0
  %v3508 = vmax.f32 %v3500, 0.0
  %v3509 = vmax.f32 %v3501, 0.0
  %v3510 = vmax.f32 %v3502, 0.0
  %v3511 = vmax.f32 %v3503, 0.0
  %v3512 = vmax.f32 %v3504, 0.0
  %v3513 = vmax.f32 %v3505, 0.0
  %3514 = vst [vmem:[%s8 + $0x10] sm:$0xff] %v3506
  %3515 = vst [vmem:[%s8 + $0x18] sm:$0xff] %v3507
  %3516 = vst [vmem:[%s8 + $0x30] sm:$0xff] %v3508
  %3517 = vst [vmem:[%s8 + $0x38] sm:$0xff] %v3509
  %3518 = vst [vmem:[%s8 + $0x50] sm:$0xff] %v3510
  %3519 = vst [vmem:[%s8 + $0x58] sm:$0xff] %v3511
  %3520 = vst [vmem:[%s8 + $0x70] sm:$0xff] %v3512
  %3521 = vst [vmem:[%s8 + $0x78] sm:$0xff] %v3513
  // Predicated region
  $region34: #{_pyramid_forward.1} parent=0 // pred_check
    _
  $region35: #{_pyramid_forward.1} parent=0 // pred_check_branch
    %3523 = sbr.rel (0) target = $region37
  $region36: #{_pyramid_forward.1} parent=0 // pred_region
    _
  $region37: #{_pyramid_forward.1} parent=0 // pred_fallthru
    _
  // Predicated region
  $region38: #{_pyramid_forward.1} parent=0 // pred_check
    _
  $region39: #{_pyramid_forward.1} parent=0 // pred_check_branch
    %3525 = sbr.rel (0) target = $region41
  $region40: #{_pyramid_forward.1} parent=0 // pred_region
    _
  $region41: #{_pyramid_forward.1} parent=0 // pred_fallthru
    _

</llo_original>
